<compile_context>
chip_gen: v7x
topology: tpu7x:2x2x1
jax: 0.10.0
libtpu: 0.0.40
codegen_flags: <defaults>
</compile_context>

<pallas_src>
import jax
import jax.numpy as jnp
from jax import lax
from jax.experimental import pallas as pl
from jax.experimental.pallas import tpu as pltpu

EPS = 1e-5


# ----------------------------------------------------------------------------
# Kernel: one _DenseLayer per grid step; o_ref is the resident residual
# accumulator (constant output index_map => stays in VMEM across layers).
# ----------------------------------------------------------------------------
def _dense_layer_kernel(x_ref, g1_ref, b1_ref, w1_ref, g2_ref, b2_ref,
                        w2_ref, o_ref, patch_ref):
    """x_ref (N,H,W,C) f32 (read only at layer 0); g*/b* (1,C) f32;
    w1 (C,C) bf16 (cin,cout); w2 (9C,C) bf16 rows ordered (ky*3+kx)*C + cin;
    o_ref (N,H,W,C) f32 residual features; patch_ref (N,H,W,9C) bf16 scratch."""
    N, H, W, C = o_ref.shape
    M = N * H * W
    inv_m = 1.0 / M
    layer = pl.program_id(0)

    @pl.when(layer == 0)
    def _init():
        # Seed the residual accumulator with the block input, and zero the
        # im2col BORDER strips only (the 3x3 conv's zero padding).  The
        # interior of patch_ref is fully rewritten every layer; the borders
        # are never written again, so zeroing them once is enough.
        o_ref[...] = x_ref[...]
        for ky in range(3):
            for kx in range(3):
                dy, dx = ky - 1, kx - 1
                s = ky * 3 + kx
                cs = slice(s * C, (s + 1) * C)
                if dy == -1:
                    patch_ref[:, 0:1, :, cs] = jnp.zeros((N, 1, W, C),
                                                         jnp.bfloat16)
                if dy == 1:
                    patch_ref[:, H - 1:H, :, cs] = jnp.zeros((N, 1, W, C),
                                                             jnp.bfloat16)
                if dx == -1:
                    patch_ref[:, :, 0:1, cs] = jnp.zeros((N, H, 1, C),
                                                         jnp.bfloat16)
                if dx == 1:
                    patch_ref[:, :, W - 1:W, cs] = jnp.zeros((N, H, 1, C),
                                                             jnp.bfloat16)

    feat = o_ref[...].reshape(M, C)                        # f32, on-chip

    # ---- BN1 (training-mode batch stats, biased var, two-pass) + ReLU1 ----
    mean1 = jnp.sum(feat, axis=0, keepdims=True) * inv_m
    c1 = feat - mean1
    var1 = jnp.sum(c1 * c1, axis=0, keepdims=True) * inv_m
    h = jnp.maximum(c1 * (lax.rsqrt(var1 + EPS) * g1_ref[...]) + b1_ref[...],
                    0.0)

    # ---- 1x1 conv == channel matmul on the MXU (bf16 in, f32 acc) ---------
    z = jnp.dot(h.astype(jnp.bfloat16), w1_ref[...],
                preferred_element_type=jnp.float32)

    # ---- BN2 + ReLU2 -------------------------------------------------------
    mean2 = jnp.sum(z, axis=0, keepdims=True) * inv_m
    c2 = z - mean2
    var2 = jnp.sum(c2 * c2, axis=0, keepdims=True) * inv_m
    y = jnp.maximum(c2 * (lax.rsqrt(var2 + EPS) * g2_ref[...]) + b2_ref[...],
                    0.0)

    # ---- 3x3 conv (padding=1): cast to bf16 ONCE, im2col the interior into
    #      the bf16 scratch, then ONE wide MXU matmul (M, 9C) @ (9C, C) ------
    y4 = y.astype(jnp.bfloat16).reshape(N, H, W, C)
    for ky in range(3):
        for kx in range(3):
            dy, dx = ky - 1, kx - 1
            i0, i1 = max(0, -dy), min(H, H - dy)
            j0, j1 = max(0, -dx), min(W, W - dx)
            s = ky * 3 + kx
            patch_ref[:, i0:i1, j0:j1, s * C:(s + 1) * C] = (
                y4[:, i0 + dy:i1 + dy, j0 + dx:j1 + dx, :])
    nf = jnp.dot(patch_ref[...].reshape(M, 9 * C), w2_ref[...],
                 preferred_element_type=jnp.float32)

    # ---- residual add into the resident accumulator ------------------------
    o_ref[...] += nf.reshape(N, H, W, C)


# ----------------------------------------------------------------------------
# Wrapper: grid over layers, per-layer weight blocks, aliased output.
# ----------------------------------------------------------------------------
@jax.jit
def dense_block_add_pallas(x, params):
    """_DenseBlock_Add forward, one pallas_call for the whole block."""
    N, H, W, C = x.shape
    L = len(params)
    g1 = jnp.stack([p[0] for p in params])                        # (L, 1, C)
    b1 = jnp.stack([p[1] for p in params])                        # (L, 1, C)
    w1 = jnp.stack([p[2] for p in params]).astype(jnp.bfloat16)   # (L, C, C)
    g2 = jnp.stack([p[3] for p in params])                        # (L, 1, C)
    b2 = jnp.stack([p[4] for p in params])                        # (L, 1, C)
    w2 = jnp.stack([p[5].reshape(9 * C, C)
                    for p in params]).astype(jnp.bfloat16)        # (L, 9C, C)

    grid_spec = pltpu.PrefetchScalarGridSpec(
        num_scalar_prefetch=0,
        grid=(L,),
        in_specs=[
            # Input features: constant block index -> DMA'd once, read at l=0.
            pl.BlockSpec((N, H, W, C), lambda l: (0, 0, 0, 0)),
            # Per-layer BN params / weights: layer axis squeezed out, so
            # Pallas double-buffers (prefetches) layer l+1 during layer l.
            pl.BlockSpec((None, 1, C), lambda l: (l, 0, 0)),       # g1
            pl.BlockSpec((None, 1, C), lambda l: (l, 0, 0)),       # b1
            pl.BlockSpec((None, C, C), lambda l: (l, 0, 0)),       # w1
            pl.BlockSpec((None, 1, C), lambda l: (l, 0, 0)),       # g2
            pl.BlockSpec((None, 1, C), lambda l: (l, 0, 0)),       # b2
            pl.BlockSpec((None, 9 * C, C), lambda l: (l, 0, 0)),   # w2
        ],
        # Constant out index_map: resident accumulator, one HBM writeback.
        out_specs=pl.BlockSpec((N, H, W, C), lambda l: (0, 0, 0, 0)),
        scratch_shapes=[pltpu.VMEM((N, H, W, 9 * C), jnp.bfloat16)],
    )
    return pl.pallas_call(
        _dense_layer_kernel,
        out_shape=jax.ShapeDtypeStruct((N, H, W, C), jnp.float32),
        grid_spec=grid_spec,
        input_output_aliases={0: 0},                 # accumulate into x's buffer
        compiler_params=pltpu.CompilerParams(
            dimension_semantics=("arbitrary",),      # layers are sequential
            vmem_limit_bytes=32 * 1024 * 1024),
    )(x, g1, b1, w1, g2, b2, w2)


# ----------------------------------------------------------------------------
# Pure-JAX f32 reference (PyTorch training-mode semantics)
# ----------------------------------------------------------------------------
_P_HIGH = lax.Precision.HIGHEST


def _ref_bn_relu(x, g, b):
    mean = jnp.mean(x, axis=(0, 1, 2), keepdims=True)
    var = jnp.mean((x - mean) ** 2, axis=(0, 1, 2), keepdims=True)
    y = (x - mean) * lax.rsqrt(var + EPS) * g.reshape(1, 1, 1, -1) \
        + b.reshape(1, 1, 1, -1)
    return jnp.maximum(y, 0.0)


def _ref_layer(x, layer_params):
    g1, b1, w1, g2, b2, w2 = layer_params
    C = x.shape[-1]
    h = _ref_bn_relu(x, g1, b1)
    z = jnp.einsum('nhwc,cd->nhwd', h, w1, precision=_P_HIGH)
    y = _ref_bn_relu(z, g2, b2)
    w2_hwio = w2.reshape(3, 3, C, C)
    return lax.conv_general_dilated(
        y, w2_hwio, window_strides=(1, 1), padding='SAME',
        dimension_numbers=('NHWC', 'HWIO', 'NHWC'), precision=_P_HIGH)


def _ref_block(x, params):
    features = x
    for lp in params:
        features = features + _ref_layer(features, lp)
    return features


# ----------------------------------------------------------------------------
# Deterministic synthetic parameters
# ----------------------------------------------------------------------------
def make_params(key, num_layers, C):
    params = []
    for _ in range(num_layers):
        key, k1, k2, k3, k4, k5, k6 = jax.random.split(key, 7)
        g1 = 1.0 + 0.1 * jax.random.normal(k1, (1, C), jnp.float32)
        b1 = 0.1 * jax.random.normal(k2, (1, C), jnp.float32)
        w1 = 0.2 * jax.random.normal(k3, (C, C), jnp.float32)      # (Cin, Cout)
        g2 = 1.0 + 0.1 * jax.random.normal(k4, (1, C), jnp.float32)
        b2 = 0.1 * jax.random.normal(k5, (1, C), jnp.float32)
        w2 = 0.1 * jax.random.normal(k6, (9, C, C), jnp.float32)   # (tap, Cin, Cout)
        params.append((g1, b1, w1, g2, b2, w2))
    return params


if __name__ == "__main__":
    N, H, W, C = 2, 16, 16, 16
    num_layers = 3

    key = jax.random.PRNGKey(0)
    key, kx = jax.random.split(key)
    x = jax.random.normal(kx, (N, H, W, C), jnp.float32)
    params = make_params(key, num_layers, C)

    out = jax.block_until_ready(dense_block_add_pallas(x, params))
    ref = jax.block_until_ready(_ref_block(x, params))

    assert out.shape == (N, H, W, C)
    max_err = float(jnp.max(jnp.abs(out - ref)))
    mean_err = float(jnp.mean(jnp.abs(out - ref)))
    # Tolerances sized for bf16 MXU operands vs. the f32 reference; a real bug
    # (wrong conv tap / BN stats / stale scratch) shows up as O(0.1+).
    assert jnp.allclose(out, ref, atol=5e-2, rtol=5e-2), \
        f"max abs err {max_err}"
    assert mean_err < 2e-2, f"mean abs err {mean_err}"

    print("KERNEL_OK")
</pallas_src>

<mosaic_0001>
module attributes {stable_mosaic.version = 11 : i64} {
  func.func @_dense_layer_kernel(%arg0: i32, %arg1: memref<2x16x16x16xf32, #tpu.memory_space<vmem>>, %arg2: memref<1x1x16xf32, #tpu.memory_space<vmem>>, %arg3: memref<1x1x16xf32, #tpu.memory_space<vmem>>, %arg4: memref<1x16x16xbf16, #tpu.memory_space<vmem>>, %arg5: memref<1x1x16xf32, #tpu.memory_space<vmem>>, %arg6: memref<1x1x16xf32, #tpu.memory_space<vmem>>, %arg7: memref<1x144x16xbf16, #tpu.memory_space<vmem>>, %arg8: memref<2x16x16x16xf32, #tpu.memory_space<vmem>>, %arg9: memref<2x16x16x144xbf16, #tpu.memory_space<vmem>>) attributes {dimension_semantics = [#tpu.dimension_semantics<arbitrary>], iteration_bounds = array<i64: 3>, scalar_prefetch = 0 : i64, scratch_operands = 1 : i64, tpu.core_type = #tpu.core_type<tc>, window_params = [{pipeline_mode = #tpu.pipeline_mode<synchronous>, transform_indices = @transform_0, window_bounds = array<i64: 2, 16, 16, 16>}, {transform_indices = @transform_1, window_bounds = array<i64: 1, 1, 16>}, {transform_indices = @transform_2, window_bounds = array<i64: 1, 1, 16>}, {transform_indices = @transform_3, window_bounds = array<i64: 1, 16, 16>}, {transform_indices = @transform_4, window_bounds = array<i64: 1, 1, 16>}, {transform_indices = @transform_5, window_bounds = array<i64: 1, 1, 16>}, {transform_indices = @transform_6, window_bounds = array<i64: 1, 144, 16>}, {pipeline_mode = #tpu.pipeline_mode<synchronous>, transform_indices = @transform_7, window_bounds = array<i64: 2, 16, 16, 16>}]} {
    %c0_i32 = arith.constant 0 : i32
    %0 = arith.cmpi eq, %arg0, %c0_i32 : i32
    %1 = arith.extui %0 : i1 to i32
    %c0_i32_0 = arith.constant 0 : i32
    %2 = arith.cmpi ne, %1, %c0_i32_0 : i32
    scf.if %2 {
      %c0_74 = arith.constant 0 : index
      %c0_75 = arith.constant 0 : index
      %c0_76 = arith.constant 0 : index
      %c0_77 = arith.constant 0 : index
      %87 = vector.load %arg1[%c0_74, %c0_75, %c0_76, %c0_77] : memref<2x16x16x16xf32, #tpu.memory_space<vmem>>, vector<2x16x16x16xf32>
      %c0_78 = arith.constant 0 : index
      %c0_79 = arith.constant 0 : index
      %c0_80 = arith.constant 0 : index
      %c0_81 = arith.constant 0 : index
      %88 = vector.load %arg8[%c0_78, %c0_79, %c0_80, %c0_81] : memref<2x16x16x16xf32, #tpu.memory_space<vmem>>, vector<2x16x16x16xf32>
      tpu.vector_store %arg8[%c0_78, %c0_79, %c0_80, %c0_81], %87 {strides = array<i32>} : memref<2x16x16x16xf32, #tpu.memory_space<vmem>>, vector<2x16x16x16xf32>,
      %cst_82 = arith.constant 0.000000e+00 : bf16
      %89 = vector.broadcast %cst_82 : bf16 to vector<2x1x16x16xbf16>
      %c0_83 = arith.constant 0 : index
      %c0_84 = arith.constant 0 : index
      %c0_85 = arith.constant 0 : index
      %c0_86 = arith.constant 0 : index
      %90 = vector.load %arg9[%c0_83, %c0_84, %c0_85, %c0_86] : memref<2x16x16x144xbf16, #tpu.memory_space<vmem>>, vector<2x1x16x16xbf16>
      tpu.vector_store %arg9[%c0_83, %c0_84, %c0_85, %c0_86], %89 {strides = array<i32>} : memref<2x16x16x144xbf16, #tpu.memory_space<vmem>>, vector<2x1x16x16xbf16>,
      %cst_87 = arith.constant 0.000000e+00 : bf16
      %91 = vector.broadcast %cst_87 : bf16 to vector<2x16x1x16xbf16>
      %c0_88 = arith.constant 0 : index
      %c0_89 = arith.constant 0 : index
      %c0_90 = arith.constant 0 : index
      %c0_91 = arith.constant 0 : index
      %92 = vector.load %arg9[%c0_88, %c0_89, %c0_90, %c0_91] : memref<2x16x16x144xbf16, #tpu.memory_space<vmem>>, vector<2x16x1x16xbf16>
      tpu.vector_store %arg9[%c0_88, %c0_89, %c0_90, %c0_91], %91 {strides = array<i32>} : memref<2x16x16x144xbf16, #tpu.memory_space<vmem>>, vector<2x16x1x16xbf16>,
      %cst_92 = arith.constant 0.000000e+00 : bf16
      %93 = vector.broadcast %cst_92 : bf16 to vector<2x1x16x16xbf16>
      %c0_93 = arith.constant 0 : index
      %c0_94 = arith.constant 0 : index
      %c0_95 = arith.constant 0 : index
      %c16_96 = arith.constant 16 : index
      %94 = vector.load %arg9[%c0_93, %c0_94, %c0_95, %c16_96] : memref<2x16x16x144xbf16, #tpu.memory_space<vmem>>, vector<2x1x16x16xbf16>
      tpu.vector_store %arg9[%c0_93, %c0_94, %c0_95, %c16_96], %93 {strides = array<i32>} : memref<2x16x16x144xbf16, #tpu.memory_space<vmem>>, vector<2x1x16x16xbf16>,
      %cst_97 = arith.constant 0.000000e+00 : bf16
      %95 = vector.broadcast %cst_97 : bf16 to vector<2x1x16x16xbf16>
      %c0_98 = arith.constant 0 : index
      %c0_99 = arith.constant 0 : index
      %c0_100 = arith.constant 0 : index
      %c32_101 = arith.constant 32 : index
      %96 = vector.load %arg9[%c0_98, %c0_99, %c0_100, %c32_101] : memref<2x16x16x144xbf16, #tpu.memory_space<vmem>>, vector<2x1x16x16xbf16>
      tpu.vector_store %arg9[%c0_98, %c0_99, %c0_100, %c32_101], %95 {strides = array<i32>} : memref<2x16x16x144xbf16, #tpu.memory_space<vmem>>, vector<2x1x16x16xbf16>,
      %cst_102 = arith.constant 0.000000e+00 : bf16
      %97 = vector.broadcast %cst_102 : bf16 to vector<2x16x1x16xbf16>
      %c0_103 = arith.constant 0 : index
      %c0_104 = arith.constant 0 : index
      %c15 = arith.constant 15 : index
      %c32_105 = arith.constant 32 : index
      %98 = vector.load %arg9[%c0_103, %c0_104, %c15, %c32_105] : memref<2x16x16x144xbf16, #tpu.memory_space<vmem>>, vector<2x16x1x16xbf16>
      tpu.vector_store %arg9[%c0_103, %c0_104, %c15, %c32_105], %97 {strides = array<i32>} : memref<2x16x16x144xbf16, #tpu.memory_space<vmem>>, vector<2x16x1x16xbf16>,
      %cst_106 = arith.constant 0.000000e+00 : bf16
      %99 = vector.broadcast %cst_106 : bf16 to vector<2x16x1x16xbf16>
      %c0_107 = arith.constant 0 : index
      %c0_108 = arith.constant 0 : index
      %c0_109 = arith.constant 0 : index
      %c48_110 = arith.constant 48 : index
      %100 = vector.load %arg9[%c0_107, %c0_108, %c0_109, %c48_110] : memref<2x16x16x144xbf16, #tpu.memory_space<vmem>>, vector<2x16x1x16xbf16>
      tpu.vector_store %arg9[%c0_107, %c0_108, %c0_109, %c48_110], %99 {strides = array<i32>} : memref<2x16x16x144xbf16, #tpu.memory_space<vmem>>, vector<2x16x1x16xbf16>,
      %cst_111 = arith.constant 0.000000e+00 : bf16
      %101 = vector.broadcast %cst_111 : bf16 to vector<2x16x1x16xbf16>
      %c0_112 = arith.constant 0 : index
      %c0_113 = arith.constant 0 : index
      %c15_114 = arith.constant 15 : index
      %c80_115 = arith.constant 80 : index
      %102 = vector.load %arg9[%c0_112, %c0_113, %c15_114, %c80_115] : memref<2x16x16x144xbf16, #tpu.memory_space<vmem>>, vector<2x16x1x16xbf16>
      tpu.vector_store %arg9[%c0_112, %c0_113, %c15_114, %c80_115], %101 {strides = array<i32>} : memref<2x16x16x144xbf16, #tpu.memory_space<vmem>>, vector<2x16x1x16xbf16>,
      %cst_116 = arith.constant 0.000000e+00 : bf16
      %103 = vector.broadcast %cst_116 : bf16 to vector<2x1x16x16xbf16>
      %c0_117 = arith.constant 0 : index
      %c15_118 = arith.constant 15 : index
      %c0_119 = arith.constant 0 : index
      %c96_120 = arith.constant 96 : index
      %104 = vector.load %arg9[%c0_117, %c15_118, %c0_119, %c96_120] : memref<2x16x16x144xbf16, #tpu.memory_space<vmem>>, vector<2x1x16x16xbf16>
      tpu.vector_store %arg9[%c0_117, %c15_118, %c0_119, %c96_120], %103 {strides = array<i32>} : memref<2x16x16x144xbf16, #tpu.memory_space<vmem>>, vector<2x1x16x16xbf16>,
      %cst_121 = arith.constant 0.000000e+00 : bf16
      %105 = vector.broadcast %cst_121 : bf16 to vector<2x16x1x16xbf16>
      %c0_122 = arith.constant 0 : index
      %c0_123 = arith.constant 0 : index
      %c0_124 = arith.constant 0 : index
      %c96_125 = arith.constant 96 : index
      %106 = vector.load %arg9[%c0_122, %c0_123, %c0_124, %c96_125] : memref<2x16x16x144xbf16, #tpu.memory_space<vmem>>, vector<2x16x1x16xbf16>
      tpu.vector_store %arg9[%c0_122, %c0_123, %c0_124, %c96_125], %105 {strides = array<i32>} : memref<2x16x16x144xbf16, #tpu.memory_space<vmem>>, vector<2x16x1x16xbf16>,
      %cst_126 = arith.constant 0.000000e+00 : bf16
      %107 = vector.broadcast %cst_126 : bf16 to vector<2x1x16x16xbf16>
      %c0_127 = arith.constant 0 : index
      %c15_128 = arith.constant 15 : index
      %c0_129 = arith.constant 0 : index
      %c112_130 = arith.constant 112 : index
      %108 = vector.load %arg9[%c0_127, %c15_128, %c0_129, %c112_130] : memref<2x16x16x144xbf16, #tpu.memory_space<vmem>>, vector<2x1x16x16xbf16>
      tpu.vector_store %arg9[%c0_127, %c15_128, %c0_129, %c112_130], %107 {strides = array<i32>} : memref<2x16x16x144xbf16, #tpu.memory_space<vmem>>, vector<2x1x16x16xbf16>,
      %cst_131 = arith.constant 0.000000e+00 : bf16
      %109 = vector.broadcast %cst_131 : bf16 to vector<2x1x16x16xbf16>
      %c0_132 = arith.constant 0 : index
      %c15_133 = arith.constant 15 : index
      %c0_134 = arith.constant 0 : index
      %c128_135 = arith.constant 128 : index
      %110 = vector.load %arg9[%c0_132, %c15_133, %c0_134, %c128_135] : memref<2x16x16x144xbf16, #tpu.memory_space<vmem>>, vector<2x1x16x16xbf16>
      tpu.vector_store %arg9[%c0_132, %c15_133, %c0_134, %c128_135], %109 {strides = array<i32>} : memref<2x16x16x144xbf16, #tpu.memory_space<vmem>>, vector<2x1x16x16xbf16>,
      %cst_136 = arith.constant 0.000000e+00 : bf16
      %111 = vector.broadcast %cst_136 : bf16 to vector<2x16x1x16xbf16>
      %c0_137 = arith.constant 0 : index
      %c0_138 = arith.constant 0 : index
      %c15_139 = arith.constant 15 : index
      %c128_140 = arith.constant 128 : index
      %112 = vector.load %arg9[%c0_137, %c0_138, %c15_139, %c128_140] : memref<2x16x16x144xbf16, #tpu.memory_space<vmem>>, vector<2x16x1x16xbf16>
      tpu.vector_store %arg9[%c0_137, %c0_138, %c15_139, %c128_140], %111 {strides = array<i32>} : memref<2x16x16x144xbf16, #tpu.memory_space<vmem>>, vector<2x16x1x16xbf16>,
    } else {
    }
    %c0 = arith.constant 0 : index
    %c0_1 = arith.constant 0 : index
    %c0_2 = arith.constant 0 : index
    %c0_3 = arith.constant 0 : index
    %3 = vector.load %arg8[%c0, %c0_1, %c0_2, %c0_3] : memref<2x16x16x16xf32, #tpu.memory_space<vmem>>, vector<2x16x16x16xf32>
    %4 = vector.shape_cast %3 : vector<2x16x16x16xf32> to vector<512x16xf32>
    %cst = arith.constant dense<0.000000e+00> : vector<16xf32>
    %5 = vector.multi_reduction <add>, %4, %cst [0] : vector<512x16xf32> to vector<16xf32>
    %6 = vector.shape_cast %5 : vector<16xf32> to vector<1x16xf32>
    %cst_4 = arith.constant 0.001953125 : f32
    %7 = vector.broadcast %cst_4 : f32 to vector<1x16xf32>
    %8 = arith.mulf %6, %7 : vector<1x16xf32>
    %9 = vector.broadcast %8 : vector<1x16xf32> to vector<512x16xf32>
    %10 = arith.subf %4, %9 : vector<512x16xf32>
    %11 = arith.mulf %10, %10 : vector<512x16xf32>
    %cst_5 = arith.constant dense<0.000000e+00> : vector<16xf32>
    %12 = vector.multi_reduction <add>, %11, %cst_5 [0] : vector<512x16xf32> to vector<16xf32>
    %13 = vector.shape_cast %12 : vector<16xf32> to vector<1x16xf32>
    %cst_6 = arith.constant 0.001953125 : f32
    %14 = vector.broadcast %cst_6 : f32 to vector<1x16xf32>
    %15 = arith.mulf %13, %14 : vector<1x16xf32>
    %cst_7 = arith.constant 9.99999974E-6 : f32
    %16 = vector.broadcast %cst_7 : f32 to vector<1x16xf32>
    %17 = arith.addf %15, %16 : vector<1x16xf32>
    %18 = math.rsqrt %17 : vector<1x16xf32>
    %c0_8 = arith.constant 0 : index
    %c0_9 = arith.constant 0 : index
    %c0_10 = arith.constant 0 : index
    %19 = vector.load %arg2[%c0_8, %c0_9, %c0_10] : memref<1x1x16xf32, #tpu.memory_space<vmem>>, vector<1x1x16xf32>
    %20 = vector.shape_cast %19 : vector<1x1x16xf32> to vector<1x16xf32>
    %21 = arith.mulf %18, %20 : vector<1x16xf32>
    %22 = vector.broadcast %21 : vector<1x16xf32> to vector<512x16xf32>
    %23 = arith.mulf %10, %22 : vector<512x16xf32>
    %c0_11 = arith.constant 0 : index
    %c0_12 = arith.constant 0 : index
    %c0_13 = arith.constant 0 : index
    %24 = vector.load %arg3[%c0_11, %c0_12, %c0_13] : memref<1x1x16xf32, #tpu.memory_space<vmem>>, vector<1x1x16xf32>
    %25 = vector.shape_cast %24 : vector<1x1x16xf32> to vector<1x16xf32>
    %26 = vector.broadcast %25 : vector<1x16xf32> to vector<512x16xf32>
    %27 = arith.addf %23, %26 : vector<512x16xf32>
    %cst_14 = arith.constant 0.000000e+00 : f32
    %28 = vector.broadcast %cst_14 : f32 to vector<512x16xf32>
    %29 = arith.maximumf %27, %28 : vector<512x16xf32>
    %30 = arith.truncf %29 : vector<512x16xf32> to vector<512x16xbf16>
    %c0_15 = arith.constant 0 : index
    %c0_16 = arith.constant 0 : index
    %c0_17 = arith.constant 0 : index
    %31 = vector.load %arg4[%c0_15, %c0_16, %c0_17] : memref<1x16x16xbf16, #tpu.memory_space<vmem>>, vector<1x16x16xbf16>
    %32 = vector.shape_cast %31 : vector<1x16x16xbf16> to vector<16x16xbf16>
    %cst_18 = arith.constant dense<0.000000e+00> : vector<512x16xf32>
    %33 = tpu.matmul %30, %32, %cst_18 {dimension_numbers = #tpu.dot_dimension_numbers<[1], [0], [0], [1], [0, 0, 1, 1], [], []>} : vector<512x16xbf16>, vector<16x16xbf16>, vector<512x16xf32> -> vector<512x16xf32>
    %cst_19 = arith.constant dense<0.000000e+00> : vector<16xf32>
    %34 = vector.multi_reduction <add>, %33, %cst_19 [0] : vector<512x16xf32> to vector<16xf32>
    %35 = vector.shape_cast %34 : vector<16xf32> to vector<1x16xf32>
    %cst_20 = arith.constant 0.001953125 : f32
    %36 = vector.broadcast %cst_20 : f32 to vector<1x16xf32>
    %37 = arith.mulf %35, %36 : vector<1x16xf32>
    %38 = vector.broadcast %37 : vector<1x16xf32> to vector<512x16xf32>
    %39 = arith.subf %33, %38 : vector<512x16xf32>
    %40 = arith.mulf %39, %39 : vector<512x16xf32>
    %cst_21 = arith.constant dense<0.000000e+00> : vector<16xf32>
    %41 = vector.multi_reduction <add>, %40, %cst_21 [0] : vector<512x16xf32> to vector<16xf32>
    %42 = vector.shape_cast %41 : vector<16xf32> to vector<1x16xf32>
    %cst_22 = arith.constant 0.001953125 : f32
    %43 = vector.broadcast %cst_22 : f32 to vector<1x16xf32>
    %44 = arith.mulf %42, %43 : vector<1x16xf32>
    %cst_23 = arith.constant 9.99999974E-6 : f32
    %45 = vector.broadcast %cst_23 : f32 to vector<1x16xf32>
    %46 = arith.addf %44, %45 : vector<1x16xf32>
    %47 = math.rsqrt %46 : vector<1x16xf32>
    %c0_24 = arith.constant 0 : index
    %c0_25 = arith.constant 0 : index
    %c0_26 = arith.constant 0 : index
    %48 = vector.load %arg5[%c0_24, %c0_25, %c0_26] : memref<1x1x16xf32, #tpu.memory_space<vmem>>, vector<1x1x16xf32>
    %49 = vector.shape_cast %48 : vector<1x1x16xf32> to vector<1x16xf32>
    %50 = arith.mulf %47, %49 : vector<1x16xf32>
    %51 = vector.broadcast %50 : vector<1x16xf32> to vector<512x16xf32>
    %52 = arith.mulf %39, %51 : vector<512x16xf32>
    %c0_27 = arith.constant 0 : index
    %c0_28 = arith.constant 0 : index
    %c0_29 = arith.constant 0 : index
    %53 = vector.load %arg6[%c0_27, %c0_28, %c0_29] : memref<1x1x16xf32, #tpu.memory_space<vmem>>, vector<1x1x16xf32>
    %54 = vector.shape_cast %53 : vector<1x1x16xf32> to vector<1x16xf32>
    %55 = vector.broadcast %54 : vector<1x16xf32> to vector<512x16xf32>
    %56 = arith.addf %52, %55 : vector<512x16xf32>
    %cst_30 = arith.constant 0.000000e+00 : f32
    %57 = vector.broadcast %cst_30 : f32 to vector<512x16xf32>
    %58 = arith.maximumf %56, %57 : vector<512x16xf32>
    %59 = arith.truncf %58 : vector<512x16xf32> to vector<512x16xbf16>
    %60 = vector.shape_cast %59 : vector<512x16xbf16> to vector<2x16x16x16xbf16>
    %61 = vector.extract_strided_slice %60 {offsets = [0, 0, 0, 0], sizes = [2, 15, 15, 16], strides = [1, 1, 1, 1]} : vector<2x16x16x16xbf16> to vector<2x15x15x16xbf16>
    %c0_31 = arith.constant 0 : index
    %c1 = arith.constant 1 : index
    %c1_32 = arith.constant 1 : index
    %c0_33 = arith.constant 0 : index
    %62 = vector.load %arg9[%c0_31, %c1, %c1_32, %c0_33] : memref<2x16x16x144xbf16, #tpu.memory_space<vmem>>, vector<2x15x15x16xbf16>
    tpu.vector_store %arg9[%c0_31, %c1, %c1_32, %c0_33], %61 {strides = array<i32>} : memref<2x16x16x144xbf16, #tpu.memory_space<vmem>>, vector<2x15x15x16xbf16>,
    %63 = vector.extract_strided_slice %60 {offsets = [0, 0, 0, 0], sizes = [2, 15, 16, 16], strides = [1, 1, 1, 1]} : vector<2x16x16x16xbf16> to vector<2x15x16x16xbf16>
    %c0_34 = arith.constant 0 : index
    %c1_35 = arith.constant 1 : index
    %c0_36 = arith.constant 0 : index
    %c16 = arith.constant 16 : index
    %64 = vector.load %arg9[%c0_34, %c1_35, %c0_36, %c16] : memref<2x16x16x144xbf16, #tpu.memory_space<vmem>>, vector<2x15x16x16xbf16>
    tpu.vector_store %arg9[%c0_34, %c1_35, %c0_36, %c16], %63 {strides = array<i32>} : memref<2x16x16x144xbf16, #tpu.memory_space<vmem>>, vector<2x15x16x16xbf16>,
    %65 = vector.extract_strided_slice %60 {offsets = [0, 0, 1, 0], sizes = [2, 15, 15, 16], strides = [1, 1, 1, 1]} : vector<2x16x16x16xbf16> to vector<2x15x15x16xbf16>
    %c0_37 = arith.constant 0 : index
    %c1_38 = arith.constant 1 : index
    %c0_39 = arith.constant 0 : index
    %c32 = arith.constant 32 : index
    %66 = vector.load %arg9[%c0_37, %c1_38, %c0_39, %c32] : memref<2x16x16x144xbf16, #tpu.memory_space<vmem>>, vector<2x15x15x16xbf16>
    tpu.vector_store %arg9[%c0_37, %c1_38, %c0_39, %c32], %65 {strides = array<i32>} : memref<2x16x16x144xbf16, #tpu.memory_space<vmem>>, vector<2x15x15x16xbf16>,
    %67 = vector.extract_strided_slice %60 {offsets = [0, 0, 0, 0], sizes = [2, 16, 15, 16], strides = [1, 1, 1, 1]} : vector<2x16x16x16xbf16> to vector<2x16x15x16xbf16>
    %c0_40 = arith.constant 0 : index
    %c0_41 = arith.constant 0 : index
    %c1_42 = arith.constant 1 : index
    %c48 = arith.constant 48 : index
    %68 = vector.load %arg9[%c0_40, %c0_41, %c1_42, %c48] : memref<2x16x16x144xbf16, #tpu.memory_space<vmem>>, vector<2x16x15x16xbf16>
    tpu.vector_store %arg9[%c0_40, %c0_41, %c1_42, %c48], %67 {strides = array<i32>} : memref<2x16x16x144xbf16, #tpu.memory_space<vmem>>, vector<2x16x15x16xbf16>,
    %c0_43 = arith.constant 0 : index
    %c0_44 = arith.constant 0 : index
    %c0_45 = arith.constant 0 : index
    %c64 = arith.constant 64 : index
    %69 = vector.load %arg9[%c0_43, %c0_44, %c0_45, %c64] : memref<2x16x16x144xbf16, #tpu.memory_space<vmem>>, vector<2x16x16x16xbf16>
    tpu.vector_store %arg9[%c0_43, %c0_44, %c0_45, %c64], %60 {strides = array<i32>} : memref<2x16x16x144xbf16, #tpu.memory_space<vmem>>, vector<2x16x16x16xbf16>,
    %70 = vector.extract_strided_slice %60 {offsets = [0, 0, 1, 0], sizes = [2, 16, 15, 16], strides = [1, 1, 1, 1]} : vector<2x16x16x16xbf16> to vector<2x16x15x16xbf16>
    %c0_46 = arith.constant 0 : index
    %c0_47 = arith.constant 0 : index
    %c0_48 = arith.constant 0 : index
    %c80 = arith.constant 80 : index
    %71 = vector.load %arg9[%c0_46, %c0_47, %c0_48, %c80] : memref<2x16x16x144xbf16, #tpu.memory_space<vmem>>, vector<2x16x15x16xbf16>
    tpu.vector_store %arg9[%c0_46, %c0_47, %c0_48, %c80], %70 {strides = array<i32>} : memref<2x16x16x144xbf16, #tpu.memory_space<vmem>>, vector<2x16x15x16xbf16>,
    %72 = vector.extract_strided_slice %60 {offsets = [0, 1, 0, 0], sizes = [2, 15, 15, 16], strides = [1, 1, 1, 1]} : vector<2x16x16x16xbf16> to vector<2x15x15x16xbf16>
    %c0_49 = arith.constant 0 : index
    %c0_50 = arith.constant 0 : index
    %c1_51 = arith.constant 1 : index
    %c96 = arith.constant 96 : index
    %73 = vector.load %arg9[%c0_49, %c0_50, %c1_51, %c96] : memref<2x16x16x144xbf16, #tpu.memory_space<vmem>>, vector<2x15x15x16xbf16>
    tpu.vector_store %arg9[%c0_49, %c0_50, %c1_51, %c96], %72 {strides = array<i32>} : memref<2x16x16x144xbf16, #tpu.memory_space<vmem>>, vector<2x15x15x16xbf16>,
    %74 = vector.extract_strided_slice %60 {offsets = [0, 1, 0, 0], sizes = [2, 15, 16, 16], strides = [1, 1, 1, 1]} : vector<2x16x16x16xbf16> to vector<2x15x16x16xbf16>
    %c0_52 = arith.constant 0 : index
    %c0_53 = arith.constant 0 : index
    %c0_54 = arith.constant 0 : index
    %c112 = arith.constant 112 : index
    %75 = vector.load %arg9[%c0_52, %c0_53, %c0_54, %c112] : memref<2x16x16x144xbf16, #tpu.memory_space<vmem>>, vector<2x15x16x16xbf16>
    tpu.vector_store %arg9[%c0_52, %c0_53, %c0_54, %c112], %74 {strides = array<i32>} : memref<2x16x16x144xbf16, #tpu.memory_space<vmem>>, vector<2x15x16x16xbf16>,
    %76 = vector.extract_strided_slice %60 {offsets = [0, 1, 1, 0], sizes = [2, 15, 15, 16], strides = [1, 1, 1, 1]} : vector<2x16x16x16xbf16> to vector<2x15x15x16xbf16>
    %c0_55 = arith.constant 0 : index
    %c0_56 = arith.constant 0 : index
    %c0_57 = arith.constant 0 : index
    %c128 = arith.constant 128 : index
    %77 = vector.load %arg9[%c0_55, %c0_56, %c0_57, %c128] : memref<2x16x16x144xbf16, #tpu.memory_space<vmem>>, vector<2x15x15x16xbf16>
    tpu.vector_store %arg9[%c0_55, %c0_56, %c0_57, %c128], %76 {strides = array<i32>} : memref<2x16x16x144xbf16, #tpu.memory_space<vmem>>, vector<2x15x15x16xbf16>,
    %c0_58 = arith.constant 0 : index
    %c0_59 = arith.constant 0 : index
    %c0_60 = arith.constant 0 : index
    %c0_61 = arith.constant 0 : index
    %78 = vector.load %arg9[%c0_58, %c0_59, %c0_60, %c0_61] : memref<2x16x16x144xbf16, #tpu.memory_space<vmem>>, vector<2x16x16x144xbf16>
    %79 = vector.shape_cast %78 : vector<2x16x16x144xbf16> to vector<512x144xbf16>
    %c0_62 = arith.constant 0 : index
    %c0_63 = arith.constant 0 : index
    %c0_64 = arith.constant 0 : index
    %80 = vector.load %arg7[%c0_62, %c0_63, %c0_64] : memref<1x144x16xbf16, #tpu.memory_space<vmem>>, vector<1x144x16xbf16>
    %81 = vector.shape_cast %80 : vector<1x144x16xbf16> to vector<144x16xbf16>
    %cst_65 = arith.constant dense<0.000000e+00> : vector<512x16xf32>
    %82 = tpu.matmul %79, %81, %cst_65 {dimension_numbers = #tpu.dot_dimension_numbers<[1], [0], [0], [1], [0, 0, 1, 1], [], []>} : vector<512x144xbf16>, vector<144x16xbf16>, vector<512x16xf32> -> vector<512x16xf32>
    %c0_66 = arith.constant 0 : index
    %c0_67 = arith.constant 0 : index
    %c0_68 = arith.constant 0 : index
    %c0_69 = arith.constant 0 : index
    %83 = vector.load %arg8[%c0_66, %c0_67, %c0_68, %c0_69] : memref<2x16x16x16xf32, #tpu.memory_space<vmem>>, vector<2x16x16x16xf32>
    %84 = vector.shape_cast %82 : vector<512x16xf32> to vector<2x16x16x16xf32>
    %85 = arith.addf %83, %84 : vector<2x16x16x16xf32>
    %c0_70 = arith.constant 0 : index
    %c0_71 = arith.constant 0 : index
    %c0_72 = arith.constant 0 : index
    %c0_73 = arith.constant 0 : index
    %86 = vector.load %arg8[%c0_70, %c0_71, %c0_72, %c0_73] : memref<2x16x16x16xf32, #tpu.memory_space<vmem>>, vector<2x16x16x16xf32>
    tpu.vector_store %arg8[%c0_70, %c0_71, %c0_72, %c0_73], %85 {strides = array<i32>} : memref<2x16x16x16xf32, #tpu.memory_space<vmem>>, vector<2x16x16x16xf32>,
    return
  }
  func.func @transform_0(%arg0: i32) -> (i32, i32, i32, i32) {
    %c0_i32 = arith.constant 0 : i32
    %c0_i32_0 = arith.constant 0 : i32
    %c0_i32_1 = arith.constant 0 : i32
    %c0_i32_2 = arith.constant 0 : i32
    %c0_i32_3 = arith.constant 0 : i32
    return %c0_i32, %c0_i32_0, %c0_i32_1, %c0_i32_2 : i32, i32, i32, i32
  }
  func.func @transform_1(%arg0: i32) -> (i32, i32, i32) {
    %c0_i32 = arith.constant 0 : i32
    %c0_i32_0 = arith.constant 0 : i32
    %c0_i32_1 = arith.constant 0 : i32
    return %arg0, %c0_i32, %c0_i32_0 : i32, i32, i32
  }
  func.func @transform_2(%arg0: i32) -> (i32, i32, i32) {
    %c0_i32 = arith.constant 0 : i32
    %c0_i32_0 = arith.constant 0 : i32
    %c0_i32_1 = arith.constant 0 : i32
    return %arg0, %c0_i32, %c0_i32_0 : i32, i32, i32
  }
  func.func @transform_3(%arg0: i32) -> (i32, i32, i32) {
    %c0_i32 = arith.constant 0 : i32
    %c0_i32_0 = arith.constant 0 : i32
    %c0_i32_1 = arith.constant 0 : i32
    return %arg0, %c0_i32, %c0_i32_0 : i32, i32, i32
  }
  func.func @transform_4(%arg0: i32) -> (i32, i32, i32) {
    %c0_i32 = arith.constant 0 : i32
    %c0_i32_0 = arith.constant 0 : i32
    %c0_i32_1 = arith.constant 0 : i32
    return %arg0, %c0_i32, %c0_i32_0 : i32, i32, i32
  }
  func.func @transform_5(%arg0: i32) -> (i32, i32, i32) {
    %c0_i32 = arith.constant 0 : i32
    %c0_i32_0 = arith.constant 0 : i32
    %c0_i32_1 = arith.constant 0 : i32
    return %arg0, %c0_i32, %c0_i32_0 : i32, i32, i32
  }
  func.func @transform_6(%arg0: i32) -> (i32, i32, i32) {
    %c0_i32 = arith.constant 0 : i32
    %c0_i32_0 = arith.constant 0 : i32
    %c0_i32_1 = arith.constant 0 : i32
    return %arg0, %c0_i32, %c0_i32_0 : i32, i32, i32
  }
  func.func @transform_7(%arg0: i32) -> (i32, i32, i32, i32) {
    %c0_i32 = arith.constant 0 : i32
    %c0_i32_0 = arith.constant 0 : i32
    %c0_i32_1 = arith.constant 0 : i32
    %c0_i32_2 = arith.constant 0 : i32
    %c0_i32_3 = arith.constant 0 : i32
    return %c0_i32, %c0_i32_0, %c0_i32_1, %c0_i32_2 : i32, i32, i32, i32
  }
}

</mosaic_0001>

<llo_original>
// kernel: dense_block_add_pallas.1
$region0: #{dense_block_add_pallas.1}
  #allocation0 [shape = 'u32[]', space=smem, size = 0x4, offset = 0x4, fixed_abs, tag = 'smem constant byte address 0x4 - core index']
  #allocation1 [shape = 'u32[144,128]{1,0:T(1,128)}', space=vmem, size = 0x12000, scoped, tag = 'internal scratch']
  #allocation2 [shape = 'bf16[2,16,16,144]{3,2,1,0:T(16,128)(2,1)}', space=vmem, size = 0x40000, scoped, tag = 'scratch operand']
  %s0 = inlined_call_operand.hbm [shape: f32[2,16,16,16], index: 0, kind: input, shape index: {}, may-alias: {0,7}]
  %s1 = inlined_call_operand.vmem [shape: f32[3,1,16], index: 1, kind: input, shape index: {}]
  %s2 = inlined_call_operand.vmem [shape: f32[3,1,16], index: 2, kind: input, shape index: {}]
  %s3 = inlined_call_operand.vmem [shape: bf16[3,16,16], index: 3, kind: input, shape index: {}]
  %s4 = inlined_call_operand.vmem [shape: f32[3,1,16], index: 4, kind: input, shape index: {}]
  %s5 = inlined_call_operand.vmem [shape: f32[3,1,16], index: 5, kind: input, shape index: {}]
  %s6 = inlined_call_operand.vmem [shape: bf16[3,144,16], index: 6, kind: input, shape index: {}]
  %s7 = inlined_call_operand.hbm [shape: f32[2,16,16,16], index: 7, kind: output, shape index: {}, may-alias: {0,7}]
  %s8 = sld [smem:[#allocation0]]
  $region69: #{dense_block_add_pallas.1} parent=0
    _
  %s10 = ssub.s32 1, %s8
  %s11 = scalar_select 0, %s10, %s8
  $region1: #{dense_block_add_pallas.1} parent=0
    #allocation3 [shape = 'u8[262144]{0}', space=vmem, size = 0x40000, scoped, tag = 'input window, operand 0, single buffered']
    #allocation4 [shape = 's32[2]{0}', space=sflag, size = 0x8, scoped, tag = 'scoped memory for dense_block_add_pallas.1']
    #allocation5 [shape = 's32[2]{0}', space=sflag, size = 0x8, scoped, tag = 'scoped memory for dense_block_add_pallas.1']
    #allocation6 [shape = 'u8[262144]{0}', space=vmem, size = 0x40000, scoped, tag = 'output window, operand 0, single buffered']
    %12 = vsyncpa [#allocation4], 0
    %13 = vsyncpa [#allocation5], 0
    loop: start=0, step=1, limit=5
    $region2: #{dense_block_add_pallas.1} parent=1 // loop_pre_header
      _
    $region3: #{dense_block_add_pallas.1} parent=1 // loop_header
      %s15 = sphi 0, %s19
      %p16 = scmp.ge.s32.totalorder %s15, 5
      %s23 = sphi 0, %s23
      %s25 = sphi 0, %s23
      %s26 = sphi 0, %s25
      %s40 = sphi 0, %s26
      %s46 = sphi 0, %s48
      %s49 = sphi 0, %s46
      %s50 = sphi 0, %s49
      %s66 = sphi 0, %s50
      %s72 = sphi 0, %s74
      %s75 = sphi 0, %s72
      %s76 = sphi 0, %s75
      %s92 = sphi 0, %s76
      %s98 = sphi 0, %s100
      %s101 = sphi 0, %s98
      %s102 = sphi 0, %s101
      %s118 = sphi 0, %s102
      %s124 = sphi 0, %s126
      %s127 = sphi 0, %s124
      %s128 = sphi 0, %s127
      %s144 = sphi 0, %s128
      %s150 = sphi 0, %s152
      %s153 = sphi 0, %s150
      %s154 = sphi 0, %s153
      %s170 = sphi 0, %s154
      %s176 = sphi 0, %s178
      %s179 = sphi 0, %s176
      %s180 = sphi 0, %s179
      %s196 = sphi 0, %s180
      %s200 = sphi 0, %s200
      %s202 = sphi 0, %s200
      %s203 = sphi 0, %s202
      %s217 = sphi 0, %s203
    $region4: #{dense_block_add_pallas.1} parent=1 // loop_header_branch
      %18 = sbr.rel (%p16) target = $region8
    $region5: #{dense_block_add_pallas.1} parent=1 // loop_body
      %s20 = ssub.s32 %s15, 1
      %s21 = ssub.s32 %s15, 2
      %s22 = sadd.s32 %s15, 1
      %s24 = sadd.s32 %s23, 1
      %p27 = scmp.eq.s32.totalorder %s15, 2
      %p28 = scmp.ne.s32.totalorder %s23, %s25
      %p29 = scmp.eq.s32.totalorder %s15, 0
      %p30 = por %p28, %p29
      %p31 = scmp.ne.s32.totalorder %s23, %s25
      %p32 = scmp.eq.s32.totalorder %s20, 2
      %p33 = por %p31, %p32
      %p34 = scmp.ne.s32.totalorder %s25, %s26
      %p35 = scmp.eq.s32.totalorder %s20, 0
      %p36 = por %p34, %p35
      %p37 = scmp.ne.s32.totalorder %s25, %s26
      %p38 = scmp.eq.s32.totalorder %s21, 2
      %p39 = por %p37, %p38
      %p41 = scmp.ne.s32.totalorder %s26, %s40
      %p42 = scmp.eq.s32.totalorder %s21, 0
      %p43 = por %p41, %p42
      %s44 = ssub.s32 %s15, %s22
      %p45 = scmp.eq.s32.totalorder %s44, 0
      %s47 = sadd.s32 %s46, 1
      %s48 = scalar_select %p45, %s46, %s47
      %p51 = pneg %p45
      %p52 = scmp.eq.s32.totalorder %s15, 2
      %p53 = por %p51, %p52
      %p54 = scmp.ne.s32.totalorder %s46, %s49
      %p55 = scmp.eq.s32.totalorder %s15, 0
      %p56 = por %p54, %p55
      %p57 = scmp.ne.s32.totalorder %s46, %s49
      %p58 = scmp.eq.s32.totalorder %s20, 2
      %p59 = por %p57, %p58
      %p60 = scmp.ne.s32.totalorder %s49, %s50
      %p61 = scmp.eq.s32.totalorder %s20, 0
      %p62 = por %p60, %p61
      %p63 = scmp.ne.s32.totalorder %s49, %s50
      %p64 = scmp.eq.s32.totalorder %s21, 2
      %p65 = por %p63, %p64
      %p67 = scmp.ne.s32.totalorder %s50, %s66
      %p68 = scmp.eq.s32.totalorder %s21, 0
      %p69 = por %p67, %p68
      %s70 = ssub.s32 %s15, %s22
      %p71 = scmp.eq.s32.totalorder %s70, 0
      %s73 = sadd.s32 %s72, 1
      %s74 = scalar_select %p71, %s72, %s73
      %p77 = pneg %p71
      %p78 = scmp.eq.s32.totalorder %s15, 2
      %p79 = por %p77, %p78
      %p80 = scmp.ne.s32.totalorder %s72, %s75
      %p81 = scmp.eq.s32.totalorder %s15, 0
      %p82 = por %p80, %p81
      %p83 = scmp.ne.s32.totalorder %s72, %s75
      %p84 = scmp.eq.s32.totalorder %s20, 2
      %p85 = por %p83, %p84
      %p86 = scmp.ne.s32.totalorder %s75, %s76
      %p87 = scmp.eq.s32.totalorder %s20, 0
      %p88 = por %p86, %p87
      %p89 = scmp.ne.s32.totalorder %s75, %s76
      %p90 = scmp.eq.s32.totalorder %s21, 2
      %p91 = por %p89, %p90
      %p93 = scmp.ne.s32.totalorder %s76, %s92
      %p94 = scmp.eq.s32.totalorder %s21, 0
      %p95 = por %p93, %p94
      %s96 = ssub.s32 %s15, %s22
      %p97 = scmp.eq.s32.totalorder %s96, 0
      %s99 = sadd.s32 %s98, 1
      %s100 = scalar_select %p97, %s98, %s99
      %p103 = pneg %p97
      %p104 = scmp.eq.s32.totalorder %s15, 2
      %p105 = por %p103, %p104
      %p106 = scmp.ne.s32.totalorder %s98, %s101
      %p107 = scmp.eq.s32.totalorder %s15, 0
      %p108 = por %p106, %p107
      %p109 = scmp.ne.s32.totalorder %s98, %s101
      %p110 = scmp.eq.s32.totalorder %s20, 2
      %p111 = por %p109, %p110
      %p112 = scmp.ne.s32.totalorder %s101, %s102
      %p113 = scmp.eq.s32.totalorder %s20, 0
      %p114 = por %p112, %p113
      %p115 = scmp.ne.s32.totalorder %s101, %s102
      %p116 = scmp.eq.s32.totalorder %s21, 2
      %p117 = por %p115, %p116
      %p119 = scmp.ne.s32.totalorder %s102, %s118
      %p120 = scmp.eq.s32.totalorder %s21, 0
      %p121 = por %p119, %p120
      %s122 = ssub.s32 %s15, %s22
      %p123 = scmp.eq.s32.totalorder %s122, 0
      %s125 = sadd.s32 %s124, 1
      %s126 = scalar_select %p123, %s124, %s125
      %p129 = pneg %p123
      %p130 = scmp.eq.s32.totalorder %s15, 2
      %p131 = por %p129, %p130
      %p132 = scmp.ne.s32.totalorder %s124, %s127
      %p133 = scmp.eq.s32.totalorder %s15, 0
      %p134 = por %p132, %p133
      %p135 = scmp.ne.s32.totalorder %s124, %s127
      %p136 = scmp.eq.s32.totalorder %s20, 2
      %p137 = por %p135, %p136
      %p138 = scmp.ne.s32.totalorder %s127, %s128
      %p139 = scmp.eq.s32.totalorder %s20, 0
      %p140 = por %p138, %p139
      %p141 = scmp.ne.s32.totalorder %s127, %s128
      %p142 = scmp.eq.s32.totalorder %s21, 2
      %p143 = por %p141, %p142
      %p145 = scmp.ne.s32.totalorder %s128, %s144
      %p146 = scmp.eq.s32.totalorder %s21, 0
      %p147 = por %p145, %p146
      %s148 = ssub.s32 %s15, %s22
      %p149 = scmp.eq.s32.totalorder %s148, 0
      %s151 = sadd.s32 %s150, 1
      %s152 = scalar_select %p149, %s150, %s151
      %p155 = pneg %p149
      %p156 = scmp.eq.s32.totalorder %s15, 2
      %p157 = por %p155, %p156
      %p158 = scmp.ne.s32.totalorder %s150, %s153
      %p159 = scmp.eq.s32.totalorder %s15, 0
      %p160 = por %p158, %p159
      %p161 = scmp.ne.s32.totalorder %s150, %s153
      %p162 = scmp.eq.s32.totalorder %s20, 2
      %p163 = por %p161, %p162
      %p164 = scmp.ne.s32.totalorder %s153, %s154
      %p165 = scmp.eq.s32.totalorder %s20, 0
      %p166 = por %p164, %p165
      %p167 = scmp.ne.s32.totalorder %s153, %s154
      %p168 = scmp.eq.s32.totalorder %s21, 2
      %p169 = por %p167, %p168
      %p171 = scmp.ne.s32.totalorder %s154, %s170
      %p172 = scmp.eq.s32.totalorder %s21, 0
      %p173 = por %p171, %p172
      %s174 = ssub.s32 %s15, %s22
      %p175 = scmp.eq.s32.totalorder %s174, 0
      %s177 = sadd.s32 %s176, 1
      %s178 = scalar_select %p175, %s176, %s177
      %p181 = pneg %p175
      %p182 = scmp.eq.s32.totalorder %s15, 2
      %p183 = por %p181, %p182
      %p184 = scmp.ne.s32.totalorder %s176, %s179
      %p185 = scmp.eq.s32.totalorder %s15, 0
      %p186 = por %p184, %p185
      %p187 = scmp.ne.s32.totalorder %s176, %s179
      %p188 = scmp.eq.s32.totalorder %s20, 2
      %p189 = por %p187, %p188
      %p190 = scmp.ne.s32.totalorder %s179, %s180
      %p191 = scmp.eq.s32.totalorder %s20, 0
      %p192 = por %p190, %p191
      %p193 = scmp.ne.s32.totalorder %s179, %s180
      %p194 = scmp.eq.s32.totalorder %s21, 2
      %p195 = por %p193, %p194
      %p197 = scmp.ne.s32.totalorder %s180, %s196
      %p198 = scmp.eq.s32.totalorder %s21, 0
      %p199 = por %p197, %p198
      %s201 = sadd.s32 %s200, 1
      %p204 = scmp.eq.s32.totalorder %s15, 2
      %p205 = scmp.ne.s32.totalorder %s200, %s202
      %p206 = scmp.eq.s32.totalorder %s15, 0
      %p207 = por %p205, %p206
      %p208 = scmp.ne.s32.totalorder %s200, %s202
      %p209 = scmp.eq.s32.totalorder %s20, 2
      %p210 = por %p208, %p209
      %p211 = scmp.ne.s32.totalorder %s202, %s203
      %p212 = scmp.eq.s32.totalorder %s20, 0
      %p213 = por %p211, %p212
      %p214 = scmp.ne.s32.totalorder %s202, %s203
      %p215 = scmp.eq.s32.totalorder %s21, 2
      %p216 = por %p214, %p215
      %p218 = scmp.ne.s32.totalorder %s203, %s217
      %p219 = scmp.eq.s32.totalorder %s21, 0
      %p220 = por %p218, %p219
      %p221 = scmp.le.s32.totalorder 1, %s15
      %p222 = scmp.lt.s32.totalorder %s15, 4
      %p223 = pnand %p221, %p222
      %p224 = pneg %p223
      // Predicated region
      $region9: #{dense_block_add_pallas.1} parent=5 // pred_check
        _
      $region10: #{dense_block_add_pallas.1} parent=5 // pred_check_branch
        %226 = sbr.rel (%p223) target = $region12
      $region11: #{dense_block_add_pallas.1} parent=5 // pred_region
        %s227 = ssub.s32 %s15, 1
        // Predicated region
        $region13: #{dense_block_add_pallas.1} parent=11 // pred_check
          %p228 = pneg %p36
        $region14: #{dense_block_add_pallas.1} parent=11 // pred_check_branch
          %230 = sbr.rel (%p228) target = $region16
        $region15: #{dense_block_add_pallas.1} parent=11 // pred_region
          %s232 = ssub.s32 8192, 8192
          %233 = vsyncadd [#allocation4], %s232
          %s234 = sshll.u32 [#allocation3], 4
          %s235 = int_to_ptr.vmem [resolvable:$true] %s234
          %240 = dma.hbm_to_vmem [thread:$0]  %s0, 8192, %s235, [#allocation4], 128, 128, 8
        $region16: #{dense_block_add_pallas.1} parent=11 // pred_fallthru
          _
      $region12: #{dense_block_add_pallas.1} parent=5 // pred_fallthru
        _
      %p241 = scmp.lt.s32.totalorder %s15, 3
      // Predicated region
      $region17: #{dense_block_add_pallas.1} parent=5 // pred_check
        %p242 = pneg %p241
      $region18: #{dense_block_add_pallas.1} parent=5 // pred_check_branch
        %244 = sbr.rel (%p242) target = $region20
      $region19: #{dense_block_add_pallas.1} parent=5 // pred_region
        // Predicated region
        $region21: #{dense_block_add_pallas.1} parent=19 // pred_check
          %p245 = pneg %p56
        $region22: #{dense_block_add_pallas.1} parent=19 // pred_check_branch
          %247 = sbr.rel (%p245) target = $region24
        $region23: #{dense_block_add_pallas.1} parent=19 // pred_region
          %p248 = scmp.lt.s32.totalorder %s15, 2
          %s249 = scalar_select %p248, %s15, 2
          %s250 = scalar_lea.vmem %s1, %s249
        $region24: #{dense_block_add_pallas.1} parent=19 // pred_fallthru
          _
        // Predicated region
        $region25: #{dense_block_add_pallas.1} parent=19 // pred_check
          %p251 = pneg %p82
        $region26: #{dense_block_add_pallas.1} parent=19 // pred_check_branch
          %253 = sbr.rel (%p251) target = $region28
        $region27: #{dense_block_add_pallas.1} parent=19 // pred_region
          %p254 = scmp.lt.s32.totalorder %s15, 2
          %s255 = scalar_select %p254, %s15, 2
          %s256 = scalar_lea.vmem %s2, %s255
        $region28: #{dense_block_add_pallas.1} parent=19 // pred_fallthru
          _
        // Predicated region
        $region29: #{dense_block_add_pallas.1} parent=19 // pred_check
          %p257 = pneg %p108
        $region30: #{dense_block_add_pallas.1} parent=19 // pred_check_branch
          %259 = sbr.rel (%p257) target = $region32
        $region31: #{dense_block_add_pallas.1} parent=19 // pred_region
          %p260 = scmp.lt.s32.totalorder %s15, 2
          %s261 = scalar_select %p260, %s15, 2
          %s262 = smul.addr %s261, 2
          %s263 = smul.addr %s262, 4
          %s264 = scalar_lea.vmem %s3, %s263
        $region32: #{dense_block_add_pallas.1} parent=19 // pred_fallthru
          _
        // Predicated region
        $region33: #{dense_block_add_pallas.1} parent=19 // pred_check
          %p265 = pneg %p134
        $region34: #{dense_block_add_pallas.1} parent=19 // pred_check_branch
          %267 = sbr.rel (%p265) target = $region36
        $region35: #{dense_block_add_pallas.1} parent=19 // pred_region
          %p268 = scmp.lt.s32.totalorder %s15, 2
          %s269 = scalar_select %p268, %s15, 2
          %s270 = scalar_lea.vmem %s4, %s269
        $region36: #{dense_block_add_pallas.1} parent=19 // pred_fallthru
          _
        // Predicated region
        $region37: #{dense_block_add_pallas.1} parent=19 // pred_check
          %p271 = pneg %p160
        $region38: #{dense_block_add_pallas.1} parent=19 // pred_check_branch
          %273 = sbr.rel (%p271) target = $region40
        $region39: #{dense_block_add_pallas.1} parent=19 // pred_region
          %p274 = scmp.lt.s32.totalorder %s15, 2
          %s275 = scalar_select %p274, %s15, 2
          %s276 = scalar_lea.vmem %s5, %s275
        $region40: #{dense_block_add_pallas.1} parent=19 // pred_fallthru
          _
        // Predicated region
        $region41: #{dense_block_add_pallas.1} parent=19 // pred_check
          %p277 = pneg %p186
        $region42: #{dense_block_add_pallas.1} parent=19 // pred_check_branch
          %279 = sbr.rel (%p277) target = $region44
        $region43: #{dense_block_add_pallas.1} parent=19 // pred_region
          %p280 = scmp.lt.s32.totalorder %s15, 2
          %s281 = scalar_select %p280, %s15, 2
          %s282 = smul.addr %s281, 18
          %s283 = smul.addr %s282, 4
          %s284 = scalar_lea.vmem %s6, %s283
        $region44: #{dense_block_add_pallas.1} parent=19 // pred_fallthru
          _
      $region20: #{dense_block_add_pallas.1} parent=5 // pred_fallthru
        _
      %p285 = scmp.le.s32.totalorder 1, %s15
      %p286 = scmp.lt.s32.totalorder %s15, 4
      %p287 = pnand %p285, %p286
      %p288 = pneg %p287
      // Predicated region
      $region45: #{dense_block_add_pallas.1} parent=5 // pred_check
        _
      $region46: #{dense_block_add_pallas.1} parent=5 // pred_check_branch
        %290 = sbr.rel (%p287) target = $region48
      $region47: #{dense_block_add_pallas.1} parent=5 // pred_region
        %s291 = ssub.s32 %s15, 1
        // Predicated region
        $region49: #{dense_block_add_pallas.1} parent=47 // pred_check
          %p292 = pneg %p36
        $region50: #{dense_block_add_pallas.1} parent=47 // pred_check_branch
          %294 = sbr.rel (%p292) target = $region52
        $region51: #{dense_block_add_pallas.1} parent=47 // pred_region
          %295 = dma.done [#allocation4], 8192
        $region52: #{dense_block_add_pallas.1} parent=47 // pred_fallthru
          _
        %p296 = pneg %p36
        %p297 = pneg %p33
        %p298 = scmp.lt.s32.totalorder %s20, 2
        %s299 = scalar_select %p298, %s20, 2
        %s300 = scalar_lea.vmem %s1, %s299
        %p301 = pneg %p62
        %p302 = pneg %p59
        %p303 = scmp.lt.s32.totalorder %s20, 2
        %s304 = scalar_select %p303, %s20, 2
        %s305 = scalar_lea.vmem %s2, %s304
        %p306 = pneg %p88
        %p307 = pneg %p85
        %p308 = scmp.lt.s32.totalorder %s20, 2
        %s309 = scalar_select %p308, %s20, 2
        %s310 = smul.addr %s309, 2
        %s311 = smul.addr %s310, 4
        %s312 = scalar_lea.vmem %s3, %s311
        %p313 = pneg %p114
        %p314 = pneg %p111
        %p315 = scmp.lt.s32.totalorder %s20, 2
        %s316 = scalar_select %p315, %s20, 2
        %s317 = scalar_lea.vmem %s4, %s316
        %p318 = pneg %p140
        %p319 = pneg %p137
        %p320 = scmp.lt.s32.totalorder %s20, 2
        %s321 = scalar_select %p320, %s20, 2
        %s322 = scalar_lea.vmem %s5, %s321
        %p323 = pneg %p166
        %p324 = pneg %p163
        %p325 = scmp.lt.s32.totalorder %s20, 2
        %s326 = scalar_select %p325, %s20, 2
        %s327 = smul.addr %s326, 18
        %s328 = smul.addr %s327, 4
        %s329 = scalar_lea.vmem %s6, %s328
        %p330 = pneg %p192
        %p331 = pneg %p189
        %p332 = pneg %p213
        %p333 = pneg %p210
        %p334 = scmp.lt.s32.totalorder %s20, 2
        %s335 = scalar_select %p334, %s20, 2
        %s336 = scalar_lea.vmem %s1, %s335
        %p337 = scmp.lt.s32.totalorder %s20, 2
        %s338 = scalar_select %p337, %s20, 2
        %s339 = scalar_lea.vmem %s2, %s338
        %p340 = scmp.lt.s32.totalorder %s20, 2
        %s341 = scalar_select %p340, %s20, 2
        %s342 = smul.addr %s341, 2
        %s343 = smul.addr %s342, 4
        %s344 = scalar_lea.vmem %s3, %s343
        %p345 = scmp.lt.s32.totalorder %s20, 2
        %s346 = scalar_select %p345, %s20, 2
        %s347 = scalar_lea.vmem %s4, %s346
        %p348 = scmp.lt.s32.totalorder %s20, 2
        %s349 = scalar_select %p348, %s20, 2
        %s350 = scalar_lea.vmem %s5, %s349
        %p351 = scmp.lt.s32.totalorder %s20, 2
        %s352 = scalar_select %p351, %s20, 2
        %s353 = smul.addr %s352, 18
        %s354 = smul.addr %s353, 4
        %s355 = scalar_lea.vmem %s6, %s354
        %p357 = scmp.eq.s32.totalorder %s20, 0
        // Predicated region
        $region53: #{dense_block_add_pallas.1} parent=47 // pred_check
          %p358 = pneg %p357
        $region54: #{dense_block_add_pallas.1} parent=47 // pred_check_branch
          %360 = sbr.rel (%p358) target = $region56
        $region55: #{dense_block_add_pallas.1} parent=47 // pred_region
          %v361 = vld [vmem:[#allocation3] sm:$0xff]
          %v362 = vld [vmem:[#allocation3 + $0x8] sm:$0xff]
          %v363 = vld [vmem:[#allocation3 + $0x10] sm:$0xff]
          %v364 = vld [vmem:[#allocation3 + $0x18] sm:$0xff]
          %v365 = vld [vmem:[#allocation3 + $0x20] sm:$0xff]
          %v366 = vld [vmem:[#allocation3 + $0x28] sm:$0xff]
          %v367 = vld [vmem:[#allocation3 + $0x30] sm:$0xff]
          %v368 = vld [vmem:[#allocation3 + $0x38] sm:$0xff]
          %v369 = vld [vmem:[#allocation3 + $0x40] sm:$0xff]
          %v370 = vld [vmem:[#allocation3 + $0x48] sm:$0xff]
          %v371 = vld [vmem:[#allocation3 + $0x50] sm:$0xff]
          %v372 = vld [vmem:[#allocation3 + $0x58] sm:$0xff]
          %v373 = vld [vmem:[#allocation3 + $0x60] sm:$0xff]
          %v374 = vld [vmem:[#allocation3 + $0x68] sm:$0xff]
          %v375 = vld [vmem:[#allocation3 + $0x70] sm:$0xff]
          %v376 = vld [vmem:[#allocation3 + $0x78] sm:$0xff]
          %v377 = vld [vmem:[#allocation3 + $0x80] sm:$0xff]
          %v378 = vld [vmem:[#allocation3 + $0x88] sm:$0xff]
          %v379 = vld [vmem:[#allocation3 + $0x90] sm:$0xff]
          %v380 = vld [vmem:[#allocation3 + $0x98] sm:$0xff]
          %v381 = vld [vmem:[#allocation3 + $0xa0] sm:$0xff]
          %v382 = vld [vmem:[#allocation3 + $0xa8] sm:$0xff]
          %v383 = vld [vmem:[#allocation3 + $0xb0] sm:$0xff]
          %v384 = vld [vmem:[#allocation3 + $0xb8] sm:$0xff]
          %v385 = vld [vmem:[#allocation3 + $0xc0] sm:$0xff]
          %v386 = vld [vmem:[#allocation3 + $0xc8] sm:$0xff]
          %v387 = vld [vmem:[#allocation3 + $0xd0] sm:$0xff]
          %v388 = vld [vmem:[#allocation3 + $0xd8] sm:$0xff]
          %v389 = vld [vmem:[#allocation3 + $0xe0] sm:$0xff]
          %v390 = vld [vmem:[#allocation3 + $0xe8] sm:$0xff]
          %v391 = vld [vmem:[#allocation3 + $0xf0] sm:$0xff]
          %v392 = vld [vmem:[#allocation3 + $0xf8] sm:$0xff]
          %v393 = vld [vmem:[#allocation3 + $0x100] sm:$0xff]
          %v394 = vld [vmem:[#allocation3 + $0x108] sm:$0xff]
          %v395 = vld [vmem:[#allocation3 + $0x110] sm:$0xff]
          %v396 = vld [vmem:[#allocation3 + $0x118] sm:$0xff]
          %v397 = vld [vmem:[#allocation3 + $0x120] sm:$0xff]
          %v398 = vld [vmem:[#allocation3 + $0x128] sm:$0xff]
          %v399 = vld [vmem:[#allocation3 + $0x130] sm:$0xff]
          %v400 = vld [vmem:[#allocation3 + $0x138] sm:$0xff]
          %v401 = vld [vmem:[#allocation3 + $0x140] sm:$0xff]
          %v402 = vld [vmem:[#allocation3 + $0x148] sm:$0xff]
          %v403 = vld [vmem:[#allocation3 + $0x150] sm:$0xff]
          %v404 = vld [vmem:[#allocation3 + $0x158] sm:$0xff]
          %v405 = vld [vmem:[#allocation3 + $0x160] sm:$0xff]
          %v406 = vld [vmem:[#allocation3 + $0x168] sm:$0xff]
          %v407 = vld [vmem:[#allocation3 + $0x170] sm:$0xff]
          %v408 = vld [vmem:[#allocation3 + $0x178] sm:$0xff]
          %v409 = vld [vmem:[#allocation3 + $0x180] sm:$0xff]
          %v410 = vld [vmem:[#allocation3 + $0x188] sm:$0xff]
          %v411 = vld [vmem:[#allocation3 + $0x190] sm:$0xff]
          %v412 = vld [vmem:[#allocation3 + $0x198] sm:$0xff]
          %v413 = vld [vmem:[#allocation3 + $0x1a0] sm:$0xff]
          %v414 = vld [vmem:[#allocation3 + $0x1a8] sm:$0xff]
          %v415 = vld [vmem:[#allocation3 + $0x1b0] sm:$0xff]
          %v416 = vld [vmem:[#allocation3 + $0x1b8] sm:$0xff]
          %v417 = vld [vmem:[#allocation3 + $0x1c0] sm:$0xff]
          %v418 = vld [vmem:[#allocation3 + $0x1c8] sm:$0xff]
          %v419 = vld [vmem:[#allocation3 + $0x1d0] sm:$0xff]
          %v420 = vld [vmem:[#allocation3 + $0x1d8] sm:$0xff]
          %v421 = vld [vmem:[#allocation3 + $0x1e0] sm:$0xff]
          %v422 = vld [vmem:[#allocation3 + $0x1e8] sm:$0xff]
          %v423 = vld [vmem:[#allocation3 + $0x1f0] sm:$0xff]
          %v424 = vld [vmem:[#allocation3 + $0x1f8] sm:$0xff]
          %vm425 = vcmask 130048
          %426 = vst.msk [vmem:[#allocation6] sm:$0xff] %vm425, %v361
          %427 = vst.msk [vmem:[#allocation6 + $0x8] sm:$0xff] %vm425, %v362
          %428 = vst.msk [vmem:[#allocation6 + $0x10] sm:$0xff] %vm425, %v363
          %429 = vst.msk [vmem:[#allocation6 + $0x18] sm:$0xff] %vm425, %v364
          %430 = vst.msk [vmem:[#allocation6 + $0x20] sm:$0xff] %vm425, %v365
          %431 = vst.msk [vmem:[#allocation6 + $0x28] sm:$0xff] %vm425, %v366
          %432 = vst.msk [vmem:[#allocation6 + $0x30] sm:$0xff] %vm425, %v367
          %433 = vst.msk [vmem:[#allocation6 + $0x38] sm:$0xff] %vm425, %v368
          %434 = vst.msk [vmem:[#allocation6 + $0x40] sm:$0xff] %vm425, %v369
          %435 = vst.msk [vmem:[#allocation6 + $0x48] sm:$0xff] %vm425, %v370
          %436 = vst.msk [vmem:[#allocation6 + $0x50] sm:$0xff] %vm425, %v371
          %437 = vst.msk [vmem:[#allocation6 + $0x58] sm:$0xff] %vm425, %v372
          %438 = vst.msk [vmem:[#allocation6 + $0x60] sm:$0xff] %vm425, %v373
          %439 = vst.msk [vmem:[#allocation6 + $0x68] sm:$0xff] %vm425, %v374
          %440 = vst.msk [vmem:[#allocation6 + $0x70] sm:$0xff] %vm425, %v375
          %441 = vst.msk [vmem:[#allocation6 + $0x78] sm:$0xff] %vm425, %v376
          %442 = vst.msk [vmem:[#allocation6 + $0x80] sm:$0xff] %vm425, %v377
          %443 = vst.msk [vmem:[#allocation6 + $0x88] sm:$0xff] %vm425, %v378
          %444 = vst.msk [vmem:[#allocation6 + $0x90] sm:$0xff] %vm425, %v379
          %445 = vst.msk [vmem:[#allocation6 + $0x98] sm:$0xff] %vm425, %v380
          %446 = vst.msk [vmem:[#allocation6 + $0xa0] sm:$0xff] %vm425, %v381
          %447 = vst.msk [vmem:[#allocation6 + $0xa8] sm:$0xff] %vm425, %v382
          %448 = vst.msk [vmem:[#allocation6 + $0xb0] sm:$0xff] %vm425, %v383
          %449 = vst.msk [vmem:[#allocation6 + $0xb8] sm:$0xff] %vm425, %v384
          %450 = vst.msk [vmem:[#allocation6 + $0xc0] sm:$0xff] %vm425, %v385
          %451 = vst.msk [vmem:[#allocation6 + $0xc8] sm:$0xff] %vm425, %v386
          %452 = vst.msk [vmem:[#allocation6 + $0xd0] sm:$0xff] %vm425, %v387
          %453 = vst.msk [vmem:[#allocation6 + $0xd8] sm:$0xff] %vm425, %v388
          %454 = vst.msk [vmem:[#allocation6 + $0xe0] sm:$0xff] %vm425, %v389
          %455 = vst.msk [vmem:[#allocation6 + $0xe8] sm:$0xff] %vm425, %v390
          %456 = vst.msk [vmem:[#allocation6 + $0xf0] sm:$0xff] %vm425, %v391
          %457 = vst.msk [vmem:[#allocation6 + $0xf8] sm:$0xff] %vm425, %v392
          %458 = vst.msk [vmem:[#allocation6 + $0x100] sm:$0xff] %vm425, %v393
          %459 = vst.msk [vmem:[#allocation6 + $0x108] sm:$0xff] %vm425, %v394
          %460 = vst.msk [vmem:[#allocation6 + $0x110] sm:$0xff] %vm425, %v395
          %461 = vst.msk [vmem:[#allocation6 + $0x118] sm:$0xff] %vm425, %v396
          %462 = vst.msk [vmem:[#allocation6 + $0x120] sm:$0xff] %vm425, %v397
          %463 = vst.msk [vmem:[#allocation6 + $0x128] sm:$0xff] %vm425, %v398
          %464 = vst.msk [vmem:[#allocation6 + $0x130] sm:$0xff] %vm425, %v399
          %465 = vst.msk [vmem:[#allocation6 + $0x138] sm:$0xff] %vm425, %v400
          %466 = vst.msk [vmem:[#allocation6 + $0x140] sm:$0xff] %vm425, %v401
          %467 = vst.msk [vmem:[#allocation6 + $0x148] sm:$0xff] %vm425, %v402
          %468 = vst.msk [vmem:[#allocation6 + $0x150] sm:$0xff] %vm425, %v403
          %469 = vst.msk [vmem:[#allocation6 + $0x158] sm:$0xff] %vm425, %v404
          %470 = vst.msk [vmem:[#allocation6 + $0x160] sm:$0xff] %vm425, %v405
          %471 = vst.msk [vmem:[#allocation6 + $0x168] sm:$0xff] %vm425, %v406
          %472 = vst.msk [vmem:[#allocation6 + $0x170] sm:$0xff] %vm425, %v407
          %473 = vst.msk [vmem:[#allocation6 + $0x178] sm:$0xff] %vm425, %v408
          %474 = vst.msk [vmem:[#allocation6 + $0x180] sm:$0xff] %vm425, %v409
          %475 = vst.msk [vmem:[#allocation6 + $0x188] sm:$0xff] %vm425, %v410
          %476 = vst.msk [vmem:[#allocation6 + $0x190] sm:$0xff] %vm425, %v411
          %477 = vst.msk [vmem:[#allocation6 + $0x198] sm:$0xff] %vm425, %v412
          %478 = vst.msk [vmem:[#allocation6 + $0x1a0] sm:$0xff] %vm425, %v413
          %479 = vst.msk [vmem:[#allocation6 + $0x1a8] sm:$0xff] %vm425, %v414
          %480 = vst.msk [vmem:[#allocation6 + $0x1b0] sm:$0xff] %vm425, %v415
          %481 = vst.msk [vmem:[#allocation6 + $0x1b8] sm:$0xff] %vm425, %v416
          %482 = vst.msk [vmem:[#allocation6 + $0x1c0] sm:$0xff] %vm425, %v417
          %483 = vst.msk [vmem:[#allocation6 + $0x1c8] sm:$0xff] %vm425, %v418
          %484 = vst.msk [vmem:[#allocation6 + $0x1d0] sm:$0xff] %vm425, %v419
          %485 = vst.msk [vmem:[#allocation6 + $0x1d8] sm:$0xff] %vm425, %v420
          %486 = vst.msk [vmem:[#allocation6 + $0x1e0] sm:$0xff] %vm425, %v421
          %487 = vst.msk [vmem:[#allocation6 + $0x1e8] sm:$0xff] %vm425, %v422
          %488 = vst.msk [vmem:[#allocation6 + $0x1f0] sm:$0xff] %vm425, %v423
          %489 = vst.msk [vmem:[#allocation6 + $0x1f8] sm:$0xff] %vm425, %v424
          %490 = vst.msk [vmem:[#allocation2] sm:$0xff] %vm425, 0
          %491 = vst.msk [vmem:[#allocation2 + $0x100] sm:$0xff] %vm425, 0
          %vm492 = vcmask 122880
          %vm493 = vsmask.f32 256
          %vm494 = vmand %vm492, %vm493
          %v495 = vld [vmem:[#allocation2] sm:$0x1]
          %v496 = vsel %vm494, 0, %v495
          %497 = vst [vmem:[#allocation2] sm:$0x1] %v496
          %v498 = vld [vmem:[#allocation2 + $0x10] sm:$0x1]
          %v499 = vsel %vm494, 0, %v498
          %500 = vst [vmem:[#allocation2 + $0x10] sm:$0x1] %v499
          %v501 = vld [vmem:[#allocation2 + $0x20] sm:$0x1]
          %v502 = vsel %vm494, 0, %v501
          %503 = vst [vmem:[#allocation2 + $0x20] sm:$0x1] %v502
          %v504 = vld [vmem:[#allocation2 + $0x30] sm:$0x1]
          %v505 = vsel %vm494, 0, %v504
          %506 = vst [vmem:[#allocation2 + $0x30] sm:$0x1] %v505
          %v507 = vld [vmem:[#allocation2 + $0x40] sm:$0x1]
          %v508 = vsel %vm494, 0, %v507
          %509 = vst [vmem:[#allocation2 + $0x40] sm:$0x1] %v508
          %v510 = vld [vmem:[#allocation2 + $0x50] sm:$0x1]
          %v511 = vsel %vm494, 0, %v510
          %512 = vst [vmem:[#allocation2 + $0x50] sm:$0x1] %v511
          %v513 = vld [vmem:[#allocation2 + $0x60] sm:$0x1]
          %v514 = vsel %vm494, 0, %v513
          %515 = vst [vmem:[#allocation2 + $0x60] sm:$0x1] %v514
          %v516 = vld [vmem:[#allocation2 + $0x70] sm:$0x1]
          %v517 = vsel %vm494, 0, %v516
          %518 = vst [vmem:[#allocation2 + $0x70] sm:$0x1] %v517
          %v519 = vld [vmem:[#allocation2 + $0x80] sm:$0x1]
          %v520 = vsel %vm494, 0, %v519
          %521 = vst [vmem:[#allocation2 + $0x80] sm:$0x1] %v520
          %v522 = vld [vmem:[#allocation2 + $0x90] sm:$0x1]
          %v523 = vsel %vm494, 0, %v522
          %524 = vst [vmem:[#allocation2 + $0x90] sm:$0x1] %v523
          %v525 = vld [vmem:[#allocation2 + $0xa0] sm:$0x1]
          %v526 = vsel %vm494, 0, %v525
          %527 = vst [vmem:[#allocation2 + $0xa0] sm:$0x1] %v526
          %v528 = vld [vmem:[#allocation2 + $0xb0] sm:$0x1]
          %v529 = vsel %vm494, 0, %v528
          %530 = vst [vmem:[#allocation2 + $0xb0] sm:$0x1] %v529
          %v531 = vld [vmem:[#allocation2 + $0xc0] sm:$0x1]
          %v532 = vsel %vm494, 0, %v531
          %533 = vst [vmem:[#allocation2 + $0xc0] sm:$0x1] %v532
          %v534 = vld [vmem:[#allocation2 + $0xd0] sm:$0x1]
          %v535 = vsel %vm494, 0, %v534
          %536 = vst [vmem:[#allocation2 + $0xd0] sm:$0x1] %v535
          %v537 = vld [vmem:[#allocation2 + $0xe0] sm:$0x1]
          %v538 = vsel %vm494, 0, %v537
          %539 = vst [vmem:[#allocation2 + $0xe0] sm:$0x1] %v538
          %v540 = vld [vmem:[#allocation2 + $0xf0] sm:$0x1]
          %v541 = vsel %vm494, 0, %v540
          %542 = vst [vmem:[#allocation2 + $0xf0] sm:$0x1] %v541
          %v543 = vld [vmem:[#allocation2 + $0x100] sm:$0x1]
          %v544 = vsel %vm494, 0, %v543
          %545 = vst [vmem:[#allocation2 + $0x100] sm:$0x1] %v544
          %v546 = vld [vmem:[#allocation2 + $0x110] sm:$0x1]
          %v547 = vsel %vm494, 0, %v546
          %548 = vst [vmem:[#allocation2 + $0x110] sm:$0x1] %v547
          %v549 = vld [vmem:[#allocation2 + $0x120] sm:$0x1]
          %v550 = vsel %vm494, 0, %v549
          %551 = vst [vmem:[#allocation2 + $0x120] sm:$0x1] %v550
          %v552 = vld [vmem:[#allocation2 + $0x130] sm:$0x1]
          %v553 = vsel %vm494, 0, %v552
          %554 = vst [vmem:[#allocation2 + $0x130] sm:$0x1] %v553
          %v555 = vld [vmem:[#allocation2 + $0x140] sm:$0x1]
          %v556 = vsel %vm494, 0, %v555
          %557 = vst [vmem:[#allocation2 + $0x140] sm:$0x1] %v556
          %v558 = vld [vmem:[#allocation2 + $0x150] sm:$0x1]
          %v559 = vsel %vm494, 0, %v558
          %560 = vst [vmem:[#allocation2 + $0x150] sm:$0x1] %v559
          %v561 = vld [vmem:[#allocation2 + $0x160] sm:$0x1]
          %v562 = vsel %vm494, 0, %v561
          %563 = vst [vmem:[#allocation2 + $0x160] sm:$0x1] %v562
          %v564 = vld [vmem:[#allocation2 + $0x170] sm:$0x1]
          %v565 = vsel %vm494, 0, %v564
          %566 = vst [vmem:[#allocation2 + $0x170] sm:$0x1] %v565
          %v567 = vld [vmem:[#allocation2 + $0x180] sm:$0x1]
          %v568 = vsel %vm494, 0, %v567
          %569 = vst [vmem:[#allocation2 + $0x180] sm:$0x1] %v568
          %v570 = vld [vmem:[#allocation2 + $0x190] sm:$0x1]
          %v571 = vsel %vm494, 0, %v570
          %572 = vst [vmem:[#allocation2 + $0x190] sm:$0x1] %v571
          %v573 = vld [vmem:[#allocation2 + $0x1a0] sm:$0x1]
          %v574 = vsel %vm494, 0, %v573
          %575 = vst [vmem:[#allocation2 + $0x1a0] sm:$0x1] %v574
          %v576 = vld [vmem:[#allocation2 + $0x1b0] sm:$0x1]
          %v577 = vsel %vm494, 0, %v576
          %578 = vst [vmem:[#allocation2 + $0x1b0] sm:$0x1] %v577
          %v579 = vld [vmem:[#allocation2 + $0x1c0] sm:$0x1]
          %v580 = vsel %vm494, 0, %v579
          %581 = vst [vmem:[#allocation2 + $0x1c0] sm:$0x1] %v580
          %v582 = vld [vmem:[#allocation2 + $0x1d0] sm:$0x1]
          %v583 = vsel %vm494, 0, %v582
          %584 = vst [vmem:[#allocation2 + $0x1d0] sm:$0x1] %v583
          %v585 = vld [vmem:[#allocation2 + $0x1e0] sm:$0x1]
          %v586 = vsel %vm494, 0, %v585
          %587 = vst [vmem:[#allocation2 + $0x1e0] sm:$0x1] %v586
          %v588 = vld [vmem:[#allocation2 + $0x1f0] sm:$0x1]
          %v589 = vsel %vm494, 0, %v588
          %590 = vst [vmem:[#allocation2 + $0x1f0] sm:$0x1] %v589
          %vm591 = vcmask 261248
          %592 = vst.msk [vmem:[#allocation2] sm:$0xff] %vm591, 0
          %593 = vst.msk [vmem:[#allocation2 + $0x100] sm:$0xff] %vm591, 0
          %vm594 = vcmask 392448
          %595 = vst.msk [vmem:[#allocation2] sm:$0xff] %vm594, 0
          %596 = vst.msk [vmem:[#allocation2 + $0x100] sm:$0xff] %vm594, 0
          %vm597 = vcmask 392455
          %vm598 = vsmask.f32 7966
          %vm599 = vmand %vm597, %vm598
          %v600 = vld [vmem:[#allocation2] sm:$0x80]
          %v601 = vsel %vm599, 0, %v600
          %602 = vst [vmem:[#allocation2] sm:$0x80] %v601
          %v603 = vld [vmem:[#allocation2 + $0x10] sm:$0x80]
          %v604 = vsel %vm599, 0, %v603
          %605 = vst [vmem:[#allocation2 + $0x10] sm:$0x80] %v604
          %v606 = vld [vmem:[#allocation2 + $0x20] sm:$0x80]
          %v607 = vsel %vm599, 0, %v606
          %608 = vst [vmem:[#allocation2 + $0x20] sm:$0x80] %v607
          %v609 = vld [vmem:[#allocation2 + $0x30] sm:$0x80]
          %v610 = vsel %vm599, 0, %v609
          %611 = vst [vmem:[#allocation2 + $0x30] sm:$0x80] %v610
          %v612 = vld [vmem:[#allocation2 + $0x40] sm:$0x80]
          %v613 = vsel %vm599, 0, %v612
          %614 = vst [vmem:[#allocation2 + $0x40] sm:$0x80] %v613
          %v615 = vld [vmem:[#allocation2 + $0x50] sm:$0x80]
          %v616 = vsel %vm599, 0, %v615
          %617 = vst [vmem:[#allocation2 + $0x50] sm:$0x80] %v616
          %v618 = vld [vmem:[#allocation2 + $0x60] sm:$0x80]
          %v619 = vsel %vm599, 0, %v618
          %620 = vst [vmem:[#allocation2 + $0x60] sm:$0x80] %v619
          %v621 = vld [vmem:[#allocation2 + $0x70] sm:$0x80]
          %v622 = vsel %vm599, 0, %v621
          %623 = vst [vmem:[#allocation2 + $0x70] sm:$0x80] %v622
          %v624 = vld [vmem:[#allocation2 + $0x80] sm:$0x80]
          %v625 = vsel %vm599, 0, %v624
          %626 = vst [vmem:[#allocation2 + $0x80] sm:$0x80] %v625
          %v627 = vld [vmem:[#allocation2 + $0x90] sm:$0x80]
          %v628 = vsel %vm599, 0, %v627
          %629 = vst [vmem:[#allocation2 + $0x90] sm:$0x80] %v628
          %v630 = vld [vmem:[#allocation2 + $0xa0] sm:$0x80]
          %v631 = vsel %vm599, 0, %v630
          %632 = vst [vmem:[#allocation2 + $0xa0] sm:$0x80] %v631
          %v633 = vld [vmem:[#allocation2 + $0xb0] sm:$0x80]
          %v634 = vsel %vm599, 0, %v633
          %635 = vst [vmem:[#allocation2 + $0xb0] sm:$0x80] %v634
          %v636 = vld [vmem:[#allocation2 + $0xc0] sm:$0x80]
          %v637 = vsel %vm599, 0, %v636
          %638 = vst [vmem:[#allocation2 + $0xc0] sm:$0x80] %v637
          %v639 = vld [vmem:[#allocation2 + $0xd0] sm:$0x80]
          %v640 = vsel %vm599, 0, %v639
          %641 = vst [vmem:[#allocation2 + $0xd0] sm:$0x80] %v640
          %v642 = vld [vmem:[#allocation2 + $0xe0] sm:$0x80]
          %v643 = vsel %vm599, 0, %v642
          %644 = vst [vmem:[#allocation2 + $0xe0] sm:$0x80] %v643
          %v645 = vld [vmem:[#allocation2 + $0xf0] sm:$0x80]
          %v646 = vsel %vm599, 0, %v645
          %647 = vst [vmem:[#allocation2 + $0xf0] sm:$0x80] %v646
          %v648 = vld [vmem:[#allocation2 + $0x100] sm:$0x80]
          %v649 = vsel %vm599, 0, %v648
          %650 = vst [vmem:[#allocation2 + $0x100] sm:$0x80] %v649
          %v651 = vld [vmem:[#allocation2 + $0x110] sm:$0x80]
          %v652 = vsel %vm599, 0, %v651
          %653 = vst [vmem:[#allocation2 + $0x110] sm:$0x80] %v652
          %v654 = vld [vmem:[#allocation2 + $0x120] sm:$0x80]
          %v655 = vsel %vm599, 0, %v654
          %656 = vst [vmem:[#allocation2 + $0x120] sm:$0x80] %v655
          %v657 = vld [vmem:[#allocation2 + $0x130] sm:$0x80]
          %v658 = vsel %vm599, 0, %v657
          %659 = vst [vmem:[#allocation2 + $0x130] sm:$0x80] %v658
          %v660 = vld [vmem:[#allocation2 + $0x140] sm:$0x80]
          %v661 = vsel %vm599, 0, %v660
          %662 = vst [vmem:[#allocation2 + $0x140] sm:$0x80] %v661
          %v663 = vld [vmem:[#allocation2 + $0x150] sm:$0x80]
          %v664 = vsel %vm599, 0, %v663
          %665 = vst [vmem:[#allocation2 + $0x150] sm:$0x80] %v664
          %v666 = vld [vmem:[#allocation2 + $0x160] sm:$0x80]
          %v667 = vsel %vm599, 0, %v666
          %668 = vst [vmem:[#allocation2 + $0x160] sm:$0x80] %v667
          %v669 = vld [vmem:[#allocation2 + $0x170] sm:$0x80]
          %v670 = vsel %vm599, 0, %v669
          %671 = vst [vmem:[#allocation2 + $0x170] sm:$0x80] %v670
          %v672 = vld [vmem:[#allocation2 + $0x180] sm:$0x80]
          %v673 = vsel %vm599, 0, %v672
          %674 = vst [vmem:[#allocation2 + $0x180] sm:$0x80] %v673
          %v675 = vld [vmem:[#allocation2 + $0x190] sm:$0x80]
          %v676 = vsel %vm599, 0, %v675
          %677 = vst [vmem:[#allocation2 + $0x190] sm:$0x80] %v676
          %v678 = vld [vmem:[#allocation2 + $0x1a0] sm:$0x80]
          %v679 = vsel %vm599, 0, %v678
          %680 = vst [vmem:[#allocation2 + $0x1a0] sm:$0x80] %v679
          %v681 = vld [vmem:[#allocation2 + $0x1b0] sm:$0x80]
          %v682 = vsel %vm599, 0, %v681
          %683 = vst [vmem:[#allocation2 + $0x1b0] sm:$0x80] %v682
          %v684 = vld [vmem:[#allocation2 + $0x1c0] sm:$0x80]
          %v685 = vsel %vm599, 0, %v684
          %686 = vst [vmem:[#allocation2 + $0x1c0] sm:$0x80] %v685
          %v687 = vld [vmem:[#allocation2 + $0x1d0] sm:$0x80]
          %v688 = vsel %vm599, 0, %v687
          %689 = vst [vmem:[#allocation2 + $0x1d0] sm:$0x80] %v688
          %v690 = vld [vmem:[#allocation2 + $0x1e0] sm:$0x80]
          %v691 = vsel %vm599, 0, %v690
          %692 = vst [vmem:[#allocation2 + $0x1e0] sm:$0x80] %v691
          %v693 = vld [vmem:[#allocation2 + $0x1f0] sm:$0x80]
          %v694 = vsel %vm599, 0, %v693
          %695 = vst [vmem:[#allocation2 + $0x1f0] sm:$0x80] %v694
          %vm696 = vcmask 516480
          %vm697 = vmand %vm696, %vm493
          %v698 = vld [vmem:[#allocation2] sm:$0x1]
          %v699 = vsel %vm697, 0, %v698
          %700 = vst [vmem:[#allocation2] sm:$0x1] %v699
          %v701 = vld [vmem:[#allocation2 + $0x10] sm:$0x1]
          %v702 = vsel %vm697, 0, %v701
          %703 = vst [vmem:[#allocation2 + $0x10] sm:$0x1] %v702
          %v704 = vld [vmem:[#allocation2 + $0x20] sm:$0x1]
          %v705 = vsel %vm697, 0, %v704
          %706 = vst [vmem:[#allocation2 + $0x20] sm:$0x1] %v705
          %v707 = vld [vmem:[#allocation2 + $0x30] sm:$0x1]
          %v708 = vsel %vm697, 0, %v707
          %709 = vst [vmem:[#allocation2 + $0x30] sm:$0x1] %v708
          %v710 = vld [vmem:[#allocation2 + $0x40] sm:$0x1]
          %v711 = vsel %vm697, 0, %v710
          %712 = vst [vmem:[#allocation2 + $0x40] sm:$0x1] %v711
          %v713 = vld [vmem:[#allocation2 + $0x50] sm:$0x1]
          %v714 = vsel %vm697, 0, %v713
          %715 = vst [vmem:[#allocation2 + $0x50] sm:$0x1] %v714
          %v716 = vld [vmem:[#allocation2 + $0x60] sm:$0x1]
          %v717 = vsel %vm697, 0, %v716
          %718 = vst [vmem:[#allocation2 + $0x60] sm:$0x1] %v717
          %v719 = vld [vmem:[#allocation2 + $0x70] sm:$0x1]
          %v720 = vsel %vm697, 0, %v719
          %721 = vst [vmem:[#allocation2 + $0x70] sm:$0x1] %v720
          %v722 = vld [vmem:[#allocation2 + $0x80] sm:$0x1]
          %v723 = vsel %vm697, 0, %v722
          %724 = vst [vmem:[#allocation2 + $0x80] sm:$0x1] %v723
          %v725 = vld [vmem:[#allocation2 + $0x90] sm:$0x1]
          %v726 = vsel %vm697, 0, %v725
          %727 = vst [vmem:[#allocation2 + $0x90] sm:$0x1] %v726
          %v728 = vld [vmem:[#allocation2 + $0xa0] sm:$0x1]
          %v729 = vsel %vm697, 0, %v728
          %730 = vst [vmem:[#allocation2 + $0xa0] sm:$0x1] %v729
          %v731 = vld [vmem:[#allocation2 + $0xb0] sm:$0x1]
          %v732 = vsel %vm697, 0, %v731
          %733 = vst [vmem:[#allocation2 + $0xb0] sm:$0x1] %v732
          %v734 = vld [vmem:[#allocation2 + $0xc0] sm:$0x1]
          %v735 = vsel %vm697, 0, %v734
          %736 = vst [vmem:[#allocation2 + $0xc0] sm:$0x1] %v735
          %v737 = vld [vmem:[#allocation2 + $0xd0] sm:$0x1]
          %v738 = vsel %vm697, 0, %v737
          %739 = vst [vmem:[#allocation2 + $0xd0] sm:$0x1] %v738
          %v740 = vld [vmem:[#allocation2 + $0xe0] sm:$0x1]
          %v741 = vsel %vm697, 0, %v740
          %742 = vst [vmem:[#allocation2 + $0xe0] sm:$0x1] %v741
          %v743 = vld [vmem:[#allocation2 + $0xf0] sm:$0x1]
          %v744 = vsel %vm697, 0, %v743
          %745 = vst [vmem:[#allocation2 + $0xf0] sm:$0x1] %v744
          %v746 = vld [vmem:[#allocation2 + $0x100] sm:$0x1]
          %v747 = vsel %vm697, 0, %v746
          %748 = vst [vmem:[#allocation2 + $0x100] sm:$0x1] %v747
          %v749 = vld [vmem:[#allocation2 + $0x110] sm:$0x1]
          %v750 = vsel %vm697, 0, %v749
          %751 = vst [vmem:[#allocation2 + $0x110] sm:$0x1] %v750
          %v752 = vld [vmem:[#allocation2 + $0x120] sm:$0x1]
          %v753 = vsel %vm697, 0, %v752
          %754 = vst [vmem:[#allocation2 + $0x120] sm:$0x1] %v753
          %v755 = vld [vmem:[#allocation2 + $0x130] sm:$0x1]
          %v756 = vsel %vm697, 0, %v755
          %757 = vst [vmem:[#allocation2 + $0x130] sm:$0x1] %v756
          %v758 = vld [vmem:[#allocation2 + $0x140] sm:$0x1]
          %v759 = vsel %vm697, 0, %v758
          %760 = vst [vmem:[#allocation2 + $0x140] sm:$0x1] %v759
          %v761 = vld [vmem:[#allocation2 + $0x150] sm:$0x1]
          %v762 = vsel %vm697, 0, %v761
          %763 = vst [vmem:[#allocation2 + $0x150] sm:$0x1] %v762
          %v764 = vld [vmem:[#allocation2 + $0x160] sm:$0x1]
          %v765 = vsel %vm697, 0, %v764
          %766 = vst [vmem:[#allocation2 + $0x160] sm:$0x1] %v765
          %v767 = vld [vmem:[#allocation2 + $0x170] sm:$0x1]
          %v768 = vsel %vm697, 0, %v767
          %769 = vst [vmem:[#allocation2 + $0x170] sm:$0x1] %v768
          %v770 = vld [vmem:[#allocation2 + $0x180] sm:$0x1]
          %v771 = vsel %vm697, 0, %v770
          %772 = vst [vmem:[#allocation2 + $0x180] sm:$0x1] %v771
          %v773 = vld [vmem:[#allocation2 + $0x190] sm:$0x1]
          %v774 = vsel %vm697, 0, %v773
          %775 = vst [vmem:[#allocation2 + $0x190] sm:$0x1] %v774
          %v776 = vld [vmem:[#allocation2 + $0x1a0] sm:$0x1]
          %v777 = vsel %vm697, 0, %v776
          %778 = vst [vmem:[#allocation2 + $0x1a0] sm:$0x1] %v777
          %v779 = vld [vmem:[#allocation2 + $0x1b0] sm:$0x1]
          %v780 = vsel %vm697, 0, %v779
          %781 = vst [vmem:[#allocation2 + $0x1b0] sm:$0x1] %v780
          %v782 = vld [vmem:[#allocation2 + $0x1c0] sm:$0x1]
          %v783 = vsel %vm697, 0, %v782
          %784 = vst [vmem:[#allocation2 + $0x1c0] sm:$0x1] %v783
          %v785 = vld [vmem:[#allocation2 + $0x1d0] sm:$0x1]
          %v786 = vsel %vm697, 0, %v785
          %787 = vst [vmem:[#allocation2 + $0x1d0] sm:$0x1] %v786
          %v788 = vld [vmem:[#allocation2 + $0x1e0] sm:$0x1]
          %v789 = vsel %vm697, 0, %v788
          %790 = vst [vmem:[#allocation2 + $0x1e0] sm:$0x1] %v789
          %v791 = vld [vmem:[#allocation2 + $0x1f0] sm:$0x1]
          %v792 = vsel %vm697, 0, %v791
          %793 = vst [vmem:[#allocation2 + $0x1f0] sm:$0x1] %v792
          %vm794 = vcmask 786055
          %vm795 = vmand %vm794, %vm598
          %v796 = vld [vmem:[#allocation2] sm:$0x80]
          %v797 = vsel %vm795, 0, %v796
          %798 = vst [vmem:[#allocation2] sm:$0x80] %v797
          %v799 = vld [vmem:[#allocation2 + $0x10] sm:$0x80]
          %v800 = vsel %vm795, 0, %v799
          %801 = vst [vmem:[#allocation2 + $0x10] sm:$0x80] %v800
          %v802 = vld [vmem:[#allocation2 + $0x20] sm:$0x80]
          %v803 = vsel %vm795, 0, %v802
          %804 = vst [vmem:[#allocation2 + $0x20] sm:$0x80] %v803
          %v805 = vld [vmem:[#allocation2 + $0x30] sm:$0x80]
          %v806 = vsel %vm795, 0, %v805
          %807 = vst [vmem:[#allocation2 + $0x30] sm:$0x80] %v806
          %v808 = vld [vmem:[#allocation2 + $0x40] sm:$0x80]
          %v809 = vsel %vm795, 0, %v808
          %810 = vst [vmem:[#allocation2 + $0x40] sm:$0x80] %v809
          %v811 = vld [vmem:[#allocation2 + $0x50] sm:$0x80]
          %v812 = vsel %vm795, 0, %v811
          %813 = vst [vmem:[#allocation2 + $0x50] sm:$0x80] %v812
          %v814 = vld [vmem:[#allocation2 + $0x60] sm:$0x80]
          %v815 = vsel %vm795, 0, %v814
          %816 = vst [vmem:[#allocation2 + $0x60] sm:$0x80] %v815
          %v817 = vld [vmem:[#allocation2 + $0x70] sm:$0x80]
          %v818 = vsel %vm795, 0, %v817
          %819 = vst [vmem:[#allocation2 + $0x70] sm:$0x80] %v818
          %v820 = vld [vmem:[#allocation2 + $0x80] sm:$0x80]
          %v821 = vsel %vm795, 0, %v820
          %822 = vst [vmem:[#allocation2 + $0x80] sm:$0x80] %v821
          %v823 = vld [vmem:[#allocation2 + $0x90] sm:$0x80]
          %v824 = vsel %vm795, 0, %v823
          %825 = vst [vmem:[#allocation2 + $0x90] sm:$0x80] %v824
          %v826 = vld [vmem:[#allocation2 + $0xa0] sm:$0x80]
          %v827 = vsel %vm795, 0, %v826
          %828 = vst [vmem:[#allocation2 + $0xa0] sm:$0x80] %v827
          %v829 = vld [vmem:[#allocation2 + $0xb0] sm:$0x80]
          %v830 = vsel %vm795, 0, %v829
          %831 = vst [vmem:[#allocation2 + $0xb0] sm:$0x80] %v830
          %v832 = vld [vmem:[#allocation2 + $0xc0] sm:$0x80]
          %v833 = vsel %vm795, 0, %v832
          %834 = vst [vmem:[#allocation2 + $0xc0] sm:$0x80] %v833
          %v835 = vld [vmem:[#allocation2 + $0xd0] sm:$0x80]
          %v836 = vsel %vm795, 0, %v835
          %837 = vst [vmem:[#allocation2 + $0xd0] sm:$0x80] %v836
          %v838 = vld [vmem:[#allocation2 + $0xe0] sm:$0x80]
          %v839 = vsel %vm795, 0, %v838
          %840 = vst [vmem:[#allocation2 + $0xe0] sm:$0x80] %v839
          %v841 = vld [vmem:[#allocation2 + $0xf0] sm:$0x80]
          %v842 = vsel %vm795, 0, %v841
          %843 = vst [vmem:[#allocation2 + $0xf0] sm:$0x80] %v842
          %v844 = vld [vmem:[#allocation2 + $0x100] sm:$0x80]
          %v845 = vsel %vm795, 0, %v844
          %846 = vst [vmem:[#allocation2 + $0x100] sm:$0x80] %v845
          %v847 = vld [vmem:[#allocation2 + $0x110] sm:$0x80]
          %v848 = vsel %vm795, 0, %v847
          %849 = vst [vmem:[#allocation2 + $0x110] sm:$0x80] %v848
          %v850 = vld [vmem:[#allocation2 + $0x120] sm:$0x80]
          %v851 = vsel %vm795, 0, %v850
          %852 = vst [vmem:[#allocation2 + $0x120] sm:$0x80] %v851
          %v853 = vld [vmem:[#allocation2 + $0x130] sm:$0x80]
          %v854 = vsel %vm795, 0, %v853
          %855 = vst [vmem:[#allocation2 + $0x130] sm:$0x80] %v854
          %v856 = vld [vmem:[#allocation2 + $0x140] sm:$0x80]
          %v857 = vsel %vm795, 0, %v856
          %858 = vst [vmem:[#allocation2 + $0x140] sm:$0x80] %v857
          %v859 = vld [vmem:[#allocation2 + $0x150] sm:$0x80]
          %v860 = vsel %vm795, 0, %v859
          %861 = vst [vmem:[#allocation2 + $0x150] sm:$0x80] %v860
          %v862 = vld [vmem:[#allocation2 + $0x160] sm:$0x80]
          %v863 = vsel %vm795, 0, %v862
          %864 = vst [vmem:[#allocation2 + $0x160] sm:$0x80] %v863
          %v865 = vld [vmem:[#allocation2 + $0x170] sm:$0x80]
          %v866 = vsel %vm795, 0, %v865
          %867 = vst [vmem:[#allocation2 + $0x170] sm:$0x80] %v866
          %v868 = vld [vmem:[#allocation2 + $0x180] sm:$0x80]
          %v869 = vsel %vm795, 0, %v868
          %870 = vst [vmem:[#allocation2 + $0x180] sm:$0x80] %v869
          %v871 = vld [vmem:[#allocation2 + $0x190] sm:$0x80]
          %v872 = vsel %vm795, 0, %v871
          %873 = vst [vmem:[#allocation2 + $0x190] sm:$0x80] %v872
          %v874 = vld [vmem:[#allocation2 + $0x1a0] sm:$0x80]
          %v875 = vsel %vm795, 0, %v874
          %876 = vst [vmem:[#allocation2 + $0x1a0] sm:$0x80] %v875
          %v877 = vld [vmem:[#allocation2 + $0x1b0] sm:$0x80]
          %v878 = vsel %vm795, 0, %v877
          %879 = vst [vmem:[#allocation2 + $0x1b0] sm:$0x80] %v878
          %v880 = vld [vmem:[#allocation2 + $0x1c0] sm:$0x80]
          %v881 = vsel %vm795, 0, %v880
          %882 = vst [vmem:[#allocation2 + $0x1c0] sm:$0x80] %v881
          %v883 = vld [vmem:[#allocation2 + $0x1d0] sm:$0x80]
          %v884 = vsel %vm795, 0, %v883
          %885 = vst [vmem:[#allocation2 + $0x1d0] sm:$0x80] %v884
          %v886 = vld [vmem:[#allocation2 + $0x1e0] sm:$0x80]
          %v887 = vsel %vm795, 0, %v886
          %888 = vst [vmem:[#allocation2 + $0x1e0] sm:$0x80] %v887
          %v889 = vld [vmem:[#allocation2 + $0x1f0] sm:$0x80]
          %v890 = vsel %vm795, 0, %v889
          %891 = vst [vmem:[#allocation2 + $0x1f0] sm:$0x80] %v890
          %s892 = scalar_lea.vmem [#allocation2], 240
          %vm893 = vcmask 917248
          %894 = vst.msk [vmem:[%s892] sm:$0xff] %vm893, 0
          %895 = vst.msk [vmem:[%s892 + $0x100] sm:$0xff] %vm893, 0
          %vm896 = vcmask 910080
          %vm897 = vmand %vm896, %vm493
          %v898 = vld [vmem:[#allocation2] sm:$0x1]
          %v899 = vsel %vm897, 0, %v898
          %900 = vst [vmem:[#allocation2] sm:$0x1] %v899
          %v901 = vld [vmem:[#allocation2 + $0x10] sm:$0x1]
          %v902 = vsel %vm897, 0, %v901
          %903 = vst [vmem:[#allocation2 + $0x10] sm:$0x1] %v902
          %v904 = vld [vmem:[#allocation2 + $0x20] sm:$0x1]
          %v905 = vsel %vm897, 0, %v904
          %906 = vst [vmem:[#allocation2 + $0x20] sm:$0x1] %v905
          %v907 = vld [vmem:[#allocation2 + $0x30] sm:$0x1]
          %v908 = vsel %vm897, 0, %v907
          %909 = vst [vmem:[#allocation2 + $0x30] sm:$0x1] %v908
          %v910 = vld [vmem:[#allocation2 + $0x40] sm:$0x1]
          %v911 = vsel %vm897, 0, %v910
          %912 = vst [vmem:[#allocation2 + $0x40] sm:$0x1] %v911
          %v913 = vld [vmem:[#allocation2 + $0x50] sm:$0x1]
          %v914 = vsel %vm897, 0, %v913
          %915 = vst [vmem:[#allocation2 + $0x50] sm:$0x1] %v914
          %v916 = vld [vmem:[#allocation2 + $0x60] sm:$0x1]
          %v917 = vsel %vm897, 0, %v916
          %918 = vst [vmem:[#allocation2 + $0x60] sm:$0x1] %v917
          %v919 = vld [vmem:[#allocation2 + $0x70] sm:$0x1]
          %v920 = vsel %vm897, 0, %v919
          %921 = vst [vmem:[#allocation2 + $0x70] sm:$0x1] %v920
          %v922 = vld [vmem:[#allocation2 + $0x80] sm:$0x1]
          %v923 = vsel %vm897, 0, %v922
          %924 = vst [vmem:[#allocation2 + $0x80] sm:$0x1] %v923
          %v925 = vld [vmem:[#allocation2 + $0x90] sm:$0x1]
          %v926 = vsel %vm897, 0, %v925
          %927 = vst [vmem:[#allocation2 + $0x90] sm:$0x1] %v926
          %v928 = vld [vmem:[#allocation2 + $0xa0] sm:$0x1]
          %v929 = vsel %vm897, 0, %v928
          %930 = vst [vmem:[#allocation2 + $0xa0] sm:$0x1] %v929
          %v931 = vld [vmem:[#allocation2 + $0xb0] sm:$0x1]
          %v932 = vsel %vm897, 0, %v931
          %933 = vst [vmem:[#allocation2 + $0xb0] sm:$0x1] %v932
          %v934 = vld [vmem:[#allocation2 + $0xc0] sm:$0x1]
          %v935 = vsel %vm897, 0, %v934
          %936 = vst [vmem:[#allocation2 + $0xc0] sm:$0x1] %v935
          %v937 = vld [vmem:[#allocation2 + $0xd0] sm:$0x1]
          %v938 = vsel %vm897, 0, %v937
          %939 = vst [vmem:[#allocation2 + $0xd0] sm:$0x1] %v938
          %v940 = vld [vmem:[#allocation2 + $0xe0] sm:$0x1]
          %v941 = vsel %vm897, 0, %v940
          %942 = vst [vmem:[#allocation2 + $0xe0] sm:$0x1] %v941
          %v943 = vld [vmem:[#allocation2 + $0xf0] sm:$0x1]
          %v944 = vsel %vm897, 0, %v943
          %945 = vst [vmem:[#allocation2 + $0xf0] sm:$0x1] %v944
          %v946 = vld [vmem:[#allocation2 + $0x100] sm:$0x1]
          %v947 = vsel %vm897, 0, %v946
          %948 = vst [vmem:[#allocation2 + $0x100] sm:$0x1] %v947
          %v949 = vld [vmem:[#allocation2 + $0x110] sm:$0x1]
          %v950 = vsel %vm897, 0, %v949
          %951 = vst [vmem:[#allocation2 + $0x110] sm:$0x1] %v950
          %v952 = vld [vmem:[#allocation2 + $0x120] sm:$0x1]
          %v953 = vsel %vm897, 0, %v952
          %954 = vst [vmem:[#allocation2 + $0x120] sm:$0x1] %v953
          %v955 = vld [vmem:[#allocation2 + $0x130] sm:$0x1]
          %v956 = vsel %vm897, 0, %v955
          %957 = vst [vmem:[#allocation2 + $0x130] sm:$0x1] %v956
          %v958 = vld [vmem:[#allocation2 + $0x140] sm:$0x1]
          %v959 = vsel %vm897, 0, %v958
          %960 = vst [vmem:[#allocation2 + $0x140] sm:$0x1] %v959
          %v961 = vld [vmem:[#allocation2 + $0x150] sm:$0x1]
          %v962 = vsel %vm897, 0, %v961
          %963 = vst [vmem:[#allocation2 + $0x150] sm:$0x1] %v962
          %v964 = vld [vmem:[#allocation2 + $0x160] sm:$0x1]
          %v965 = vsel %vm897, 0, %v964
          %966 = vst [vmem:[#allocation2 + $0x160] sm:$0x1] %v965
          %v967 = vld [vmem:[#allocation2 + $0x170] sm:$0x1]
          %v968 = vsel %vm897, 0, %v967
          %969 = vst [vmem:[#allocation2 + $0x170] sm:$0x1] %v968
          %v970 = vld [vmem:[#allocation2 + $0x180] sm:$0x1]
          %v971 = vsel %vm897, 0, %v970
          %972 = vst [vmem:[#allocation2 + $0x180] sm:$0x1] %v971
          %v973 = vld [vmem:[#allocation2 + $0x190] sm:$0x1]
          %v974 = vsel %vm897, 0, %v973
          %975 = vst [vmem:[#allocation2 + $0x190] sm:$0x1] %v974
          %v976 = vld [vmem:[#allocation2 + $0x1a0] sm:$0x1]
          %v977 = vsel %vm897, 0, %v976
          %978 = vst [vmem:[#allocation2 + $0x1a0] sm:$0x1] %v977
          %v979 = vld [vmem:[#allocation2 + $0x1b0] sm:$0x1]
          %v980 = vsel %vm897, 0, %v979
          %981 = vst [vmem:[#allocation2 + $0x1b0] sm:$0x1] %v980
          %v982 = vld [vmem:[#allocation2 + $0x1c0] sm:$0x1]
          %v983 = vsel %vm897, 0, %v982
          %984 = vst [vmem:[#allocation2 + $0x1c0] sm:$0x1] %v983
          %v985 = vld [vmem:[#allocation2 + $0x1d0] sm:$0x1]
          %v986 = vsel %vm897, 0, %v985
          %987 = vst [vmem:[#allocation2 + $0x1d0] sm:$0x1] %v986
          %v988 = vld [vmem:[#allocation2 + $0x1e0] sm:$0x1]
          %v989 = vsel %vm897, 0, %v988
          %990 = vst [vmem:[#allocation2 + $0x1e0] sm:$0x1] %v989
          %v991 = vld [vmem:[#allocation2 + $0x1f0] sm:$0x1]
          %v992 = vsel %vm897, 0, %v991
          %993 = vst [vmem:[#allocation2 + $0x1f0] sm:$0x1] %v992
          %vm994 = vcmask 1048448
          %995 = vst.msk [vmem:[%s892] sm:$0xff] %vm994, 0
          %996 = vst.msk [vmem:[%s892 + $0x100] sm:$0xff] %vm994, 0
          %997 = vst.msk [vmem:[%s892 + $0x8] sm:$0xff] %vm425, 0
          %998 = vst.msk [vmem:[%s892 + $0x108] sm:$0xff] %vm425, 0
          %vm999 = vcmask 130055
          %vm1000 = vmand %vm999, %vm598
          %v1001 = vld [vmem:[#allocation2 + $0x8] sm:$0x80]
          %v1002 = vsel %vm1000, 0, %v1001
          %1003 = vst [vmem:[#allocation2 + $0x8] sm:$0x80] %v1002
          %v1004 = vld [vmem:[#allocation2 + $0x18] sm:$0x80]
          %v1005 = vsel %vm1000, 0, %v1004
          %1006 = vst [vmem:[#allocation2 + $0x18] sm:$0x80] %v1005
          %v1007 = vld [vmem:[#allocation2 + $0x28] sm:$0x80]
          %v1008 = vsel %vm1000, 0, %v1007
          %1009 = vst [vmem:[#allocation2 + $0x28] sm:$0x80] %v1008
          %v1010 = vld [vmem:[#allocation2 + $0x38] sm:$0x80]
          %v1011 = vsel %vm1000, 0, %v1010
          %1012 = vst [vmem:[#allocation2 + $0x38] sm:$0x80] %v1011
          %v1013 = vld [vmem:[#allocation2 + $0x48] sm:$0x80]
          %v1014 = vsel %vm1000, 0, %v1013
          %1015 = vst [vmem:[#allocation2 + $0x48] sm:$0x80] %v1014
          %v1016 = vld [vmem:[#allocation2 + $0x58] sm:$0x80]
          %v1017 = vsel %vm1000, 0, %v1016
          %1018 = vst [vmem:[#allocation2 + $0x58] sm:$0x80] %v1017
          %v1019 = vld [vmem:[#allocation2 + $0x68] sm:$0x80]
          %v1020 = vsel %vm1000, 0, %v1019
          %1021 = vst [vmem:[#allocation2 + $0x68] sm:$0x80] %v1020
          %v1022 = vld [vmem:[#allocation2 + $0x78] sm:$0x80]
          %v1023 = vsel %vm1000, 0, %v1022
          %1024 = vst [vmem:[#allocation2 + $0x78] sm:$0x80] %v1023
          %v1025 = vld [vmem:[#allocation2 + $0x88] sm:$0x80]
          %v1026 = vsel %vm1000, 0, %v1025
          %1027 = vst [vmem:[#allocation2 + $0x88] sm:$0x80] %v1026
          %v1028 = vld [vmem:[#allocation2 + $0x98] sm:$0x80]
          %v1029 = vsel %vm1000, 0, %v1028
          %1030 = vst [vmem:[#allocation2 + $0x98] sm:$0x80] %v1029
          %v1031 = vld [vmem:[#allocation2 + $0xa8] sm:$0x80]
          %v1032 = vsel %vm1000, 0, %v1031
          %1033 = vst [vmem:[#allocation2 + $0xa8] sm:$0x80] %v1032
          %v1034 = vld [vmem:[#allocation2 + $0xb8] sm:$0x80]
          %v1035 = vsel %vm1000, 0, %v1034
          %1036 = vst [vmem:[#allocation2 + $0xb8] sm:$0x80] %v1035
          %v1037 = vld [vmem:[#allocation2 + $0xc8] sm:$0x80]
          %v1038 = vsel %vm1000, 0, %v1037
          %1039 = vst [vmem:[#allocation2 + $0xc8] sm:$0x80] %v1038
          %v1040 = vld [vmem:[#allocation2 + $0xd8] sm:$0x80]
          %v1041 = vsel %vm1000, 0, %v1040
          %1042 = vst [vmem:[#allocation2 + $0xd8] sm:$0x80] %v1041
          %v1043 = vld [vmem:[#allocation2 + $0xe8] sm:$0x80]
          %v1044 = vsel %vm1000, 0, %v1043
          %1045 = vst [vmem:[#allocation2 + $0xe8] sm:$0x80] %v1044
          %v1046 = vld [vmem:[#allocation2 + $0xf8] sm:$0x80]
          %v1047 = vsel %vm1000, 0, %v1046
          %1048 = vst [vmem:[#allocation2 + $0xf8] sm:$0x80] %v1047
          %v1049 = vld [vmem:[#allocation2 + $0x108] sm:$0x80]
          %v1050 = vsel %vm1000, 0, %v1049
          %1051 = vst [vmem:[#allocation2 + $0x108] sm:$0x80] %v1050
          %v1052 = vld [vmem:[#allocation2 + $0x118] sm:$0x80]
          %v1053 = vsel %vm1000, 0, %v1052
          %1054 = vst [vmem:[#allocation2 + $0x118] sm:$0x80] %v1053
          %v1055 = vld [vmem:[#allocation2 + $0x128] sm:$0x80]
          %v1056 = vsel %vm1000, 0, %v1055
          %1057 = vst [vmem:[#allocation2 + $0x128] sm:$0x80] %v1056
          %v1058 = vld [vmem:[#allocation2 + $0x138] sm:$0x80]
          %v1059 = vsel %vm1000, 0, %v1058
          %1060 = vst [vmem:[#allocation2 + $0x138] sm:$0x80] %v1059
          %v1061 = vld [vmem:[#allocation2 + $0x148] sm:$0x80]
          %v1062 = vsel %vm1000, 0, %v1061
          %1063 = vst [vmem:[#allocation2 + $0x148] sm:$0x80] %v1062
          %v1064 = vld [vmem:[#allocation2 + $0x158] sm:$0x80]
          %v1065 = vsel %vm1000, 0, %v1064
          %1066 = vst [vmem:[#allocation2 + $0x158] sm:$0x80] %v1065
          %v1067 = vld [vmem:[#allocation2 + $0x168] sm:$0x80]
          %v1068 = vsel %vm1000, 0, %v1067
          %1069 = vst [vmem:[#allocation2 + $0x168] sm:$0x80] %v1068
          %v1070 = vld [vmem:[#allocation2 + $0x178] sm:$0x80]
          %v1071 = vsel %vm1000, 0, %v1070
          %1072 = vst [vmem:[#allocation2 + $0x178] sm:$0x80] %v1071
          %v1073 = vld [vmem:[#allocation2 + $0x188] sm:$0x80]
          %v1074 = vsel %vm1000, 0, %v1073
          %1075 = vst [vmem:[#allocation2 + $0x188] sm:$0x80] %v1074
          %v1076 = vld [vmem:[#allocation2 + $0x198] sm:$0x80]
          %v1077 = vsel %vm1000, 0, %v1076
          %1078 = vst [vmem:[#allocation2 + $0x198] sm:$0x80] %v1077
          %v1079 = vld [vmem:[#allocation2 + $0x1a8] sm:$0x80]
          %v1080 = vsel %vm1000, 0, %v1079
          %1081 = vst [vmem:[#allocation2 + $0x1a8] sm:$0x80] %v1080
          %v1082 = vld [vmem:[#allocation2 + $0x1b8] sm:$0x80]
          %v1083 = vsel %vm1000, 0, %v1082
          %1084 = vst [vmem:[#allocation2 + $0x1b8] sm:$0x80] %v1083
          %v1085 = vld [vmem:[#allocation2 + $0x1c8] sm:$0x80]
          %v1086 = vsel %vm1000, 0, %v1085
          %1087 = vst [vmem:[#allocation2 + $0x1c8] sm:$0x80] %v1086
          %v1088 = vld [vmem:[#allocation2 + $0x1d8] sm:$0x80]
          %v1089 = vsel %vm1000, 0, %v1088
          %1090 = vst [vmem:[#allocation2 + $0x1d8] sm:$0x80] %v1089
          %v1091 = vld [vmem:[#allocation2 + $0x1e8] sm:$0x80]
          %v1092 = vsel %vm1000, 0, %v1091
          %1093 = vst [vmem:[#allocation2 + $0x1e8] sm:$0x80] %v1092
          %v1094 = vld [vmem:[#allocation2 + $0x1f8] sm:$0x80]
          %v1095 = vsel %vm1000, 0, %v1094
          %1096 = vst [vmem:[#allocation2 + $0x1f8] sm:$0x80] %v1095
        $region56: #{dense_block_add_pallas.1} parent=47 // pred_fallthru
          _
        %v1097 = vld [vmem:[#allocation6] sm:$0xff]
        %v1098 = vld [vmem:[#allocation6 + $0x8] sm:$0xff]
        %v1099 = vld [vmem:[#allocation6 + $0x10] sm:$0xff]
        %v1100 = vld [vmem:[#allocation6 + $0x18] sm:$0xff]
        %v1101 = vld [vmem:[#allocation6 + $0x20] sm:$0xff]
        %v1102 = vld [vmem:[#allocation6 + $0x28] sm:$0xff]
        %v1103 = vld [vmem:[#allocation6 + $0x30] sm:$0xff]
        %v1104 = vld [vmem:[#allocation6 + $0x38] sm:$0xff]
        %v1105 = vld [vmem:[#allocation6 + $0x40] sm:$0xff]
        %v1106 = vld [vmem:[#allocation6 + $0x48] sm:$0xff]
        %v1107 = vld [vmem:[#allocation6 + $0x50] sm:$0xff]
        %v1108 = vld [vmem:[#allocation6 + $0x58] sm:$0xff]
        %v1109 = vld [vmem:[#allocation6 + $0x60] sm:$0xff]
        %v1110 = vld [vmem:[#allocation6 + $0x68] sm:$0xff]
        %v1111 = vld [vmem:[#allocation6 + $0x70] sm:$0xff]
        %v1112 = vld [vmem:[#allocation6 + $0x78] sm:$0xff]
        %v1113 = vld [vmem:[#allocation6 + $0x80] sm:$0xff]
        %v1114 = vld [vmem:[#allocation6 + $0x88] sm:$0xff]
        %v1115 = vld [vmem:[#allocation6 + $0x90] sm:$0xff]
        %v1116 = vld [vmem:[#allocation6 + $0x98] sm:$0xff]
        %v1117 = vld [vmem:[#allocation6 + $0xa0] sm:$0xff]
        %v1118 = vld [vmem:[#allocation6 + $0xa8] sm:$0xff]
        %v1119 = vld [vmem:[#allocation6 + $0xb0] sm:$0xff]
        %v1120 = vld [vmem:[#allocation6 + $0xb8] sm:$0xff]
        %v1121 = vld [vmem:[#allocation6 + $0xc0] sm:$0xff]
        %v1122 = vld [vmem:[#allocation6 + $0xc8] sm:$0xff]
        %v1123 = vld [vmem:[#allocation6 + $0xd0] sm:$0xff]
        %v1124 = vld [vmem:[#allocation6 + $0xd8] sm:$0xff]
        %v1125 = vld [vmem:[#allocation6 + $0xe0] sm:$0xff]
        %v1126 = vld [vmem:[#allocation6 + $0xe8] sm:$0xff]
        %v1127 = vld [vmem:[#allocation6 + $0xf0] sm:$0xff]
        %v1128 = vld [vmem:[#allocation6 + $0xf8] sm:$0xff]
        %v1129 = vld [vmem:[#allocation6 + $0x100] sm:$0xff]
        %v1130 = vld [vmem:[#allocation6 + $0x108] sm:$0xff]
        %v1131 = vld [vmem:[#allocation6 + $0x110] sm:$0xff]
        %v1132 = vld [vmem:[#allocation6 + $0x118] sm:$0xff]
        %v1133 = vld [vmem:[#allocation6 + $0x120] sm:$0xff]
        %v1134 = vld [vmem:[#allocation6 + $0x128] sm:$0xff]
        %v1135 = vld [vmem:[#allocation6 + $0x130] sm:$0xff]
        %v1136 = vld [vmem:[#allocation6 + $0x138] sm:$0xff]
        %v1137 = vld [vmem:[#allocation6 + $0x140] sm:$0xff]
        %v1138 = vld [vmem:[#allocation6 + $0x148] sm:$0xff]
        %v1139 = vld [vmem:[#allocation6 + $0x150] sm:$0xff]
        %v1140 = vld [vmem:[#allocation6 + $0x158] sm:$0xff]
        %v1141 = vld [vmem:[#allocation6 + $0x160] sm:$0xff]
        %v1142 = vld [vmem:[#allocation6 + $0x168] sm:$0xff]
        %v1143 = vld [vmem:[#allocation6 + $0x170] sm:$0xff]
        %v1144 = vld [vmem:[#allocation6 + $0x178] sm:$0xff]
        %v1145 = vld [vmem:[#allocation6 + $0x180] sm:$0xff]
        %v1146 = vld [vmem:[#allocation6 + $0x188] sm:$0xff]
        %v1147 = vld [vmem:[#allocation6 + $0x190] sm:$0xff]
        %v1148 = vld [vmem:[#allocation6 + $0x198] sm:$0xff]
        %v1149 = vld [vmem:[#allocation6 + $0x1a0] sm:$0xff]
        %v1150 = vld [vmem:[#allocation6 + $0x1a8] sm:$0xff]
        %v1151 = vld [vmem:[#allocation6 + $0x1b0] sm:$0xff]
        %v1152 = vld [vmem:[#allocation6 + $0x1b8] sm:$0xff]
        %v1153 = vld [vmem:[#allocation6 + $0x1c0] sm:$0xff]
        %v1154 = vld [vmem:[#allocation6 + $0x1c8] sm:$0xff]
        %v1155 = vld [vmem:[#allocation6 + $0x1d0] sm:$0xff]
        %v1156 = vld [vmem:[#allocation6 + $0x1d8] sm:$0xff]
        %v1157 = vld [vmem:[#allocation6 + $0x1e0] sm:$0xff]
        %v1158 = vld [vmem:[#allocation6 + $0x1e8] sm:$0xff]
        %v1159 = vld [vmem:[#allocation6 + $0x1f0] sm:$0xff]
        %v1160 = vld [vmem:[#allocation6 + $0x1f8] sm:$0xff]
        %vm1161 = vcmask 130048
        %v1162 = vsel %vm1161, %v1097, 0.0
        %v1163 = vsel %vm1161, %v1098, 0.0
        %v1164 = vadd.f32 %v1162, %v1163
        %v1165 = vsel %vm1161, %v1099, 0.0
        %v1166 = vadd.f32 %v1164, %v1165
        %v1167 = vsel %vm1161, %v1100, 0.0
        %v1168 = vadd.f32 %v1166, %v1167
        %v1169 = vsel %vm1161, %v1101, 0.0
        %v1170 = vadd.f32 %v1168, %v1169
        %v1171 = vsel %vm1161, %v1102, 0.0
        %v1172 = vadd.f32 %v1170, %v1171
        %v1173 = vsel %vm1161, %v1103, 0.0
        %v1174 = vadd.f32 %v1172, %v1173
        %v1175 = vsel %vm1161, %v1104, 0.0
        %v1176 = vadd.f32 %v1174, %v1175
        %v1177 = vsel %vm1161, %v1105, 0.0
        %v1178 = vadd.f32 %v1176, %v1177
        %v1179 = vsel %vm1161, %v1106, 0.0
        %v1180 = vadd.f32 %v1178, %v1179
        %v1181 = vsel %vm1161, %v1107, 0.0
        %v1182 = vadd.f32 %v1180, %v1181
        %v1183 = vsel %vm1161, %v1108, 0.0
        %v1184 = vadd.f32 %v1182, %v1183
        %v1185 = vsel %vm1161, %v1109, 0.0
        %v1186 = vadd.f32 %v1184, %v1185
        %v1187 = vsel %vm1161, %v1110, 0.0
        %v1188 = vadd.f32 %v1186, %v1187
        %v1189 = vsel %vm1161, %v1111, 0.0
        %v1190 = vadd.f32 %v1188, %v1189
        %v1191 = vsel %vm1161, %v1112, 0.0
        %v1192 = vadd.f32 %v1190, %v1191
        %v1193 = vsel %vm1161, %v1113, 0.0
        %v1194 = vadd.f32 %v1192, %v1193
        %v1195 = vsel %vm1161, %v1114, 0.0
        %v1196 = vadd.f32 %v1194, %v1195
        %v1197 = vsel %vm1161, %v1115, 0.0
        %v1198 = vadd.f32 %v1196, %v1197
        %v1199 = vsel %vm1161, %v1116, 0.0
        %v1200 = vadd.f32 %v1198, %v1199
        %v1201 = vsel %vm1161, %v1117, 0.0
        %v1202 = vadd.f32 %v1200, %v1201
        %v1203 = vsel %vm1161, %v1118, 0.0
        %v1204 = vadd.f32 %v1202, %v1203
        %v1205 = vsel %vm1161, %v1119, 0.0
        %v1206 = vadd.f32 %v1204, %v1205
        %v1207 = vsel %vm1161, %v1120, 0.0
        %v1208 = vadd.f32 %v1206, %v1207
        %v1209 = vsel %vm1161, %v1121, 0.0
        %v1210 = vadd.f32 %v1208, %v1209
        %v1211 = vsel %vm1161, %v1122, 0.0
        %v1212 = vadd.f32 %v1210, %v1211
        %v1213 = vsel %vm1161, %v1123, 0.0
        %v1214 = vadd.f32 %v1212, %v1213
        %v1215 = vsel %vm1161, %v1124, 0.0
        %v1216 = vadd.f32 %v1214, %v1215
        %v1217 = vsel %vm1161, %v1125, 0.0
        %v1218 = vadd.f32 %v1216, %v1217
        %v1219 = vsel %vm1161, %v1126, 0.0
        %v1220 = vadd.f32 %v1218, %v1219
        %v1221 = vsel %vm1161, %v1127, 0.0
        %v1222 = vadd.f32 %v1220, %v1221
        %v1223 = vsel %vm1161, %v1128, 0.0
        %v1224 = vadd.f32 %v1222, %v1223
        %v1225 = vsel %vm1161, %v1129, 0.0
        %v1226 = vadd.f32 %v1224, %v1225
        %v1227 = vsel %vm1161, %v1130, 0.0
        %v1228 = vadd.f32 %v1226, %v1227
        %v1229 = vsel %vm1161, %v1131, 0.0
        %v1230 = vadd.f32 %v1228, %v1229
        %v1231 = vsel %vm1161, %v1132, 0.0
        %v1232 = vadd.f32 %v1230, %v1231
        %v1233 = vsel %vm1161, %v1133, 0.0
        %v1234 = vadd.f32 %v1232, %v1233
        %v1235 = vsel %vm1161, %v1134, 0.0
        %v1236 = vadd.f32 %v1234, %v1235
        %v1237 = vsel %vm1161, %v1135, 0.0
        %v1238 = vadd.f32 %v1236, %v1237
        %v1239 = vsel %vm1161, %v1136, 0.0
        %v1240 = vadd.f32 %v1238, %v1239
        %v1241 = vsel %vm1161, %v1137, 0.0
        %v1242 = vadd.f32 %v1240, %v1241
        %v1243 = vsel %vm1161, %v1138, 0.0
        %v1244 = vadd.f32 %v1242, %v1243
        %v1245 = vsel %vm1161, %v1139, 0.0
        %v1246 = vadd.f32 %v1244, %v1245
        %v1247 = vsel %vm1161, %v1140, 0.0
        %v1248 = vadd.f32 %v1246, %v1247
        %v1249 = vsel %vm1161, %v1141, 0.0
        %v1250 = vadd.f32 %v1248, %v1249
        %v1251 = vsel %vm1161, %v1142, 0.0
        %v1252 = vadd.f32 %v1250, %v1251
        %v1253 = vsel %vm1161, %v1143, 0.0
        %v1254 = vadd.f32 %v1252, %v1253
        %v1255 = vsel %vm1161, %v1144, 0.0
        %v1256 = vadd.f32 %v1254, %v1255
        %v1257 = vsel %vm1161, %v1145, 0.0
        %v1258 = vadd.f32 %v1256, %v1257
        %v1259 = vsel %vm1161, %v1146, 0.0
        %v1260 = vadd.f32 %v1258, %v1259
        %v1261 = vsel %vm1161, %v1147, 0.0
        %v1262 = vadd.f32 %v1260, %v1261
        %v1263 = vsel %vm1161, %v1148, 0.0
        %v1264 = vadd.f32 %v1262, %v1263
        %v1265 = vsel %vm1161, %v1149, 0.0
        %v1266 = vadd.f32 %v1264, %v1265
        %v1267 = vsel %vm1161, %v1150, 0.0
        %v1268 = vadd.f32 %v1266, %v1267
        %v1269 = vsel %vm1161, %v1151, 0.0
        %v1270 = vadd.f32 %v1268, %v1269
        %v1271 = vsel %vm1161, %v1152, 0.0
        %v1272 = vadd.f32 %v1270, %v1271
        %v1273 = vsel %vm1161, %v1153, 0.0
        %v1274 = vadd.f32 %v1272, %v1273
        %v1275 = vsel %vm1161, %v1154, 0.0
        %v1276 = vadd.f32 %v1274, %v1275
        %v1277 = vsel %vm1161, %v1155, 0.0
        %v1278 = vadd.f32 %v1276, %v1277
        %v1279 = vsel %vm1161, %v1156, 0.0
        %v1280 = vadd.f32 %v1278, %v1279
        %v1281 = vsel %vm1161, %v1157, 0.0
        %v1282 = vadd.f32 %v1280, %v1281
        %v1283 = vsel %vm1161, %v1158, 0.0
        %v1284 = vadd.f32 %v1282, %v1283
        %v1285 = vsel %vm1161, %v1159, 0.0
        %v1286 = vadd.f32 %v1284, %v1285
        %v1287 = vsel %vm1161, %v1160, 0.0
        %v1288 = vadd.f32 %v1286, %v1287
        %v1289 = vrot.slane %v1288, 4
        %v1290 = vadd.f32 %v1288, %v1289
        %v1291 = vrot.slane %v1290, 2
        %v1292 = vadd.f32 %v1290, %v1291
        %v1293 = vrot.slane %v1292, 1
        %v1294 = vadd.f32 %v1292, %v1293
        %v1295 = vmul.f32 %v1294, 0.001953125
        %v1296 = vsub.f32 %v1097, %v1295
        %v1297 = vsub.f32 %v1098, %v1295
        %v1298 = vsub.f32 %v1099, %v1295
        %v1299 = vsub.f32 %v1100, %v1295
        %v1300 = vsub.f32 %v1101, %v1295
        %v1301 = vsub.f32 %v1102, %v1295
        %v1302 = vsub.f32 %v1103, %v1295
        %v1303 = vsub.f32 %v1104, %v1295
        %v1304 = vsub.f32 %v1105, %v1295
        %v1305 = vsub.f32 %v1106, %v1295
        %v1306 = vsub.f32 %v1107, %v1295
        %v1307 = vsub.f32 %v1108, %v1295
        %v1308 = vsub.f32 %v1109, %v1295
        %v1309 = vsub.f32 %v1110, %v1295
        %v1310 = vsub.f32 %v1111, %v1295
        %v1311 = vsub.f32 %v1112, %v1295
        %v1312 = vsub.f32 %v1113, %v1295
        %v1313 = vsub.f32 %v1114, %v1295
        %v1314 = vsub.f32 %v1115, %v1295
        %v1315 = vsub.f32 %v1116, %v1295
        %v1316 = vsub.f32 %v1117, %v1295
        %v1317 = vsub.f32 %v1118, %v1295
        %v1318 = vsub.f32 %v1119, %v1295
        %v1319 = vsub.f32 %v1120, %v1295
        %v1320 = vsub.f32 %v1121, %v1295
        %v1321 = vsub.f32 %v1122, %v1295
        %v1322 = vsub.f32 %v1123, %v1295
        %v1323 = vsub.f32 %v1124, %v1295
        %v1324 = vsub.f32 %v1125, %v1295
        %v1325 = vsub.f32 %v1126, %v1295
        %v1326 = vsub.f32 %v1127, %v1295
        %v1327 = vsub.f32 %v1128, %v1295
        %v1328 = vsub.f32 %v1129, %v1295
        %v1329 = vsub.f32 %v1130, %v1295
        %v1330 = vsub.f32 %v1131, %v1295
        %v1331 = vsub.f32 %v1132, %v1295
        %v1332 = vsub.f32 %v1133, %v1295
        %v1333 = vsub.f32 %v1134, %v1295
        %v1334 = vsub.f32 %v1135, %v1295
        %v1335 = vsub.f32 %v1136, %v1295
        %v1336 = vsub.f32 %v1137, %v1295
        %v1337 = vsub.f32 %v1138, %v1295
        %v1338 = vsub.f32 %v1139, %v1295
        %v1339 = vsub.f32 %v1140, %v1295
        %v1340 = vsub.f32 %v1141, %v1295
        %v1341 = vsub.f32 %v1142, %v1295
        %v1342 = vsub.f32 %v1143, %v1295
        %v1343 = vsub.f32 %v1144, %v1295
        %v1344 = vsub.f32 %v1145, %v1295
        %v1345 = vsub.f32 %v1146, %v1295
        %v1346 = vsub.f32 %v1147, %v1295
        %v1347 = vsub.f32 %v1148, %v1295
        %v1348 = vsub.f32 %v1149, %v1295
        %v1349 = vsub.f32 %v1150, %v1295
        %v1350 = vsub.f32 %v1151, %v1295
        %v1351 = vsub.f32 %v1152, %v1295
        %v1352 = vsub.f32 %v1153, %v1295
        %v1353 = vsub.f32 %v1154, %v1295
        %v1354 = vsub.f32 %v1155, %v1295
        %v1355 = vsub.f32 %v1156, %v1295
        %v1356 = vsub.f32 %v1157, %v1295
        %v1357 = vsub.f32 %v1158, %v1295
        %v1358 = vsub.f32 %v1159, %v1295
        %v1359 = vsub.f32 %v1160, %v1295
        %v1360 = vmul.f32 %v1296, %v1296
        %v1361 = vmul.f32 %v1297, %v1297
        %v1362 = vmul.f32 %v1298, %v1298
        %v1363 = vmul.f32 %v1299, %v1299
        %v1364 = vmul.f32 %v1300, %v1300
        %v1365 = vmul.f32 %v1301, %v1301
        %v1366 = vmul.f32 %v1302, %v1302
        %v1367 = vmul.f32 %v1303, %v1303
        %v1368 = vmul.f32 %v1304, %v1304
        %v1369 = vmul.f32 %v1305, %v1305
        %v1370 = vmul.f32 %v1306, %v1306
        %v1371 = vmul.f32 %v1307, %v1307
        %v1372 = vmul.f32 %v1308, %v1308
        %v1373 = vmul.f32 %v1309, %v1309
        %v1374 = vmul.f32 %v1310, %v1310
        %v1375 = vmul.f32 %v1311, %v1311
        %v1376 = vmul.f32 %v1312, %v1312
        %v1377 = vmul.f32 %v1313, %v1313
        %v1378 = vmul.f32 %v1314, %v1314
        %v1379 = vmul.f32 %v1315, %v1315
        %v1380 = vmul.f32 %v1316, %v1316
        %v1381 = vmul.f32 %v1317, %v1317
        %v1382 = vmul.f32 %v1318, %v1318
        %v1383 = vmul.f32 %v1319, %v1319
        %v1384 = vmul.f32 %v1320, %v1320
        %v1385 = vmul.f32 %v1321, %v1321
        %v1386 = vmul.f32 %v1322, %v1322
        %v1387 = vmul.f32 %v1323, %v1323
        %v1388 = vmul.f32 %v1324, %v1324
        %v1389 = vmul.f32 %v1325, %v1325
        %v1390 = vmul.f32 %v1326, %v1326
        %v1391 = vmul.f32 %v1327, %v1327
        %v1392 = vmul.f32 %v1328, %v1328
        %v1393 = vmul.f32 %v1329, %v1329
        %v1394 = vmul.f32 %v1330, %v1330
        %v1395 = vmul.f32 %v1331, %v1331
        %v1396 = vmul.f32 %v1332, %v1332
        %v1397 = vmul.f32 %v1333, %v1333
        %v1398 = vmul.f32 %v1334, %v1334
        %v1399 = vmul.f32 %v1335, %v1335
        %v1400 = vmul.f32 %v1336, %v1336
        %v1401 = vmul.f32 %v1337, %v1337
        %v1402 = vmul.f32 %v1338, %v1338
        %v1403 = vmul.f32 %v1339, %v1339
        %v1404 = vmul.f32 %v1340, %v1340
        %v1405 = vmul.f32 %v1341, %v1341
        %v1406 = vmul.f32 %v1342, %v1342
        %v1407 = vmul.f32 %v1343, %v1343
        %v1408 = vmul.f32 %v1344, %v1344
        %v1409 = vmul.f32 %v1345, %v1345
        %v1410 = vmul.f32 %v1346, %v1346
        %v1411 = vmul.f32 %v1347, %v1347
        %v1412 = vmul.f32 %v1348, %v1348
        %v1413 = vmul.f32 %v1349, %v1349
        %v1414 = vmul.f32 %v1350, %v1350
        %v1415 = vmul.f32 %v1351, %v1351
        %v1416 = vmul.f32 %v1352, %v1352
        %v1417 = vmul.f32 %v1353, %v1353
        %v1418 = vmul.f32 %v1354, %v1354
        %v1419 = vmul.f32 %v1355, %v1355
        %v1420 = vmul.f32 %v1356, %v1356
        %v1421 = vmul.f32 %v1357, %v1357
        %v1422 = vmul.f32 %v1358, %v1358
        %v1423 = vmul.f32 %v1359, %v1359
        %v1424 = vsel %vm1161, %v1360, 0.0
        %v1425 = vsel %vm1161, %v1361, 0.0
        %v1426 = vadd.f32 %v1424, %v1425
        %v1427 = vsel %vm1161, %v1362, 0.0
        %v1428 = vadd.f32 %v1426, %v1427
        %v1429 = vsel %vm1161, %v1363, 0.0
        %v1430 = vadd.f32 %v1428, %v1429
        %v1431 = vsel %vm1161, %v1364, 0.0
        %v1432 = vadd.f32 %v1430, %v1431
        %v1433 = vsel %vm1161, %v1365, 0.0
        %v1434 = vadd.f32 %v1432, %v1433
        %v1435 = vsel %vm1161, %v1366, 0.0
        %v1436 = vadd.f32 %v1434, %v1435
        %v1437 = vsel %vm1161, %v1367, 0.0
        %v1438 = vadd.f32 %v1436, %v1437
        %v1439 = vsel %vm1161, %v1368, 0.0
        %v1440 = vadd.f32 %v1438, %v1439
        %v1441 = vsel %vm1161, %v1369, 0.0
        %v1442 = vadd.f32 %v1440, %v1441
        %v1443 = vsel %vm1161, %v1370, 0.0
        %v1444 = vadd.f32 %v1442, %v1443
        %v1445 = vsel %vm1161, %v1371, 0.0
        %v1446 = vadd.f32 %v1444, %v1445
        %v1447 = vsel %vm1161, %v1372, 0.0
        %v1448 = vadd.f32 %v1446, %v1447
        %v1449 = vsel %vm1161, %v1373, 0.0
        %v1450 = vadd.f32 %v1448, %v1449
        %v1451 = vsel %vm1161, %v1374, 0.0
        %v1452 = vadd.f32 %v1450, %v1451
        %v1453 = vsel %vm1161, %v1375, 0.0
        %v1454 = vadd.f32 %v1452, %v1453
        %v1455 = vsel %vm1161, %v1376, 0.0
        %v1456 = vadd.f32 %v1454, %v1455
        %v1457 = vsel %vm1161, %v1377, 0.0
        %v1458 = vadd.f32 %v1456, %v1457
        %v1459 = vsel %vm1161, %v1378, 0.0
        %v1460 = vadd.f32 %v1458, %v1459
        %v1461 = vsel %vm1161, %v1379, 0.0
        %v1462 = vadd.f32 %v1460, %v1461
        %v1463 = vsel %vm1161, %v1380, 0.0
        %v1464 = vadd.f32 %v1462, %v1463
        %v1465 = vsel %vm1161, %v1381, 0.0
        %v1466 = vadd.f32 %v1464, %v1465
        %v1467 = vsel %vm1161, %v1382, 0.0
        %v1468 = vadd.f32 %v1466, %v1467
        %v1469 = vsel %vm1161, %v1383, 0.0
        %v1470 = vadd.f32 %v1468, %v1469
        %v1471 = vsel %vm1161, %v1384, 0.0
        %v1472 = vadd.f32 %v1470, %v1471
        %v1473 = vsel %vm1161, %v1385, 0.0
        %v1474 = vadd.f32 %v1472, %v1473
        %v1475 = vsel %vm1161, %v1386, 0.0
        %v1476 = vadd.f32 %v1474, %v1475
        %v1477 = vsel %vm1161, %v1387, 0.0
        %v1478 = vadd.f32 %v1476, %v1477
        %v1479 = vsel %vm1161, %v1388, 0.0
        %v1480 = vadd.f32 %v1478, %v1479
        %v1481 = vsel %vm1161, %v1389, 0.0
        %v1482 = vadd.f32 %v1480, %v1481
        %v1483 = vsel %vm1161, %v1390, 0.0
        %v1484 = vadd.f32 %v1482, %v1483
        %v1485 = vsel %vm1161, %v1391, 0.0
        %v1486 = vadd.f32 %v1484, %v1485
        %v1487 = vsel %vm1161, %v1392, 0.0
        %v1488 = vadd.f32 %v1486, %v1487
        %v1489 = vsel %vm1161, %v1393, 0.0
        %v1490 = vadd.f32 %v1488, %v1489
        %v1491 = vsel %vm1161, %v1394, 0.0
        %v1492 = vadd.f32 %v1490, %v1491
        %v1493 = vsel %vm1161, %v1395, 0.0
        %v1494 = vadd.f32 %v1492, %v1493
        %v1495 = vsel %vm1161, %v1396, 0.0
        %v1496 = vadd.f32 %v1494, %v1495
        %v1497 = vsel %vm1161, %v1397, 0.0
        %v1498 = vadd.f32 %v1496, %v1497
        %v1499 = vsel %vm1161, %v1398, 0.0
        %v1500 = vadd.f32 %v1498, %v1499
        %v1501 = vsel %vm1161, %v1399, 0.0
        %v1502 = vadd.f32 %v1500, %v1501
        %v1503 = vsel %vm1161, %v1400, 0.0
        %v1504 = vadd.f32 %v1502, %v1503
        %v1505 = vsel %vm1161, %v1401, 0.0
        %v1506 = vadd.f32 %v1504, %v1505
        %v1507 = vsel %vm1161, %v1402, 0.0
        %v1508 = vadd.f32 %v1506, %v1507
        %v1509 = vsel %vm1161, %v1403, 0.0
        %v1510 = vadd.f32 %v1508, %v1509
        %v1511 = vsel %vm1161, %v1404, 0.0
        %v1512 = vadd.f32 %v1510, %v1511
        %v1513 = vsel %vm1161, %v1405, 0.0
        %v1514 = vadd.f32 %v1512, %v1513
        %v1515 = vsel %vm1161, %v1406, 0.0
        %v1516 = vadd.f32 %v1514, %v1515
        %v1517 = vsel %vm1161, %v1407, 0.0
        %v1518 = vadd.f32 %v1516, %v1517
        %v1519 = vsel %vm1161, %v1408, 0.0
        %v1520 = vadd.f32 %v1518, %v1519
        %v1521 = vsel %vm1161, %v1409, 0.0
        %v1522 = vadd.f32 %v1520, %v1521
        %v1523 = vsel %vm1161, %v1410, 0.0
        %v1524 = vadd.f32 %v1522, %v1523
        %v1525 = vsel %vm1161, %v1411, 0.0
        %v1526 = vadd.f32 %v1524, %v1525
        %v1527 = vsel %vm1161, %v1412, 0.0
        %v1528 = vadd.f32 %v1526, %v1527
        %v1529 = vsel %vm1161, %v1413, 0.0
        %v1530 = vadd.f32 %v1528, %v1529
        %v1531 = vsel %vm1161, %v1414, 0.0
        %v1532 = vadd.f32 %v1530, %v1531
        %v1533 = vsel %vm1161, %v1415, 0.0
        %v1534 = vadd.f32 %v1532, %v1533
        %v1535 = vsel %vm1161, %v1416, 0.0
        %v1536 = vadd.f32 %v1534, %v1535
        %v1537 = vsel %vm1161, %v1417, 0.0
        %v1538 = vadd.f32 %v1536, %v1537
        %v1539 = vsel %vm1161, %v1418, 0.0
        %v1540 = vadd.f32 %v1538, %v1539
        %v1541 = vsel %vm1161, %v1419, 0.0
        %v1542 = vadd.f32 %v1540, %v1541
        %v1543 = vsel %vm1161, %v1420, 0.0
        %v1544 = vadd.f32 %v1542, %v1543
        %v1545 = vsel %vm1161, %v1421, 0.0
        %v1546 = vadd.f32 %v1544, %v1545
        %v1547 = vsel %vm1161, %v1422, 0.0
        %v1548 = vadd.f32 %v1546, %v1547
        %v1549 = vsel %vm1161, %v1423, 0.0
        %v1550 = vadd.f32 %v1548, %v1549
        %v1551 = vrot.slane %v1550, 4
        %v1552 = vadd.f32 %v1550, %v1551
        %v1553 = vrot.slane %v1552, 2
        %v1554 = vadd.f32 %v1552, %v1553
        %v1555 = vrot.slane %v1554, 1
        %v1556 = vadd.f32 %v1554, %v1555
        %v1557 = vmul.f32 %v1556, 0.001953125
        %v1558 = vadd.f32 %v1557, 1e-05
        %v1559 = vrsqrt.pop %v1558
        %v1560 = vld [vmem:[%s336] sm:$0x1]
        %v1561 = vmul.f32 %v1559, %v1560
        %v1562 = vlaneseq
        %v1563 = vshrl.u32 %v1562, 7
        %v1564 = vsub.s32 0, %v1563
        %v1565 = vrot.slane %v1561, %v1564
        %v1566 = vmul.f32 %v1296, %v1565
        %v1567 = vmul.f32 %v1297, %v1565
        %v1568 = vmul.f32 %v1298, %v1565
        %v1569 = vmul.f32 %v1299, %v1565
        %v1570 = vmul.f32 %v1300, %v1565
        %v1571 = vmul.f32 %v1301, %v1565
        %v1572 = vmul.f32 %v1302, %v1565
        %v1573 = vmul.f32 %v1303, %v1565
        %v1574 = vmul.f32 %v1304, %v1565
        %v1575 = vmul.f32 %v1305, %v1565
        %v1576 = vmul.f32 %v1306, %v1565
        %v1577 = vmul.f32 %v1307, %v1565
        %v1578 = vmul.f32 %v1308, %v1565
        %v1579 = vmul.f32 %v1309, %v1565
        %v1580 = vmul.f32 %v1310, %v1565
        %v1581 = vmul.f32 %v1311, %v1565
        %v1582 = vmul.f32 %v1312, %v1565
        %v1583 = vmul.f32 %v1313, %v1565
        %v1584 = vmul.f32 %v1314, %v1565
        %v1585 = vmul.f32 %v1315, %v1565
        %v1586 = vmul.f32 %v1316, %v1565
        %v1587 = vmul.f32 %v1317, %v1565
        %v1588 = vmul.f32 %v1318, %v1565
        %v1589 = vmul.f32 %v1319, %v1565
        %v1590 = vmul.f32 %v1320, %v1565
        %v1591 = vmul.f32 %v1321, %v1565
        %v1592 = vmul.f32 %v1322, %v1565
        %v1593 = vmul.f32 %v1323, %v1565
        %v1594 = vmul.f32 %v1324, %v1565
        %v1595 = vmul.f32 %v1325, %v1565
        %v1596 = vmul.f32 %v1326, %v1565
        %v1597 = vmul.f32 %v1327, %v1565
        %v1598 = vmul.f32 %v1328, %v1565
        %v1599 = vmul.f32 %v1329, %v1565
        %v1600 = vmul.f32 %v1330, %v1565
        %v1601 = vmul.f32 %v1331, %v1565
        %v1602 = vmul.f32 %v1332, %v1565
        %v1603 = vmul.f32 %v1333, %v1565
        %v1604 = vmul.f32 %v1334, %v1565
        %v1605 = vmul.f32 %v1335, %v1565
        %v1606 = vmul.f32 %v1336, %v1565
        %v1607 = vmul.f32 %v1337, %v1565
        %v1608 = vmul.f32 %v1338, %v1565
        %v1609 = vmul.f32 %v1339, %v1565
        %v1610 = vmul.f32 %v1340, %v1565
        %v1611 = vmul.f32 %v1341, %v1565
        %v1612 = vmul.f32 %v1342, %v1565
        %v1613 = vmul.f32 %v1343, %v1565
        %v1614 = vmul.f32 %v1344, %v1565
        %v1615 = vmul.f32 %v1345, %v1565
        %v1616 = vmul.f32 %v1346, %v1565
        %v1617 = vmul.f32 %v1347, %v1565
        %v1618 = vmul.f32 %v1348, %v1565
        %v1619 = vmul.f32 %v1349, %v1565
        %v1620 = vmul.f32 %v1350, %v1565
        %v1621 = vmul.f32 %v1351, %v1565
        %v1622 = vmul.f32 %v1352, %v1565
        %v1623 = vmul.f32 %v1353, %v1565
        %v1624 = vmul.f32 %v1354, %v1565
        %v1625 = vmul.f32 %v1355, %v1565
        %v1626 = vmul.f32 %v1356, %v1565
        %v1627 = vmul.f32 %v1357, %v1565
        %v1628 = vmul.f32 %v1358, %v1565
        %v1629 = vmul.f32 %v1359, %v1565
        %v1630 = vld [vmem:[%s339] sm:$0x1]
        %v1632 = vlaneseq
        %v1633 = vshrl.u32 %v1632, 7
        %v1634 = vsub.s32 0, %v1633
        %v1635 = vrot.slane %v1630, %v1634
        %v1637 = vadd.f32 %v1566, %v1635
        %v1638 = vadd.f32 %v1567, %v1635
        %v1639 = vadd.f32 %v1568, %v1635
        %v1640 = vadd.f32 %v1569, %v1635
        %v1641 = vadd.f32 %v1570, %v1635
        %v1642 = vadd.f32 %v1571, %v1635
        %v1643 = vadd.f32 %v1572, %v1635
        %v1644 = vadd.f32 %v1573, %v1635
        %v1645 = vadd.f32 %v1574, %v1635
        %v1646 = vadd.f32 %v1575, %v1635
        %v1647 = vadd.f32 %v1576, %v1635
        %v1648 = vadd.f32 %v1577, %v1635
        %v1649 = vadd.f32 %v1578, %v1635
        %v1650 = vadd.f32 %v1579, %v1635
        %v1651 = vadd.f32 %v1580, %v1635
        %v1652 = vadd.f32 %v1581, %v1635
        %v1653 = vadd.f32 %v1582, %v1635
        %v1654 = vadd.f32 %v1583, %v1635
        %v1655 = vadd.f32 %v1584, %v1635
        %v1656 = vadd.f32 %v1585, %v1635
        %v1657 = vadd.f32 %v1586, %v1635
        %v1658 = vadd.f32 %v1587, %v1635
        %v1659 = vadd.f32 %v1588, %v1635
        %v1660 = vadd.f32 %v1589, %v1635
        %v1661 = vadd.f32 %v1590, %v1635
        %v1662 = vadd.f32 %v1591, %v1635
        %v1663 = vadd.f32 %v1592, %v1635
        %v1664 = vadd.f32 %v1593, %v1635
        %v1665 = vadd.f32 %v1594, %v1635
        %v1666 = vadd.f32 %v1595, %v1635
        %v1667 = vadd.f32 %v1596, %v1635
        %v1668 = vadd.f32 %v1597, %v1635
        %v1669 = vadd.f32 %v1598, %v1635
        %v1670 = vadd.f32 %v1599, %v1635
        %v1671 = vadd.f32 %v1600, %v1635
        %v1672 = vadd.f32 %v1601, %v1635
        %v1673 = vadd.f32 %v1602, %v1635
        %v1674 = vadd.f32 %v1603, %v1635
        %v1675 = vadd.f32 %v1604, %v1635
        %v1676 = vadd.f32 %v1605, %v1635
        %v1677 = vadd.f32 %v1606, %v1635
        %v1678 = vadd.f32 %v1607, %v1635
        %v1679 = vadd.f32 %v1608, %v1635
        %v1680 = vadd.f32 %v1609, %v1635
        %v1681 = vadd.f32 %v1610, %v1635
        %v1682 = vadd.f32 %v1611, %v1635
        %v1683 = vadd.f32 %v1612, %v1635
        %v1684 = vadd.f32 %v1613, %v1635
        %v1685 = vadd.f32 %v1614, %v1635
        %v1686 = vadd.f32 %v1615, %v1635
        %v1687 = vadd.f32 %v1616, %v1635
        %v1688 = vadd.f32 %v1617, %v1635
        %v1689 = vadd.f32 %v1618, %v1635
        %v1690 = vadd.f32 %v1619, %v1635
        %v1691 = vadd.f32 %v1620, %v1635
        %v1692 = vadd.f32 %v1621, %v1635
        %v1693 = vadd.f32 %v1622, %v1635
        %v1694 = vadd.f32 %v1623, %v1635
        %v1695 = vadd.f32 %v1624, %v1635
        %v1696 = vadd.f32 %v1625, %v1635
        %v1697 = vadd.f32 %v1626, %v1635
        %v1698 = vadd.f32 %v1627, %v1635
        %v1699 = vadd.f32 %v1628, %v1635
        %v1700 = vadd.f32 %v1629, %v1635
        %v1701 = vmax.f32 %v1637, 0.0
        %v1702 = vmax.f32 %v1638, 0.0
        %v1703 = vmax.f32 %v1639, 0.0
        %v1704 = vmax.f32 %v1640, 0.0
        %v1705 = vmax.f32 %v1641, 0.0
        %v1706 = vmax.f32 %v1642, 0.0
        %v1707 = vmax.f32 %v1643, 0.0
        %v1708 = vmax.f32 %v1644, 0.0
        %v1709 = vmax.f32 %v1645, 0.0
        %v1710 = vmax.f32 %v1646, 0.0
        %v1711 = vmax.f32 %v1647, 0.0
        %v1712 = vmax.f32 %v1648, 0.0
        %v1713 = vmax.f32 %v1649, 0.0
        %v1714 = vmax.f32 %v1650, 0.0
        %v1715 = vmax.f32 %v1651, 0.0
        %v1716 = vmax.f32 %v1652, 0.0
        %v1717 = vmax.f32 %v1653, 0.0
        %v1718 = vmax.f32 %v1654, 0.0
        %v1719 = vmax.f32 %v1655, 0.0
        %v1720 = vmax.f32 %v1656, 0.0
        %v1721 = vmax.f32 %v1657, 0.0
        %v1722 = vmax.f32 %v1658, 0.0
        %v1723 = vmax.f32 %v1659, 0.0
        %v1724 = vmax.f32 %v1660, 0.0
        %v1725 = vmax.f32 %v1661, 0.0
        %v1726 = vmax.f32 %v1662, 0.0
        %v1727 = vmax.f32 %v1663, 0.0
        %v1728 = vmax.f32 %v1664, 0.0
        %v1729 = vmax.f32 %v1665, 0.0
        %v1730 = vmax.f32 %v1666, 0.0
        %v1731 = vmax.f32 %v1667, 0.0
        %v1732 = vmax.f32 %v1668, 0.0
        %v1733 = vmax.f32 %v1669, 0.0
        %v1734 = vmax.f32 %v1670, 0.0
        %v1735 = vmax.f32 %v1671, 0.0
        %v1736 = vmax.f32 %v1672, 0.0
        %v1737 = vmax.f32 %v1673, 0.0
        %v1738 = vmax.f32 %v1674, 0.0
        %v1739 = vmax.f32 %v1675, 0.0
        %v1740 = vmax.f32 %v1676, 0.0
        %v1741 = vmax.f32 %v1677, 0.0
        %v1742 = vmax.f32 %v1678, 0.0
        %v1743 = vmax.f32 %v1679, 0.0
        %v1744 = vmax.f32 %v1680, 0.0
        %v1745 = vmax.f32 %v1681, 0.0
        %v1746 = vmax.f32 %v1682, 0.0
        %v1747 = vmax.f32 %v1683, 0.0
        %v1748 = vmax.f32 %v1684, 0.0
        %v1749 = vmax.f32 %v1685, 0.0
        %v1750 = vmax.f32 %v1686, 0.0
        %v1751 = vmax.f32 %v1687, 0.0
        %v1752 = vmax.f32 %v1688, 0.0
        %v1753 = vmax.f32 %v1689, 0.0
        %v1754 = vmax.f32 %v1690, 0.0
        %v1755 = vmax.f32 %v1691, 0.0
        %v1756 = vmax.f32 %v1692, 0.0
        %v1757 = vmax.f32 %v1693, 0.0
        %v1758 = vmax.f32 %v1694, 0.0
        %v1759 = vmax.f32 %v1695, 0.0
        %v1760 = vmax.f32 %v1696, 0.0
        %v1761 = vmax.f32 %v1697, 0.0
        %v1762 = vmax.f32 %v1698, 0.0
        %v1763 = vmax.f32 %v1699, 0.0
        %v1764 = vmax.f32 %v1700, 0.0
        %v1765 = vpack.c.bf16 %v1702, %v1701
        %v1766 = vpack.c.bf16 %v1704, %v1703
        %v1767 = vpack.c.bf16 %v1706, %v1705
        %v1768 = vpack.c.bf16 %v1708, %v1707
        %v1769 = vpack.c.bf16 %v1710, %v1709
        %v1770 = vpack.c.bf16 %v1712, %v1711
        %v1771 = vpack.c.bf16 %v1714, %v1713
        %v1772 = vpack.c.bf16 %v1716, %v1715
        %v1773 = vpack.c.bf16 %v1718, %v1717
        %v1774 = vpack.c.bf16 %v1720, %v1719
        %v1775 = vpack.c.bf16 %v1722, %v1721
        %v1776 = vpack.c.bf16 %v1724, %v1723
        %v1777 = vpack.c.bf16 %v1726, %v1725
        %v1778 = vpack.c.bf16 %v1728, %v1727
        %v1779 = vpack.c.bf16 %v1730, %v1729
        %v1780 = vpack.c.bf16 %v1732, %v1731
        %v1781 = vpack.c.bf16 %v1734, %v1733
        %v1782 = vpack.c.bf16 %v1736, %v1735
        %v1783 = vpack.c.bf16 %v1738, %v1737
        %v1784 = vpack.c.bf16 %v1740, %v1739
        %v1785 = vpack.c.bf16 %v1742, %v1741
        %v1786 = vpack.c.bf16 %v1744, %v1743
        %v1787 = vpack.c.bf16 %v1746, %v1745
        %v1788 = vpack.c.bf16 %v1748, %v1747
        %v1789 = vpack.c.bf16 %v1750, %v1749
        %v1790 = vpack.c.bf16 %v1752, %v1751
        %v1791 = vpack.c.bf16 %v1754, %v1753
        %v1792 = vpack.c.bf16 %v1756, %v1755
        %v1793 = vpack.c.bf16 %v1758, %v1757
        %v1794 = vpack.c.bf16 %v1760, %v1759
        %v1795 = vpack.c.bf16 %v1762, %v1761
        %v1796 = vpack.c.bf16 %v1764, %v1763
        %v1797 = vld [vmem:[%s344] sm:$0xf]
        %v1798 = vld [vmem:[%s344 + $0x4] sm:$0xf]
        %v1801 = vunpack.c.l.b16 %v1797
        %v1802 = vunpack.c.l.b16 %v1798
        %v1803 = vpack.c.b16 %v1802, %v1801
        %v1806 = vsel %vm1161, %v1765, 0
        %v1809 = vsel %vm1161, %v1766, 0
        %v1812 = vsel %vm1161, %v1767, 0
        %v1815 = vsel %vm1161, %v1768, 0
        %v1818 = vsel %vm1161, %v1769, 0
        %v1821 = vsel %vm1161, %v1770, 0
        %v1824 = vsel %vm1161, %v1771, 0
        %v1827 = vsel %vm1161, %v1772, 0
        %v1830 = vsel %vm1161, %v1773, 0
        %v1833 = vsel %vm1161, %v1774, 0
        %v1836 = vsel %vm1161, %v1775, 0
        %v1839 = vsel %vm1161, %v1776, 0
        %v1842 = vsel %vm1161, %v1777, 0
        %v1845 = vsel %vm1161, %v1778, 0
        %v1848 = vsel %vm1161, %v1779, 0
        %v1851 = vsel %vm1161, %v1780, 0
        %v1854 = vsel %vm1161, %v1781, 0
        %v1857 = vsel %vm1161, %v1782, 0
        %v1860 = vsel %vm1161, %v1783, 0
        %v1863 = vsel %vm1161, %v1784, 0
        %v1866 = vsel %vm1161, %v1785, 0
        %v1869 = vsel %vm1161, %v1786, 0
        %v1872 = vsel %vm1161, %v1787, 0
        %v1875 = vsel %vm1161, %v1788, 0
        %v1878 = vsel %vm1161, %v1789, 0
        %v1881 = vsel %vm1161, %v1790, 0
        %v1884 = vsel %vm1161, %v1791, 0
        %v1887 = vsel %vm1161, %v1792, 0
        %v1890 = vsel %vm1161, %v1793, 0
        %v1893 = vsel %vm1161, %v1794, 0
        %v1896 = vsel %vm1161, %v1795, 0
        %v1899 = vsel %vm1161, %v1796, 0
        %1901 = vmatprep.subr.bf16.mxu0 0
        %1902 = vmatpush1.bf16.msra.mxu0 %v1803
        %1903 = vmatprep.subr.bf16.mxu0 0
        %1904 = vmatpush1.bf16.msra.mxu0 0
        %1905 = vmatprep.subr.bf16.mxu0 0
        %1906 = vmatpush1.bf16.msra.mxu0 0
        %1907 = vmatprep.subr.bf16.mxu0 0
        %1908 = vmatpush1.bf16.msra.mxu0 0
        %1909 = vmatprep.subr.bf16.mxu0 0
        %1910 = vmatpush1.bf16.msra.mxu0 0
        %1911 = vmatprep.subr.bf16.mxu0 0
        %1912 = vmatpush1.bf16.msra.mxu0 0
        %1913 = vmatprep.subr.bf16.mxu0 0
        %1914 = vmatpush1.bf16.msra.mxu0 0
        %1915 = vmatprep.subr.bf16.mxu0 0
        %1916 = vmatpush1.bf16.msra.mxu0 0
        %1917 = vmatprep.subr.bf16.mxu0 0
        %1918 = vmatpush1.bf16.msra.mxu0 0
        %1919 = vmatprep.subr.bf16.mxu0 0
        %1920 = vmatpush1.bf16.msra.mxu0 0
        %1921 = vmatprep.subr.bf16.mxu0 0
        %1922 = vmatpush1.bf16.msra.mxu0 0
        %1923 = vmatprep.subr.bf16.mxu0 0
        %1924 = vmatpush1.bf16.msra.mxu0 0
        %1925 = vmatprep.subr.bf16.mxu0 0
        %1926 = vmatpush1.bf16.msra.mxu0 0
        %1927 = vmatprep.subr.bf16.mxu0 0
        %1928 = vmatpush1.bf16.msra.mxu0 0
        %1929 = vmatprep.subr.bf16.mxu0 0
        %1930 = vmatpush1.bf16.msra.mxu0 0
        %1931 = vmatprep.subr.bf16.mxu0 0
        %1932 = vmatpush1.bf16.msra.mxu0 0
        %1933 = vmatprep.mubr.bf16.mxu0 0
        %1934 = vmatmul.mubr.bf16.gmra.mrb[0].mxu0 %v1806
        %v1935 = vpop.f32.mrb[0].mxu0
        %v1936 = vadd.f32 0.0, %v1935
        %v1937 = vpop.f32.mrb[0].mxu0
        %v1938 = vpop.f32.mrb[0].mxu0
        %v1939 = vadd.f32 0.0, %v1938
        %v1940 = vpop.f32.mrb[0].mxu0
        %1941 = vmatprep.mubr.bf16.mxu0 0
        %1942 = vmatmul.mubr.bf16.gmra.mrb[0].mxu0 %v1809
        %v1943 = vpop.f32.mrb[0].mxu0
        %v1944 = vadd.f32 0.0, %v1943
        %v1945 = vpop.f32.mrb[0].mxu0
        %v1946 = vpop.f32.mrb[0].mxu0
        %v1947 = vadd.f32 0.0, %v1946
        %v1948 = vpop.f32.mrb[0].mxu0
        %1949 = vmatprep.mubr.bf16.mxu0 0
        %1950 = vmatmul.mubr.bf16.gmra.mrb[0].mxu0 %v1812
        %v1951 = vpop.f32.mrb[0].mxu0
        %v1952 = vadd.f32 0.0, %v1951
        %v1953 = vpop.f32.mrb[0].mxu0
        %v1954 = vpop.f32.mrb[0].mxu0
        %v1955 = vadd.f32 0.0, %v1954
        %v1956 = vpop.f32.mrb[0].mxu0
        %1957 = vmatprep.mubr.bf16.mxu0 0
        %1958 = vmatmul.mubr.bf16.gmra.mrb[0].mxu0 %v1815
        %v1959 = vpop.f32.mrb[0].mxu0
        %v1960 = vadd.f32 0.0, %v1959
        %v1961 = vpop.f32.mrb[0].mxu0
        %v1962 = vpop.f32.mrb[0].mxu0
        %v1963 = vadd.f32 0.0, %v1962
        %v1964 = vpop.f32.mrb[0].mxu0
        %1965 = vmatprep.mubr.bf16.mxu0 0
        %1966 = vmatmul.mubr.bf16.gmra.mrb[0].mxu0 %v1818
        %v1967 = vpop.f32.mrb[0].mxu0
        %v1968 = vadd.f32 0.0, %v1967
        %v1969 = vpop.f32.mrb[0].mxu0
        %v1970 = vpop.f32.mrb[0].mxu0
        %v1971 = vadd.f32 0.0, %v1970
        %v1972 = vpop.f32.mrb[0].mxu0
        %1973 = vmatprep.mubr.bf16.mxu0 0
        %1974 = vmatmul.mubr.bf16.gmra.mrb[0].mxu0 %v1821
        %v1975 = vpop.f32.mrb[0].mxu0
        %v1976 = vadd.f32 0.0, %v1975
        %v1977 = vpop.f32.mrb[0].mxu0
        %v1978 = vpop.f32.mrb[0].mxu0
        %v1979 = vadd.f32 0.0, %v1978
        %v1980 = vpop.f32.mrb[0].mxu0
        %1981 = vmatprep.mubr.bf16.mxu0 0
        %1982 = vmatmul.mubr.bf16.gmra.mrb[0].mxu0 %v1824
        %v1983 = vpop.f32.mrb[0].mxu0
        %v1984 = vadd.f32 0.0, %v1983
        %v1985 = vpop.f32.mrb[0].mxu0
        %v1986 = vpop.f32.mrb[0].mxu0
        %v1987 = vadd.f32 0.0, %v1986
        %v1988 = vpop.f32.mrb[0].mxu0
        %1989 = vmatprep.mubr.bf16.mxu0 0
        %1990 = vmatmul.mubr.bf16.gmra.mrb[0].mxu0 %v1827
        %v1991 = vpop.f32.mrb[0].mxu0
        %v1992 = vadd.f32 0.0, %v1991
        %v1993 = vpop.f32.mrb[0].mxu0
        %v1994 = vpop.f32.mrb[0].mxu0
        %v1995 = vadd.f32 0.0, %v1994
        %v1996 = vpop.f32.mrb[0].mxu0
        %1997 = vmatprep.mubr.bf16.mxu0 0
        %1998 = vmatmul.mubr.bf16.gmra.mrb[0].mxu0 %v1830
        %v1999 = vpop.f32.mrb[0].mxu0
        %v2000 = vadd.f32 0.0, %v1999
        %v2001 = vpop.f32.mrb[0].mxu0
        %v2002 = vpop.f32.mrb[0].mxu0
        %v2003 = vadd.f32 0.0, %v2002
        %v2004 = vpop.f32.mrb[0].mxu0
        %2005 = vmatprep.mubr.bf16.mxu0 0
        %2006 = vmatmul.mubr.bf16.gmra.mrb[0].mxu0 %v1833
        %v2007 = vpop.f32.mrb[0].mxu0
        %v2008 = vadd.f32 0.0, %v2007
        %v2009 = vpop.f32.mrb[0].mxu0
        %v2010 = vpop.f32.mrb[0].mxu0
        %v2011 = vadd.f32 0.0, %v2010
        %v2012 = vpop.f32.mrb[0].mxu0
        %2013 = vmatprep.mubr.bf16.mxu0 0
        %2014 = vmatmul.mubr.bf16.gmra.mrb[0].mxu0 %v1836
        %v2015 = vpop.f32.mrb[0].mxu0
        %v2016 = vadd.f32 0.0, %v2015
        %v2017 = vpop.f32.mrb[0].mxu0
        %v2018 = vpop.f32.mrb[0].mxu0
        %v2019 = vadd.f32 0.0, %v2018
        %v2020 = vpop.f32.mrb[0].mxu0
        %2021 = vmatprep.mubr.bf16.mxu0 0
        %2022 = vmatmul.mubr.bf16.gmra.mrb[0].mxu0 %v1839
        %v2023 = vpop.f32.mrb[0].mxu0
        %v2024 = vadd.f32 0.0, %v2023
        %v2025 = vpop.f32.mrb[0].mxu0
        %v2026 = vpop.f32.mrb[0].mxu0
        %v2027 = vadd.f32 0.0, %v2026
        %v2028 = vpop.f32.mrb[0].mxu0
        %2029 = vmatprep.mubr.bf16.mxu0 0
        %2030 = vmatmul.mubr.bf16.gmra.mrb[0].mxu0 %v1842
        %v2031 = vpop.f32.mrb[0].mxu0
        %v2032 = vadd.f32 0.0, %v2031
        %v2033 = vpop.f32.mrb[0].mxu0
        %v2034 = vpop.f32.mrb[0].mxu0
        %v2035 = vadd.f32 0.0, %v2034
        %v2036 = vpop.f32.mrb[0].mxu0
        %2037 = vmatprep.mubr.bf16.mxu0 0
        %2038 = vmatmul.mubr.bf16.gmra.mrb[0].mxu0 %v1845
        %v2039 = vpop.f32.mrb[0].mxu0
        %v2040 = vadd.f32 0.0, %v2039
        %v2041 = vpop.f32.mrb[0].mxu0
        %v2042 = vpop.f32.mrb[0].mxu0
        %v2043 = vadd.f32 0.0, %v2042
        %v2044 = vpop.f32.mrb[0].mxu0
        %2045 = vmatprep.mubr.bf16.mxu0 0
        %2046 = vmatmul.mubr.bf16.gmra.mrb[0].mxu0 %v1848
        %v2047 = vpop.f32.mrb[0].mxu0
        %v2048 = vadd.f32 0.0, %v2047
        %v2049 = vpop.f32.mrb[0].mxu0
        %v2050 = vpop.f32.mrb[0].mxu0
        %v2051 = vadd.f32 0.0, %v2050
        %v2052 = vpop.f32.mrb[0].mxu0
        %2053 = vmatprep.mubr.bf16.mxu0 0
        %2054 = vmatmul.mubr.bf16.gmra.mrb[0].mxu0 %v1851
        %v2055 = vpop.f32.mrb[0].mxu0
        %v2056 = vadd.f32 0.0, %v2055
        %v2057 = vpop.f32.mrb[0].mxu0
        %v2058 = vpop.f32.mrb[0].mxu0
        %v2059 = vadd.f32 0.0, %v2058
        %v2060 = vpop.f32.mrb[0].mxu0
        %2061 = vmatprep.mubr.bf16.mxu0 0
        %2062 = vmatmul.mubr.bf16.gmra.mrb[0].mxu0 %v1854
        %v2063 = vpop.f32.mrb[0].mxu0
        %v2064 = vadd.f32 0.0, %v2063
        %v2065 = vpop.f32.mrb[0].mxu0
        %v2066 = vpop.f32.mrb[0].mxu0
        %v2067 = vadd.f32 0.0, %v2066
        %v2068 = vpop.f32.mrb[0].mxu0
        %2069 = vmatprep.mubr.bf16.mxu0 0
        %2070 = vmatmul.mubr.bf16.gmra.mrb[0].mxu0 %v1857
        %v2071 = vpop.f32.mrb[0].mxu0
        %v2072 = vadd.f32 0.0, %v2071
        %v2073 = vpop.f32.mrb[0].mxu0
        %v2074 = vpop.f32.mrb[0].mxu0
        %v2075 = vadd.f32 0.0, %v2074
        %v2076 = vpop.f32.mrb[0].mxu0
        %2077 = vmatprep.mubr.bf16.mxu0 0
        %2078 = vmatmul.mubr.bf16.gmra.mrb[0].mxu0 %v1860
        %v2079 = vpop.f32.mrb[0].mxu0
        %v2080 = vadd.f32 0.0, %v2079
        %v2081 = vpop.f32.mrb[0].mxu0
        %v2082 = vpop.f32.mrb[0].mxu0
        %v2083 = vadd.f32 0.0, %v2082
        %v2084 = vpop.f32.mrb[0].mxu0
        %2085 = vmatprep.mubr.bf16.mxu0 0
        %2086 = vmatmul.mubr.bf16.gmra.mrb[0].mxu0 %v1863
        %v2087 = vpop.f32.mrb[0].mxu0
        %v2088 = vadd.f32 0.0, %v2087
        %v2089 = vpop.f32.mrb[0].mxu0
        %v2090 = vpop.f32.mrb[0].mxu0
        %v2091 = vadd.f32 0.0, %v2090
        %v2092 = vpop.f32.mrb[0].mxu0
        %2093 = vmatprep.mubr.bf16.mxu0 0
        %2094 = vmatmul.mubr.bf16.gmra.mrb[0].mxu0 %v1866
        %v2095 = vpop.f32.mrb[0].mxu0
        %v2096 = vadd.f32 0.0, %v2095
        %v2097 = vpop.f32.mrb[0].mxu0
        %v2098 = vpop.f32.mrb[0].mxu0
        %v2099 = vadd.f32 0.0, %v2098
        %v2100 = vpop.f32.mrb[0].mxu0
        %2101 = vmatprep.mubr.bf16.mxu0 0
        %2102 = vmatmul.mubr.bf16.gmra.mrb[0].mxu0 %v1869
        %v2103 = vpop.f32.mrb[0].mxu0
        %v2104 = vadd.f32 0.0, %v2103
        %v2105 = vpop.f32.mrb[0].mxu0
        %v2106 = vpop.f32.mrb[0].mxu0
        %v2107 = vadd.f32 0.0, %v2106
        %v2108 = vpop.f32.mrb[0].mxu0
        %2109 = vmatprep.mubr.bf16.mxu0 0
        %2110 = vmatmul.mubr.bf16.gmra.mrb[0].mxu0 %v1872
        %v2111 = vpop.f32.mrb[0].mxu0
        %v2112 = vadd.f32 0.0, %v2111
        %v2113 = vpop.f32.mrb[0].mxu0
        %v2114 = vpop.f32.mrb[0].mxu0
        %v2115 = vadd.f32 0.0, %v2114
        %v2116 = vpop.f32.mrb[0].mxu0
        %2117 = vmatprep.mubr.bf16.mxu0 0
        %2118 = vmatmul.mubr.bf16.gmra.mrb[0].mxu0 %v1875
        %v2119 = vpop.f32.mrb[0].mxu0
        %v2120 = vadd.f32 0.0, %v2119
        %v2121 = vpop.f32.mrb[0].mxu0
        %v2122 = vpop.f32.mrb[0].mxu0
        %v2123 = vadd.f32 0.0, %v2122
        %v2124 = vpop.f32.mrb[0].mxu0
        %2125 = vmatprep.mubr.bf16.mxu0 0
        %2126 = vmatmul.mubr.bf16.gmra.mrb[0].mxu0 %v1878
        %v2127 = vpop.f32.mrb[0].mxu0
        %v2128 = vadd.f32 0.0, %v2127
        %v2129 = vpop.f32.mrb[0].mxu0
        %v2130 = vpop.f32.mrb[0].mxu0
        %v2131 = vadd.f32 0.0, %v2130
        %v2132 = vpop.f32.mrb[0].mxu0
        %2133 = vmatprep.mubr.bf16.mxu0 0
        %2134 = vmatmul.mubr.bf16.gmra.mrb[0].mxu0 %v1881
        %v2135 = vpop.f32.mrb[0].mxu0
        %v2136 = vadd.f32 0.0, %v2135
        %v2137 = vpop.f32.mrb[0].mxu0
        %v2138 = vpop.f32.mrb[0].mxu0
        %v2139 = vadd.f32 0.0, %v2138
        %v2140 = vpop.f32.mrb[0].mxu0
        %2141 = vmatprep.mubr.bf16.mxu0 0
        %2142 = vmatmul.mubr.bf16.gmra.mrb[0].mxu0 %v1884
        %v2143 = vpop.f32.mrb[0].mxu0
        %v2144 = vadd.f32 0.0, %v2143
        %v2145 = vpop.f32.mrb[0].mxu0
        %v2146 = vpop.f32.mrb[0].mxu0
        %v2147 = vadd.f32 0.0, %v2146
        %v2148 = vpop.f32.mrb[0].mxu0
        %2149 = vmatprep.mubr.bf16.mxu0 0
        %2150 = vmatmul.mubr.bf16.gmra.mrb[0].mxu0 %v1887
        %v2151 = vpop.f32.mrb[0].mxu0
        %v2152 = vadd.f32 0.0, %v2151
        %v2153 = vpop.f32.mrb[0].mxu0
        %v2154 = vpop.f32.mrb[0].mxu0
        %v2155 = vadd.f32 0.0, %v2154
        %v2156 = vpop.f32.mrb[0].mxu0
        %2157 = vmatprep.mubr.bf16.mxu0 0
        %2158 = vmatmul.mubr.bf16.gmra.mrb[0].mxu0 %v1890
        %v2159 = vpop.f32.mrb[0].mxu0
        %v2160 = vadd.f32 0.0, %v2159
        %v2161 = vpop.f32.mrb[0].mxu0
        %v2162 = vpop.f32.mrb[0].mxu0
        %v2163 = vadd.f32 0.0, %v2162
        %v2164 = vpop.f32.mrb[0].mxu0
        %2165 = vmatprep.mubr.bf16.mxu0 0
        %2166 = vmatmul.mubr.bf16.gmra.mrb[0].mxu0 %v1893
        %v2167 = vpop.f32.mrb[0].mxu0
        %v2168 = vadd.f32 0.0, %v2167
        %v2169 = vpop.f32.mrb[0].mxu0
        %v2170 = vpop.f32.mrb[0].mxu0
        %v2171 = vadd.f32 0.0, %v2170
        %v2172 = vpop.f32.mrb[0].mxu0
        %2173 = vmatprep.mubr.bf16.mxu0 0
        %2174 = vmatmul.mubr.bf16.gmra.mrb[0].mxu0 %v1896
        %v2175 = vpop.f32.mrb[0].mxu0
        %v2176 = vadd.f32 0.0, %v2175
        %v2177 = vpop.f32.mrb[0].mxu0
        %v2178 = vpop.f32.mrb[0].mxu0
        %v2179 = vadd.f32 0.0, %v2178
        %v2180 = vpop.f32.mrb[0].mxu0
        %2181 = vmatprep.mubr.bf16.mxu0 0
        %2182 = vmatmul.mubr.bf16.gmra.mrb[0].mxu0 %v1899
        %v2183 = vpop.f32.mrb[0].mxu0
        %v2184 = vadd.f32 0.0, %v2183
        %v2185 = vpop.f32.mrb[0].mxu0
        %v2186 = vpop.f32.mrb[0].mxu0
        %v2187 = vadd.f32 0.0, %v2186
        %v2188 = vpop.f32.mrb[0].mxu0
        %2189 = vdwg.mxu0
        %v2190 = vsel %vm1161, %v1936, 0.0
        %v2191 = vsel %vm1161, %v1939, 0.0
        %v2192 = vadd.f32 %v2190, %v2191
        %v2193 = vsel %vm1161, %v1944, 0.0
        %v2194 = vadd.f32 %v2192, %v2193
        %v2195 = vsel %vm1161, %v1947, 0.0
        %v2196 = vadd.f32 %v2194, %v2195
        %v2197 = vsel %vm1161, %v1952, 0.0
        %v2198 = vadd.f32 %v2196, %v2197
        %v2199 = vsel %vm1161, %v1955, 0.0
        %v2200 = vadd.f32 %v2198, %v2199
        %v2201 = vsel %vm1161, %v1960, 0.0
        %v2202 = vadd.f32 %v2200, %v2201
        %v2203 = vsel %vm1161, %v1963, 0.0
        %v2204 = vadd.f32 %v2202, %v2203
        %v2205 = vsel %vm1161, %v1968, 0.0
        %v2206 = vadd.f32 %v2204, %v2205
        %v2207 = vsel %vm1161, %v1971, 0.0
        %v2208 = vadd.f32 %v2206, %v2207
        %v2209 = vsel %vm1161, %v1976, 0.0
        %v2210 = vadd.f32 %v2208, %v2209
        %v2211 = vsel %vm1161, %v1979, 0.0
        %v2212 = vadd.f32 %v2210, %v2211
        %v2213 = vsel %vm1161, %v1984, 0.0
        %v2214 = vadd.f32 %v2212, %v2213
        %v2215 = vsel %vm1161, %v1987, 0.0
        %v2216 = vadd.f32 %v2214, %v2215
        %v2217 = vsel %vm1161, %v1992, 0.0
        %v2218 = vadd.f32 %v2216, %v2217
        %v2219 = vsel %vm1161, %v1995, 0.0
        %v2220 = vadd.f32 %v2218, %v2219
        %v2221 = vsel %vm1161, %v2000, 0.0
        %v2222 = vadd.f32 %v2220, %v2221
        %v2223 = vsel %vm1161, %v2003, 0.0
        %v2224 = vadd.f32 %v2222, %v2223
        %v2225 = vsel %vm1161, %v2008, 0.0
        %v2226 = vadd.f32 %v2224, %v2225
        %v2227 = vsel %vm1161, %v2011, 0.0
        %v2228 = vadd.f32 %v2226, %v2227
        %v2229 = vsel %vm1161, %v2016, 0.0
        %v2230 = vadd.f32 %v2228, %v2229
        %v2231 = vsel %vm1161, %v2019, 0.0
        %v2232 = vadd.f32 %v2230, %v2231
        %v2233 = vsel %vm1161, %v2024, 0.0
        %v2234 = vadd.f32 %v2232, %v2233
        %v2235 = vsel %vm1161, %v2027, 0.0
        %v2236 = vadd.f32 %v2234, %v2235
        %v2237 = vsel %vm1161, %v2032, 0.0
        %v2238 = vadd.f32 %v2236, %v2237
        %v2239 = vsel %vm1161, %v2035, 0.0
        %v2240 = vadd.f32 %v2238, %v2239
        %v2241 = vsel %vm1161, %v2040, 0.0
        %v2242 = vadd.f32 %v2240, %v2241
        %v2243 = vsel %vm1161, %v2043, 0.0
        %v2244 = vadd.f32 %v2242, %v2243
        %v2245 = vsel %vm1161, %v2048, 0.0
        %v2246 = vadd.f32 %v2244, %v2245
        %v2247 = vsel %vm1161, %v2051, 0.0
        %v2248 = vadd.f32 %v2246, %v2247
        %v2249 = vsel %vm1161, %v2056, 0.0
        %v2250 = vadd.f32 %v2248, %v2249
        %v2251 = vsel %vm1161, %v2059, 0.0
        %v2252 = vadd.f32 %v2250, %v2251
        %v2253 = vsel %vm1161, %v2064, 0.0
        %v2254 = vadd.f32 %v2252, %v2253
        %v2255 = vsel %vm1161, %v2067, 0.0
        %v2256 = vadd.f32 %v2254, %v2255
        %v2257 = vsel %vm1161, %v2072, 0.0
        %v2258 = vadd.f32 %v2256, %v2257
        %v2259 = vsel %vm1161, %v2075, 0.0
        %v2260 = vadd.f32 %v2258, %v2259
        %v2261 = vsel %vm1161, %v2080, 0.0
        %v2262 = vadd.f32 %v2260, %v2261
        %v2263 = vsel %vm1161, %v2083, 0.0
        %v2264 = vadd.f32 %v2262, %v2263
        %v2265 = vsel %vm1161, %v2088, 0.0
        %v2266 = vadd.f32 %v2264, %v2265
        %v2267 = vsel %vm1161, %v2091, 0.0
        %v2268 = vadd.f32 %v2266, %v2267
        %v2269 = vsel %vm1161, %v2096, 0.0
        %v2270 = vadd.f32 %v2268, %v2269
        %v2271 = vsel %vm1161, %v2099, 0.0
        %v2272 = vadd.f32 %v2270, %v2271
        %v2273 = vsel %vm1161, %v2104, 0.0
        %v2274 = vadd.f32 %v2272, %v2273
        %v2275 = vsel %vm1161, %v2107, 0.0
        %v2276 = vadd.f32 %v2274, %v2275
        %v2277 = vsel %vm1161, %v2112, 0.0
        %v2278 = vadd.f32 %v2276, %v2277
        %v2279 = vsel %vm1161, %v2115, 0.0
        %v2280 = vadd.f32 %v2278, %v2279
        %v2281 = vsel %vm1161, %v2120, 0.0
        %v2282 = vadd.f32 %v2280, %v2281
        %v2283 = vsel %vm1161, %v2123, 0.0
        %v2284 = vadd.f32 %v2282, %v2283
        %v2285 = vsel %vm1161, %v2128, 0.0
        %v2286 = vadd.f32 %v2284, %v2285
        %v2287 = vsel %vm1161, %v2131, 0.0
        %v2288 = vadd.f32 %v2286, %v2287
        %v2289 = vsel %vm1161, %v2136, 0.0
        %v2290 = vadd.f32 %v2288, %v2289
        %v2291 = vsel %vm1161, %v2139, 0.0
        %v2292 = vadd.f32 %v2290, %v2291
        %v2293 = vsel %vm1161, %v2144, 0.0
        %v2294 = vadd.f32 %v2292, %v2293
        %v2295 = vsel %vm1161, %v2147, 0.0
        %v2296 = vadd.f32 %v2294, %v2295
        %v2297 = vsel %vm1161, %v2152, 0.0
        %v2298 = vadd.f32 %v2296, %v2297
        %v2299 = vsel %vm1161, %v2155, 0.0
        %v2300 = vadd.f32 %v2298, %v2299
        %v2301 = vsel %vm1161, %v2160, 0.0
        %v2302 = vadd.f32 %v2300, %v2301
        %v2303 = vsel %vm1161, %v2163, 0.0
        %v2304 = vadd.f32 %v2302, %v2303
        %v2305 = vsel %vm1161, %v2168, 0.0
        %v2306 = vadd.f32 %v2304, %v2305
        %v2307 = vsel %vm1161, %v2171, 0.0
        %v2308 = vadd.f32 %v2306, %v2307
        %v2309 = vsel %vm1161, %v2176, 0.0
        %v2310 = vadd.f32 %v2308, %v2309
        %v2311 = vsel %vm1161, %v2179, 0.0
        %v2312 = vadd.f32 %v2310, %v2311
        %v2313 = vsel %vm1161, %v2184, 0.0
        %v2314 = vadd.f32 %v2312, %v2313
        %v2315 = vsel %vm1161, %v2187, 0.0
        %v2316 = vadd.f32 %v2314, %v2315
        %v2317 = vrot.slane %v2316, 4
        %v2318 = vadd.f32 %v2316, %v2317
        %v2319 = vrot.slane %v2318, 2
        %v2320 = vadd.f32 %v2318, %v2319
        %v2321 = vrot.slane %v2320, 1
        %v2322 = vadd.f32 %v2320, %v2321
        %v2323 = vmul.f32 %v2322, 0.001953125
        %v2324 = vsub.f32 %v1936, %v2323
        %v2325 = vsub.f32 %v1939, %v2323
        %v2326 = vsub.f32 %v1944, %v2323
        %v2327 = vsub.f32 %v1947, %v2323
        %v2328 = vsub.f32 %v1952, %v2323
        %v2329 = vsub.f32 %v1955, %v2323
        %v2330 = vsub.f32 %v1960, %v2323
        %v2331 = vsub.f32 %v1963, %v2323
        %v2332 = vsub.f32 %v1968, %v2323
        %v2333 = vsub.f32 %v1971, %v2323
        %v2334 = vsub.f32 %v1976, %v2323
        %v2335 = vsub.f32 %v1979, %v2323
        %v2336 = vsub.f32 %v1984, %v2323
        %v2337 = vsub.f32 %v1987, %v2323
        %v2338 = vsub.f32 %v1992, %v2323
        %v2339 = vsub.f32 %v1995, %v2323
        %v2340 = vsub.f32 %v2000, %v2323
        %v2341 = vsub.f32 %v2003, %v2323
        %v2342 = vsub.f32 %v2008, %v2323
        %v2343 = vsub.f32 %v2011, %v2323
        %v2344 = vsub.f32 %v2016, %v2323
        %v2345 = vsub.f32 %v2019, %v2323
        %v2346 = vsub.f32 %v2024, %v2323
        %v2347 = vsub.f32 %v2027, %v2323
        %v2348 = vsub.f32 %v2032, %v2323
        %v2349 = vsub.f32 %v2035, %v2323
        %v2350 = vsub.f32 %v2040, %v2323
        %v2351 = vsub.f32 %v2043, %v2323
        %v2352 = vsub.f32 %v2048, %v2323
        %v2353 = vsub.f32 %v2051, %v2323
        %v2354 = vsub.f32 %v2056, %v2323
        %v2355 = vsub.f32 %v2059, %v2323
        %v2356 = vsub.f32 %v2064, %v2323
        %v2357 = vsub.f32 %v2067, %v2323
        %v2358 = vsub.f32 %v2072, %v2323
        %v2359 = vsub.f32 %v2075, %v2323
        %v2360 = vsub.f32 %v2080, %v2323
        %v2361 = vsub.f32 %v2083, %v2323
        %v2362 = vsub.f32 %v2088, %v2323
        %v2363 = vsub.f32 %v2091, %v2323
        %v2364 = vsub.f32 %v2096, %v2323
        %v2365 = vsub.f32 %v2099, %v2323
        %v2366 = vsub.f32 %v2104, %v2323
        %v2367 = vsub.f32 %v2107, %v2323
        %v2368 = vsub.f32 %v2112, %v2323
        %v2369 = vsub.f32 %v2115, %v2323
        %v2370 = vsub.f32 %v2120, %v2323
        %v2371 = vsub.f32 %v2123, %v2323
        %v2372 = vsub.f32 %v2128, %v2323
        %v2373 = vsub.f32 %v2131, %v2323
        %v2374 = vsub.f32 %v2136, %v2323
        %v2375 = vsub.f32 %v2139, %v2323
        %v2376 = vsub.f32 %v2144, %v2323
        %v2377 = vsub.f32 %v2147, %v2323
        %v2378 = vsub.f32 %v2152, %v2323
        %v2379 = vsub.f32 %v2155, %v2323
        %v2380 = vsub.f32 %v2160, %v2323
        %v2381 = vsub.f32 %v2163, %v2323
        %v2382 = vsub.f32 %v2168, %v2323
        %v2383 = vsub.f32 %v2171, %v2323
        %v2384 = vsub.f32 %v2176, %v2323
        %v2385 = vsub.f32 %v2179, %v2323
        %v2386 = vsub.f32 %v2184, %v2323
        %v2387 = vsub.f32 %v2187, %v2323
        %v2388 = vmul.f32 %v2324, %v2324
        %v2389 = vmul.f32 %v2325, %v2325
        %v2390 = vmul.f32 %v2326, %v2326
        %v2391 = vmul.f32 %v2327, %v2327
        %v2392 = vmul.f32 %v2328, %v2328
        %v2393 = vmul.f32 %v2329, %v2329
        %v2394 = vmul.f32 %v2330, %v2330
        %v2395 = vmul.f32 %v2331, %v2331
        %v2396 = vmul.f32 %v2332, %v2332
        %v2397 = vmul.f32 %v2333, %v2333
        %v2398 = vmul.f32 %v2334, %v2334
        %v2399 = vmul.f32 %v2335, %v2335
        %v2400 = vmul.f32 %v2336, %v2336
        %v2401 = vmul.f32 %v2337, %v2337
        %v2402 = vmul.f32 %v2338, %v2338
        %v2403 = vmul.f32 %v2339, %v2339
        %v2404 = vmul.f32 %v2340, %v2340
        %v2405 = vmul.f32 %v2341, %v2341
        %v2406 = vmul.f32 %v2342, %v2342
        %v2407 = vmul.f32 %v2343, %v2343
        %v2408 = vmul.f32 %v2344, %v2344
        %v2409 = vmul.f32 %v2345, %v2345
        %v2410 = vmul.f32 %v2346, %v2346
        %v2411 = vmul.f32 %v2347, %v2347
        %v2412 = vmul.f32 %v2348, %v2348
        %v2413 = vmul.f32 %v2349, %v2349
        %v2414 = vmul.f32 %v2350, %v2350
        %v2415 = vmul.f32 %v2351, %v2351
        %v2416 = vmul.f32 %v2352, %v2352
        %v2417 = vmul.f32 %v2353, %v2353
        %v2418 = vmul.f32 %v2354, %v2354
        %v2419 = vmul.f32 %v2355, %v2355
        %v2420 = vmul.f32 %v2356, %v2356
        %v2421 = vmul.f32 %v2357, %v2357
        %v2422 = vmul.f32 %v2358, %v2358
        %v2423 = vmul.f32 %v2359, %v2359
        %v2424 = vmul.f32 %v2360, %v2360
        %v2425 = vmul.f32 %v2361, %v2361
        %v2426 = vmul.f32 %v2362, %v2362
        %v2427 = vmul.f32 %v2363, %v2363
        %v2428 = vmul.f32 %v2364, %v2364
        %v2429 = vmul.f32 %v2365, %v2365
        %v2430 = vmul.f32 %v2366, %v2366
        %v2431 = vmul.f32 %v2367, %v2367
        %v2432 = vmul.f32 %v2368, %v2368
        %v2433 = vmul.f32 %v2369, %v2369
        %v2434 = vmul.f32 %v2370, %v2370
        %v2435 = vmul.f32 %v2371, %v2371
        %v2436 = vmul.f32 %v2372, %v2372
        %v2437 = vmul.f32 %v2373, %v2373
        %v2438 = vmul.f32 %v2374, %v2374
        %v2439 = vmul.f32 %v2375, %v2375
        %v2440 = vmul.f32 %v2376, %v2376
        %v2441 = vmul.f32 %v2377, %v2377
        %v2442 = vmul.f32 %v2378, %v2378
        %v2443 = vmul.f32 %v2379, %v2379
        %v2444 = vmul.f32 %v2380, %v2380
        %v2445 = vmul.f32 %v2381, %v2381
        %v2446 = vmul.f32 %v2382, %v2382
        %v2447 = vmul.f32 %v2383, %v2383
        %v2448 = vmul.f32 %v2384, %v2384
        %v2449 = vmul.f32 %v2385, %v2385
        %v2450 = vmul.f32 %v2386, %v2386
        %v2451 = vmul.f32 %v2387, %v2387
        %v2452 = vsel %vm1161, %v2388, 0.0
        %v2453 = vsel %vm1161, %v2389, 0.0
        %v2454 = vadd.f32 %v2452, %v2453
        %v2455 = vsel %vm1161, %v2390, 0.0
        %v2456 = vadd.f32 %v2454, %v2455
        %v2457 = vsel %vm1161, %v2391, 0.0
        %v2458 = vadd.f32 %v2456, %v2457
        %v2459 = vsel %vm1161, %v2392, 0.0
        %v2460 = vadd.f32 %v2458, %v2459
        %v2461 = vsel %vm1161, %v2393, 0.0
        %v2462 = vadd.f32 %v2460, %v2461
        %v2463 = vsel %vm1161, %v2394, 0.0
        %v2464 = vadd.f32 %v2462, %v2463
        %v2465 = vsel %vm1161, %v2395, 0.0
        %v2466 = vadd.f32 %v2464, %v2465
        %v2467 = vsel %vm1161, %v2396, 0.0
        %v2468 = vadd.f32 %v2466, %v2467
        %v2469 = vsel %vm1161, %v2397, 0.0
        %v2470 = vadd.f32 %v2468, %v2469
        %v2471 = vsel %vm1161, %v2398, 0.0
        %v2472 = vadd.f32 %v2470, %v2471
        %v2473 = vsel %vm1161, %v2399, 0.0
        %v2474 = vadd.f32 %v2472, %v2473
        %v2475 = vsel %vm1161, %v2400, 0.0
        %v2476 = vadd.f32 %v2474, %v2475
        %v2477 = vsel %vm1161, %v2401, 0.0
        %v2478 = vadd.f32 %v2476, %v2477
        %v2479 = vsel %vm1161, %v2402, 0.0
        %v2480 = vadd.f32 %v2478, %v2479
        %v2481 = vsel %vm1161, %v2403, 0.0
        %v2482 = vadd.f32 %v2480, %v2481
        %v2483 = vsel %vm1161, %v2404, 0.0
        %v2484 = vadd.f32 %v2482, %v2483
        %v2485 = vsel %vm1161, %v2405, 0.0
        %v2486 = vadd.f32 %v2484, %v2485
        %v2487 = vsel %vm1161, %v2406, 0.0
        %v2488 = vadd.f32 %v2486, %v2487
        %v2489 = vsel %vm1161, %v2407, 0.0
        %v2490 = vadd.f32 %v2488, %v2489
        %v2491 = vsel %vm1161, %v2408, 0.0
        %v2492 = vadd.f32 %v2490, %v2491
        %v2493 = vsel %vm1161, %v2409, 0.0
        %v2494 = vadd.f32 %v2492, %v2493
        %v2495 = vsel %vm1161, %v2410, 0.0
        %v2496 = vadd.f32 %v2494, %v2495
        %v2497 = vsel %vm1161, %v2411, 0.0
        %v2498 = vadd.f32 %v2496, %v2497
        %v2499 = vsel %vm1161, %v2412, 0.0
        %v2500 = vadd.f32 %v2498, %v2499
        %v2501 = vsel %vm1161, %v2413, 0.0
        %v2502 = vadd.f32 %v2500, %v2501
        %v2503 = vsel %vm1161, %v2414, 0.0
        %v2504 = vadd.f32 %v2502, %v2503
        %v2505 = vsel %vm1161, %v2415, 0.0
        %v2506 = vadd.f32 %v2504, %v2505
        %v2507 = vsel %vm1161, %v2416, 0.0
        %v2508 = vadd.f32 %v2506, %v2507
        %v2509 = vsel %vm1161, %v2417, 0.0
        %v2510 = vadd.f32 %v2508, %v2509
        %v2511 = vsel %vm1161, %v2418, 0.0
        %v2512 = vadd.f32 %v2510, %v2511
        %v2513 = vsel %vm1161, %v2419, 0.0
        %v2514 = vadd.f32 %v2512, %v2513
        %v2515 = vsel %vm1161, %v2420, 0.0
        %v2516 = vadd.f32 %v2514, %v2515
        %v2517 = vsel %vm1161, %v2421, 0.0
        %v2518 = vadd.f32 %v2516, %v2517
        %v2519 = vsel %vm1161, %v2422, 0.0
        %v2520 = vadd.f32 %v2518, %v2519
        %v2521 = vsel %vm1161, %v2423, 0.0
        %v2522 = vadd.f32 %v2520, %v2521
        %v2523 = vsel %vm1161, %v2424, 0.0
        %v2524 = vadd.f32 %v2522, %v2523
        %v2525 = vsel %vm1161, %v2425, 0.0
        %v2526 = vadd.f32 %v2524, %v2525
        %v2527 = vsel %vm1161, %v2426, 0.0
        %v2528 = vadd.f32 %v2526, %v2527
        %v2529 = vsel %vm1161, %v2427, 0.0
        %v2530 = vadd.f32 %v2528, %v2529
        %v2531 = vsel %vm1161, %v2428, 0.0
        %v2532 = vadd.f32 %v2530, %v2531
        %v2533 = vsel %vm1161, %v2429, 0.0
        %v2534 = vadd.f32 %v2532, %v2533
        %v2535 = vsel %vm1161, %v2430, 0.0
        %v2536 = vadd.f32 %v2534, %v2535
        %v2537 = vsel %vm1161, %v2431, 0.0
        %v2538 = vadd.f32 %v2536, %v2537
        %v2539 = vsel %vm1161, %v2432, 0.0
        %v2540 = vadd.f32 %v2538, %v2539
        %v2541 = vsel %vm1161, %v2433, 0.0
        %v2542 = vadd.f32 %v2540, %v2541
        %v2543 = vsel %vm1161, %v2434, 0.0
        %v2544 = vadd.f32 %v2542, %v2543
        %v2545 = vsel %vm1161, %v2435, 0.0
        %v2546 = vadd.f32 %v2544, %v2545
        %v2547 = vsel %vm1161, %v2436, 0.0
        %v2548 = vadd.f32 %v2546, %v2547
        %v2549 = vsel %vm1161, %v2437, 0.0
        %v2550 = vadd.f32 %v2548, %v2549
        %v2551 = vsel %vm1161, %v2438, 0.0
        %v2552 = vadd.f32 %v2550, %v2551
        %v2553 = vsel %vm1161, %v2439, 0.0
        %v2554 = vadd.f32 %v2552, %v2553
        %v2555 = vsel %vm1161, %v2440, 0.0
        %v2556 = vadd.f32 %v2554, %v2555
        %v2557 = vsel %vm1161, %v2441, 0.0
        %v2558 = vadd.f32 %v2556, %v2557
        %v2559 = vsel %vm1161, %v2442, 0.0
        %v2560 = vadd.f32 %v2558, %v2559
        %v2561 = vsel %vm1161, %v2443, 0.0
        %v2562 = vadd.f32 %v2560, %v2561
        %v2563 = vsel %vm1161, %v2444, 0.0
        %v2564 = vadd.f32 %v2562, %v2563
        %v2565 = vsel %vm1161, %v2445, 0.0
        %v2566 = vadd.f32 %v2564, %v2565
        %v2567 = vsel %vm1161, %v2446, 0.0
        %v2568 = vadd.f32 %v2566, %v2567
        %v2569 = vsel %vm1161, %v2447, 0.0
        %v2570 = vadd.f32 %v2568, %v2569
        %v2571 = vsel %vm1161, %v2448, 0.0
        %v2572 = vadd.f32 %v2570, %v2571
        %v2573 = vsel %vm1161, %v2449, 0.0
        %v2574 = vadd.f32 %v2572, %v2573
        %v2575 = vsel %vm1161, %v2450, 0.0
        %v2576 = vadd.f32 %v2574, %v2575
        %v2577 = vsel %vm1161, %v2451, 0.0
        %v2578 = vadd.f32 %v2576, %v2577
        %v2579 = vrot.slane %v2578, 4
        %v2580 = vadd.f32 %v2578, %v2579
        %v2581 = vrot.slane %v2580, 2
        %v2582 = vadd.f32 %v2580, %v2581
        %v2583 = vrot.slane %v2582, 1
        %v2584 = vadd.f32 %v2582, %v2583
        %v2585 = vmul.f32 %v2584, 0.001953125
        %v2586 = vadd.f32 %v2585, 1e-05
        %v2587 = vrsqrt.pop %v2586
        %v2588 = vld [vmem:[%s347] sm:$0x1]
        %v2589 = vmul.f32 %v2587, %v2588
        %v2590 = vlaneseq
        %v2591 = vshrl.u32 %v2590, 7
        %v2592 = vsub.s32 0, %v2591
        %v2593 = vrot.slane %v2589, %v2592
        %v2594 = vmul.f32 %v2324, %v2593
        %v2595 = vmul.f32 %v2325, %v2593
        %v2596 = vmul.f32 %v2326, %v2593
        %v2597 = vmul.f32 %v2327, %v2593
        %v2598 = vmul.f32 %v2328, %v2593
        %v2599 = vmul.f32 %v2329, %v2593
        %v2600 = vmul.f32 %v2330, %v2593
        %v2601 = vmul.f32 %v2331, %v2593
        %v2602 = vmul.f32 %v2332, %v2593
        %v2603 = vmul.f32 %v2333, %v2593
        %v2604 = vmul.f32 %v2334, %v2593
        %v2605 = vmul.f32 %v2335, %v2593
        %v2606 = vmul.f32 %v2336, %v2593
        %v2607 = vmul.f32 %v2337, %v2593
        %v2608 = vmul.f32 %v2338, %v2593
        %v2609 = vmul.f32 %v2339, %v2593
        %v2610 = vmul.f32 %v2340, %v2593
        %v2611 = vmul.f32 %v2341, %v2593
        %v2612 = vmul.f32 %v2342, %v2593
        %v2613 = vmul.f32 %v2343, %v2593
        %v2614 = vmul.f32 %v2344, %v2593
        %v2615 = vmul.f32 %v2345, %v2593
        %v2616 = vmul.f32 %v2346, %v2593
        %v2617 = vmul.f32 %v2347, %v2593
        %v2618 = vmul.f32 %v2348, %v2593
        %v2619 = vmul.f32 %v2349, %v2593
        %v2620 = vmul.f32 %v2350, %v2593
        %v2621 = vmul.f32 %v2351, %v2593
        %v2622 = vmul.f32 %v2352, %v2593
        %v2623 = vmul.f32 %v2353, %v2593
        %v2624 = vmul.f32 %v2354, %v2593
        %v2625 = vmul.f32 %v2355, %v2593
        %v2626 = vmul.f32 %v2356, %v2593
        %v2627 = vmul.f32 %v2357, %v2593
        %v2628 = vmul.f32 %v2358, %v2593
        %v2629 = vmul.f32 %v2359, %v2593
        %v2630 = vmul.f32 %v2360, %v2593
        %v2631 = vmul.f32 %v2361, %v2593
        %v2632 = vmul.f32 %v2362, %v2593
        %v2633 = vmul.f32 %v2363, %v2593
        %v2634 = vmul.f32 %v2364, %v2593
        %v2635 = vmul.f32 %v2365, %v2593
        %v2636 = vmul.f32 %v2366, %v2593
        %v2637 = vmul.f32 %v2367, %v2593
        %v2638 = vmul.f32 %v2368, %v2593
        %v2639 = vmul.f32 %v2369, %v2593
        %v2640 = vmul.f32 %v2370, %v2593
        %v2641 = vmul.f32 %v2371, %v2593
        %v2642 = vmul.f32 %v2372, %v2593
        %v2643 = vmul.f32 %v2373, %v2593
        %v2644 = vmul.f32 %v2374, %v2593
        %v2645 = vmul.f32 %v2375, %v2593
        %v2646 = vmul.f32 %v2376, %v2593
        %v2647 = vmul.f32 %v2377, %v2593
        %v2648 = vmul.f32 %v2378, %v2593
        %v2649 = vmul.f32 %v2379, %v2593
        %v2650 = vmul.f32 %v2380, %v2593
        %v2651 = vmul.f32 %v2381, %v2593
        %v2652 = vmul.f32 %v2382, %v2593
        %v2653 = vmul.f32 %v2383, %v2593
        %v2654 = vmul.f32 %v2384, %v2593
        %v2655 = vmul.f32 %v2385, %v2593
        %v2656 = vmul.f32 %v2386, %v2593
        %v2657 = vmul.f32 %v2387, %v2593
        %v2658 = vld [vmem:[%s350] sm:$0x1]
        %v2660 = vlaneseq
        %v2661 = vshrl.u32 %v2660, 7
        %v2662 = vsub.s32 0, %v2661
        %v2663 = vrot.slane %v2658, %v2662
        %v2665 = vadd.f32 %v2594, %v2663
        %v2666 = vadd.f32 %v2595, %v2663
        %v2667 = vadd.f32 %v2596, %v2663
        %v2668 = vadd.f32 %v2597, %v2663
        %v2669 = vadd.f32 %v2598, %v2663
        %v2670 = vadd.f32 %v2599, %v2663
        %v2671 = vadd.f32 %v2600, %v2663
        %v2672 = vadd.f32 %v2601, %v2663
        %v2673 = vadd.f32 %v2602, %v2663
        %v2674 = vadd.f32 %v2603, %v2663
        %v2675 = vadd.f32 %v2604, %v2663
        %v2676 = vadd.f32 %v2605, %v2663
        %v2677 = vadd.f32 %v2606, %v2663
        %v2678 = vadd.f32 %v2607, %v2663
        %v2679 = vadd.f32 %v2608, %v2663
        %v2680 = vadd.f32 %v2609, %v2663
        %v2681 = vadd.f32 %v2610, %v2663
        %v2682 = vadd.f32 %v2611, %v2663
        %v2683 = vadd.f32 %v2612, %v2663
        %v2684 = vadd.f32 %v2613, %v2663
        %v2685 = vadd.f32 %v2614, %v2663
        %v2686 = vadd.f32 %v2615, %v2663
        %v2687 = vadd.f32 %v2616, %v2663
        %v2688 = vadd.f32 %v2617, %v2663
        %v2689 = vadd.f32 %v2618, %v2663
        %v2690 = vadd.f32 %v2619, %v2663
        %v2691 = vadd.f32 %v2620, %v2663
        %v2692 = vadd.f32 %v2621, %v2663
        %v2693 = vadd.f32 %v2622, %v2663
        %v2694 = vadd.f32 %v2623, %v2663
        %v2695 = vadd.f32 %v2624, %v2663
        %v2696 = vadd.f32 %v2625, %v2663
        %v2697 = vadd.f32 %v2626, %v2663
        %v2698 = vadd.f32 %v2627, %v2663
        %v2699 = vadd.f32 %v2628, %v2663
        %v2700 = vadd.f32 %v2629, %v2663
        %v2701 = vadd.f32 %v2630, %v2663
        %v2702 = vadd.f32 %v2631, %v2663
        %v2703 = vadd.f32 %v2632, %v2663
        %v2704 = vadd.f32 %v2633, %v2663
        %v2705 = vadd.f32 %v2634, %v2663
        %v2706 = vadd.f32 %v2635, %v2663
        %v2707 = vadd.f32 %v2636, %v2663
        %v2708 = vadd.f32 %v2637, %v2663
        %v2709 = vadd.f32 %v2638, %v2663
        %v2710 = vadd.f32 %v2639, %v2663
        %v2711 = vadd.f32 %v2640, %v2663
        %v2712 = vadd.f32 %v2641, %v2663
        %v2713 = vadd.f32 %v2642, %v2663
        %v2714 = vadd.f32 %v2643, %v2663
        %v2715 = vadd.f32 %v2644, %v2663
        %v2716 = vadd.f32 %v2645, %v2663
        %v2717 = vadd.f32 %v2646, %v2663
        %v2718 = vadd.f32 %v2647, %v2663
        %v2719 = vadd.f32 %v2648, %v2663
        %v2720 = vadd.f32 %v2649, %v2663
        %v2721 = vadd.f32 %v2650, %v2663
        %v2722 = vadd.f32 %v2651, %v2663
        %v2723 = vadd.f32 %v2652, %v2663
        %v2724 = vadd.f32 %v2653, %v2663
        %v2725 = vadd.f32 %v2654, %v2663
        %v2726 = vadd.f32 %v2655, %v2663
        %v2727 = vadd.f32 %v2656, %v2663
        %v2728 = vadd.f32 %v2657, %v2663
        %v2729 = vmax.f32 %v2665, 0.0
        %v2730 = vmax.f32 %v2666, 0.0
        %v2731 = vmax.f32 %v2667, 0.0
        %v2732 = vmax.f32 %v2668, 0.0
        %v2733 = vmax.f32 %v2669, 0.0
        %v2734 = vmax.f32 %v2670, 0.0
        %v2735 = vmax.f32 %v2671, 0.0
        %v2736 = vmax.f32 %v2672, 0.0
        %v2737 = vmax.f32 %v2673, 0.0
        %v2738 = vmax.f32 %v2674, 0.0
        %v2739 = vmax.f32 %v2675, 0.0
        %v2740 = vmax.f32 %v2676, 0.0
        %v2741 = vmax.f32 %v2677, 0.0
        %v2742 = vmax.f32 %v2678, 0.0
        %v2743 = vmax.f32 %v2679, 0.0
        %v2744 = vmax.f32 %v2680, 0.0
        %v2745 = vmax.f32 %v2681, 0.0
        %v2746 = vmax.f32 %v2682, 0.0
        %v2747 = vmax.f32 %v2683, 0.0
        %v2748 = vmax.f32 %v2684, 0.0
        %v2749 = vmax.f32 %v2685, 0.0
        %v2750 = vmax.f32 %v2686, 0.0
        %v2751 = vmax.f32 %v2687, 0.0
        %v2752 = vmax.f32 %v2688, 0.0
        %v2753 = vmax.f32 %v2689, 0.0
        %v2754 = vmax.f32 %v2690, 0.0
        %v2755 = vmax.f32 %v2691, 0.0
        %v2756 = vmax.f32 %v2692, 0.0
        %v2757 = vmax.f32 %v2693, 0.0
        %v2758 = vmax.f32 %v2694, 0.0
        %v2759 = vmax.f32 %v2695, 0.0
        %v2760 = vmax.f32 %v2696, 0.0
        %v2761 = vmax.f32 %v2697, 0.0
        %v2762 = vmax.f32 %v2698, 0.0
        %v2763 = vmax.f32 %v2699, 0.0
        %v2764 = vmax.f32 %v2700, 0.0
        %v2765 = vmax.f32 %v2701, 0.0
        %v2766 = vmax.f32 %v2702, 0.0
        %v2767 = vmax.f32 %v2703, 0.0
        %v2768 = vmax.f32 %v2704, 0.0
        %v2769 = vmax.f32 %v2705, 0.0
        %v2770 = vmax.f32 %v2706, 0.0
        %v2771 = vmax.f32 %v2707, 0.0
        %v2772 = vmax.f32 %v2708, 0.0
        %v2773 = vmax.f32 %v2709, 0.0
        %v2774 = vmax.f32 %v2710, 0.0
        %v2775 = vmax.f32 %v2711, 0.0
        %v2776 = vmax.f32 %v2712, 0.0
        %v2777 = vmax.f32 %v2713, 0.0
        %v2778 = vmax.f32 %v2714, 0.0
        %v2779 = vmax.f32 %v2715, 0.0
        %v2780 = vmax.f32 %v2716, 0.0
        %v2781 = vmax.f32 %v2717, 0.0
        %v2782 = vmax.f32 %v2718, 0.0
        %v2783 = vmax.f32 %v2719, 0.0
        %v2784 = vmax.f32 %v2720, 0.0
        %v2785 = vmax.f32 %v2721, 0.0
        %v2786 = vmax.f32 %v2722, 0.0
        %v2787 = vmax.f32 %v2723, 0.0
        %v2788 = vmax.f32 %v2724, 0.0
        %v2789 = vmax.f32 %v2725, 0.0
        %v2790 = vmax.f32 %v2726, 0.0
        %v2791 = vmax.f32 %v2727, 0.0
        %v2792 = vmax.f32 %v2728, 0.0
        %v2793 = vpack.c.bf16 %v2730, %v2729
        %v2794 = vpack.c.bf16 %v2732, %v2731
        %v2795 = vpack.c.bf16 %v2734, %v2733
        %v2796 = vpack.c.bf16 %v2736, %v2735
        %v2797 = vpack.c.bf16 %v2738, %v2737
        %v2798 = vpack.c.bf16 %v2740, %v2739
        %v2799 = vpack.c.bf16 %v2742, %v2741
        %v2800 = vpack.c.bf16 %v2744, %v2743
        %v2801 = vpack.c.bf16 %v2746, %v2745
        %v2802 = vpack.c.bf16 %v2748, %v2747
        %v2803 = vpack.c.bf16 %v2750, %v2749
        %v2804 = vpack.c.bf16 %v2752, %v2751
        %v2805 = vpack.c.bf16 %v2754, %v2753
        %v2806 = vpack.c.bf16 %v2756, %v2755
        %v2807 = vpack.c.bf16 %v2758, %v2757
        %v2808 = vpack.c.bf16 %v2760, %v2759
        %v2809 = vpack.c.bf16 %v2762, %v2761
        %v2810 = vpack.c.bf16 %v2764, %v2763
        %v2811 = vpack.c.bf16 %v2766, %v2765
        %v2812 = vpack.c.bf16 %v2768, %v2767
        %v2813 = vpack.c.bf16 %v2770, %v2769
        %v2814 = vpack.c.bf16 %v2772, %v2771
        %v2815 = vpack.c.bf16 %v2774, %v2773
        %v2816 = vpack.c.bf16 %v2776, %v2775
        %v2817 = vpack.c.bf16 %v2778, %v2777
        %v2818 = vpack.c.bf16 %v2780, %v2779
        %v2819 = vpack.c.bf16 %v2782, %v2781
        %v2820 = vpack.c.bf16 %v2784, %v2783
        %v2821 = vpack.c.bf16 %v2786, %v2785
        %v2822 = vpack.c.bf16 %v2788, %v2787
        %v2823 = vpack.c.bf16 %v2790, %v2789
        %v2824 = vpack.c.bf16 %v2792, %v2791
        %v2826 = vshrl.u32 %v2793, 16
        %v2828 = vrot.slane %v2826, 7
        %v2829 = vshll.u32 %v2793, 16
        %v2831 = vor.u32 %v2828, %v2829
        %v2833 = vshrl.u32 %v2794, 16
        %v2835 = vrot.slane %v2833, 7
        %v2836 = vshll.u32 %v2794, 16
        %v2838 = vor.u32 %v2835, %v2836
        %v2840 = vshrl.u32 %v2795, 16
        %v2842 = vrot.slane %v2840, 7
        %v2843 = vshll.u32 %v2795, 16
        %v2845 = vor.u32 %v2842, %v2843
        %v2847 = vshrl.u32 %v2796, 16
        %v2849 = vrot.slane %v2847, 7
        %v2850 = vshll.u32 %v2796, 16
        %v2852 = vor.u32 %v2849, %v2850
        %v2854 = vshrl.u32 %v2797, 16
        %v2856 = vrot.slane %v2854, 7
        %v2857 = vshll.u32 %v2797, 16
        %v2859 = vor.u32 %v2856, %v2857
        %v2861 = vshrl.u32 %v2798, 16
        %v2863 = vrot.slane %v2861, 7
        %v2864 = vshll.u32 %v2798, 16
        %v2866 = vor.u32 %v2863, %v2864
        %v2868 = vshrl.u32 %v2799, 16
        %v2870 = vrot.slane %v2868, 7
        %v2871 = vshll.u32 %v2799, 16
        %v2873 = vor.u32 %v2870, %v2871
        %v2875 = vshrl.u32 %v2800, 16
        %v2877 = vrot.slane %v2875, 7
        %v2878 = vshll.u32 %v2800, 16
        %v2880 = vor.u32 %v2877, %v2878
        %v2882 = vshrl.u32 %v2801, 16
        %v2884 = vrot.slane %v2882, 7
        %v2885 = vshll.u32 %v2801, 16
        %v2887 = vor.u32 %v2884, %v2885
        %v2889 = vshrl.u32 %v2802, 16
        %v2891 = vrot.slane %v2889, 7
        %v2892 = vshll.u32 %v2802, 16
        %v2894 = vor.u32 %v2891, %v2892
        %v2896 = vshrl.u32 %v2803, 16
        %v2898 = vrot.slane %v2896, 7
        %v2899 = vshll.u32 %v2803, 16
        %v2901 = vor.u32 %v2898, %v2899
        %v2903 = vshrl.u32 %v2804, 16
        %v2905 = vrot.slane %v2903, 7
        %v2906 = vshll.u32 %v2804, 16
        %v2908 = vor.u32 %v2905, %v2906
        %v2910 = vshrl.u32 %v2805, 16
        %v2912 = vrot.slane %v2910, 7
        %v2913 = vshll.u32 %v2805, 16
        %v2915 = vor.u32 %v2912, %v2913
        %v2917 = vshrl.u32 %v2806, 16
        %v2919 = vrot.slane %v2917, 7
        %v2920 = vshll.u32 %v2806, 16
        %v2922 = vor.u32 %v2919, %v2920
        %v2924 = vshrl.u32 %v2807, 16
        %v2926 = vrot.slane %v2924, 7
        %v2927 = vshll.u32 %v2807, 16
        %v2929 = vor.u32 %v2926, %v2927
        %v2931 = vshrl.u32 %v2809, 16
        %v2933 = vrot.slane %v2931, 7
        %v2934 = vshll.u32 %v2809, 16
        %v2936 = vor.u32 %v2933, %v2934
        %v2938 = vshrl.u32 %v2810, 16
        %v2940 = vrot.slane %v2938, 7
        %v2941 = vshll.u32 %v2810, 16
        %v2943 = vor.u32 %v2940, %v2941
        %v2945 = vshrl.u32 %v2811, 16
        %v2947 = vrot.slane %v2945, 7
        %v2948 = vshll.u32 %v2811, 16
        %v2950 = vor.u32 %v2947, %v2948
        %v2952 = vshrl.u32 %v2812, 16
        %v2954 = vrot.slane %v2952, 7
        %v2955 = vshll.u32 %v2812, 16
        %v2957 = vor.u32 %v2954, %v2955
        %v2959 = vshrl.u32 %v2813, 16
        %v2961 = vrot.slane %v2959, 7
        %v2962 = vshll.u32 %v2813, 16
        %v2964 = vor.u32 %v2961, %v2962
        %v2966 = vshrl.u32 %v2814, 16
        %v2968 = vrot.slane %v2966, 7
        %v2969 = vshll.u32 %v2814, 16
        %v2971 = vor.u32 %v2968, %v2969
        %v2973 = vshrl.u32 %v2815, 16
        %v2975 = vrot.slane %v2973, 7
        %v2976 = vshll.u32 %v2815, 16
        %v2978 = vor.u32 %v2975, %v2976
        %v2980 = vshrl.u32 %v2816, 16
        %v2982 = vrot.slane %v2980, 7
        %v2983 = vshll.u32 %v2816, 16
        %v2985 = vor.u32 %v2982, %v2983
        %v2987 = vshrl.u32 %v2817, 16
        %v2989 = vrot.slane %v2987, 7
        %v2990 = vshll.u32 %v2817, 16
        %v2992 = vor.u32 %v2989, %v2990
        %v2994 = vshrl.u32 %v2818, 16
        %v2996 = vrot.slane %v2994, 7
        %v2997 = vshll.u32 %v2818, 16
        %v2999 = vor.u32 %v2996, %v2997
        %v3001 = vshrl.u32 %v2819, 16
        %v3003 = vrot.slane %v3001, 7
        %v3004 = vshll.u32 %v2819, 16
        %v3006 = vor.u32 %v3003, %v3004
        %v3008 = vshrl.u32 %v2820, 16
        %v3010 = vrot.slane %v3008, 7
        %v3011 = vshll.u32 %v2820, 16
        %v3013 = vor.u32 %v3010, %v3011
        %v3015 = vshrl.u32 %v2821, 16
        %v3017 = vrot.slane %v3015, 7
        %v3018 = vshll.u32 %v2821, 16
        %v3020 = vor.u32 %v3017, %v3018
        %v3022 = vshrl.u32 %v2822, 16
        %v3024 = vrot.slane %v3022, 7
        %v3025 = vshll.u32 %v2822, 16
        %v3027 = vor.u32 %v3024, %v3025
        %v3029 = vshrl.u32 %v2823, 16
        %v3031 = vrot.slane %v3029, 7
        %v3032 = vshll.u32 %v2823, 16
        %v3034 = vor.u32 %v3031, %v3032
        %s3065 = scalar_lea.vmem [#allocation2], 16
        %vm3066 = vcmask 130048
        %vm3067 = vsmask.f32 7938
        %vm3068 = vmand %vm3066, %vm3067
        %v3069 = vld [vmem:[%s3065] sm:$0xff]
        %v3070 = vsel %vm3068, %v2831, %v3069
        %3071 = vst [vmem:[%s3065] sm:$0xff] %v3070
        %v3072 = vld [vmem:[%s3065 + $0x10] sm:$0xff]
        %v3073 = vsel %vm3068, %v2838, %v3072
        %3074 = vst [vmem:[%s3065 + $0x10] sm:$0xff] %v3073
        %v3075 = vld [vmem:[%s3065 + $0x20] sm:$0xff]
        %v3076 = vsel %vm3068, %v2845, %v3075
        %3077 = vst [vmem:[%s3065 + $0x20] sm:$0xff] %v3076
        %v3078 = vld [vmem:[%s3065 + $0x30] sm:$0xff]
        %v3079 = vsel %vm3068, %v2852, %v3078
        %3080 = vst [vmem:[%s3065 + $0x30] sm:$0xff] %v3079
        %v3081 = vld [vmem:[%s3065 + $0x40] sm:$0xff]
        %v3082 = vsel %vm3068, %v2859, %v3081
        %3083 = vst [vmem:[%s3065 + $0x40] sm:$0xff] %v3082
        %v3084 = vld [vmem:[%s3065 + $0x50] sm:$0xff]
        %v3085 = vsel %vm3068, %v2866, %v3084
        %3086 = vst [vmem:[%s3065 + $0x50] sm:$0xff] %v3085
        %v3087 = vld [vmem:[%s3065 + $0x60] sm:$0xff]
        %v3088 = vsel %vm3068, %v2873, %v3087
        %3089 = vst [vmem:[%s3065 + $0x60] sm:$0xff] %v3088
        %v3090 = vld [vmem:[%s3065 + $0x70] sm:$0xff]
        %v3091 = vsel %vm3068, %v2880, %v3090
        %3092 = vst [vmem:[%s3065 + $0x70] sm:$0xff] %v3091
        %v3093 = vld [vmem:[%s3065 + $0x80] sm:$0xff]
        %v3094 = vsel %vm3068, %v2887, %v3093
        %3095 = vst [vmem:[%s3065 + $0x80] sm:$0xff] %v3094
        %v3096 = vld [vmem:[%s3065 + $0x90] sm:$0xff]
        %v3097 = vsel %vm3068, %v2894, %v3096
        %3098 = vst [vmem:[%s3065 + $0x90] sm:$0xff] %v3097
        %v3099 = vld [vmem:[%s3065 + $0xa0] sm:$0xff]
        %v3100 = vsel %vm3068, %v2901, %v3099
        %3101 = vst [vmem:[%s3065 + $0xa0] sm:$0xff] %v3100
        %v3102 = vld [vmem:[%s3065 + $0xb0] sm:$0xff]
        %v3103 = vsel %vm3068, %v2908, %v3102
        %3104 = vst [vmem:[%s3065 + $0xb0] sm:$0xff] %v3103
        %v3105 = vld [vmem:[%s3065 + $0xc0] sm:$0xff]
        %v3106 = vsel %vm3068, %v2915, %v3105
        %3107 = vst [vmem:[%s3065 + $0xc0] sm:$0xff] %v3106
        %v3108 = vld [vmem:[%s3065 + $0xd0] sm:$0xff]
        %v3109 = vsel %vm3068, %v2922, %v3108
        %3110 = vst [vmem:[%s3065 + $0xd0] sm:$0xff] %v3109
        %v3111 = vld [vmem:[%s3065 + $0xe0] sm:$0xff]
        %v3112 = vsel %vm3068, %v2929, %v3111
        %3113 = vst [vmem:[%s3065 + $0xe0] sm:$0xff] %v3112
        %v3114 = vld [vmem:[%s3065 + $0x100] sm:$0xff]
        %v3115 = vsel %vm3068, %v2936, %v3114
        %3116 = vst [vmem:[%s3065 + $0x100] sm:$0xff] %v3115
        %v3117 = vld [vmem:[%s3065 + $0x110] sm:$0xff]
        %v3118 = vsel %vm3068, %v2943, %v3117
        %3119 = vst [vmem:[%s3065 + $0x110] sm:$0xff] %v3118
        %v3120 = vld [vmem:[%s3065 + $0x120] sm:$0xff]
        %v3121 = vsel %vm3068, %v2950, %v3120
        %3122 = vst [vmem:[%s3065 + $0x120] sm:$0xff] %v3121
        %v3123 = vld [vmem:[%s3065 + $0x130] sm:$0xff]
        %v3124 = vsel %vm3068, %v2957, %v3123
        %3125 = vst [vmem:[%s3065 + $0x130] sm:$0xff] %v3124
        %v3126 = vld [vmem:[%s3065 + $0x140] sm:$0xff]
        %v3127 = vsel %vm3068, %v2964, %v3126
        %3128 = vst [vmem:[%s3065 + $0x140] sm:$0xff] %v3127
        %v3129 = vld [vmem:[%s3065 + $0x150] sm:$0xff]
        %v3130 = vsel %vm3068, %v2971, %v3129
        %3131 = vst [vmem:[%s3065 + $0x150] sm:$0xff] %v3130
        %v3132 = vld [vmem:[%s3065 + $0x160] sm:$0xff]
        %v3133 = vsel %vm3068, %v2978, %v3132
        %3134 = vst [vmem:[%s3065 + $0x160] sm:$0xff] %v3133
        %v3135 = vld [vmem:[%s3065 + $0x170] sm:$0xff]
        %v3136 = vsel %vm3068, %v2985, %v3135
        %3137 = vst [vmem:[%s3065 + $0x170] sm:$0xff] %v3136
        %v3138 = vld [vmem:[%s3065 + $0x180] sm:$0xff]
        %v3139 = vsel %vm3068, %v2992, %v3138
        %3140 = vst [vmem:[%s3065 + $0x180] sm:$0xff] %v3139
        %v3141 = vld [vmem:[%s3065 + $0x190] sm:$0xff]
        %v3142 = vsel %vm3068, %v2999, %v3141
        %3143 = vst [vmem:[%s3065 + $0x190] sm:$0xff] %v3142
        %v3144 = vld [vmem:[%s3065 + $0x1a0] sm:$0xff]
        %v3145 = vsel %vm3068, %v3006, %v3144
        %3146 = vst [vmem:[%s3065 + $0x1a0] sm:$0xff] %v3145
        %v3147 = vld [vmem:[%s3065 + $0x1b0] sm:$0xff]
        %v3148 = vsel %vm3068, %v3013, %v3147
        %3149 = vst [vmem:[%s3065 + $0x1b0] sm:$0xff] %v3148
        %v3150 = vld [vmem:[%s3065 + $0x1c0] sm:$0xff]
        %v3151 = vsel %vm3068, %v3020, %v3150
        %3152 = vst [vmem:[%s3065 + $0x1c0] sm:$0xff] %v3151
        %v3153 = vld [vmem:[%s3065 + $0x1d0] sm:$0xff]
        %v3154 = vsel %vm3068, %v3027, %v3153
        %3155 = vst [vmem:[%s3065 + $0x1d0] sm:$0xff] %v3154
        %v3156 = vld [vmem:[%s3065 + $0x1e0] sm:$0xff]
        %v3157 = vsel %vm3068, %v3034, %v3156
        %3158 = vst [vmem:[%s3065 + $0x1e0] sm:$0xff] %v3157
        %3189 = vrot.lane.b32.xlu0 %v2793, 16
        %v3190 = vpop.permute.xlu0 %3189
        %3191 = vrot.lane.b32.xlu0 %v2794, 16
        %v3192 = vpop.permute.xlu0 %3191
        %3193 = vrot.lane.b32.xlu0 %v2795, 16
        %v3194 = vpop.permute.xlu0 %3193
        %3195 = vrot.lane.b32.xlu0 %v2796, 16
        %v3196 = vpop.permute.xlu0 %3195
        %3197 = vrot.lane.b32.xlu0 %v2797, 16
        %v3198 = vpop.permute.xlu0 %3197
        %3199 = vrot.lane.b32.xlu0 %v2798, 16
        %v3200 = vpop.permute.xlu0 %3199
        %3201 = vrot.lane.b32.xlu0 %v2799, 16
        %v3202 = vpop.permute.xlu0 %3201
        %3203 = vrot.lane.b32.xlu0 %v2800, 16
        %v3204 = vpop.permute.xlu0 %3203
        %3205 = vrot.lane.b32.xlu0 %v2801, 16
        %v3206 = vpop.permute.xlu0 %3205
        %3207 = vrot.lane.b32.xlu0 %v2802, 16
        %v3208 = vpop.permute.xlu0 %3207
        %3209 = vrot.lane.b32.xlu0 %v2803, 16
        %v3210 = vpop.permute.xlu0 %3209
        %3211 = vrot.lane.b32.xlu0 %v2804, 16
        %v3212 = vpop.permute.xlu0 %3211
        %3213 = vrot.lane.b32.xlu0 %v2805, 16
        %v3214 = vpop.permute.xlu0 %3213
        %3215 = vrot.lane.b32.xlu0 %v2806, 16
        %v3216 = vpop.permute.xlu0 %3215
        %3217 = vrot.lane.b32.xlu0 %v2807, 16
        %v3218 = vpop.permute.xlu0 %3217
        %3219 = vrot.lane.b32.xlu0 %v2809, 16
        %v3220 = vpop.permute.xlu0 %3219
        %3221 = vrot.lane.b32.xlu0 %v2810, 16
        %v3222 = vpop.permute.xlu0 %3221
        %3223 = vrot.lane.b32.xlu0 %v2811, 16
        %v3224 = vpop.permute.xlu0 %3223
        %3225 = vrot.lane.b32.xlu0 %v2812, 16
        %v3226 = vpop.permute.xlu0 %3225
        %3227 = vrot.lane.b32.xlu0 %v2813, 16
        %v3228 = vpop.permute.xlu0 %3227
        %3229 = vrot.lane.b32.xlu0 %v2814, 16
        %v3230 = vpop.permute.xlu0 %3229
        %3231 = vrot.lane.b32.xlu0 %v2815, 16
        %v3232 = vpop.permute.xlu0 %3231
        %3233 = vrot.lane.b32.xlu0 %v2816, 16
        %v3234 = vpop.permute.xlu0 %3233
        %3235 = vrot.lane.b32.xlu0 %v2817, 16
        %v3236 = vpop.permute.xlu0 %3235
        %3237 = vrot.lane.b32.xlu0 %v2818, 16
        %v3238 = vpop.permute.xlu0 %3237
        %3239 = vrot.lane.b32.xlu0 %v2819, 16
        %v3240 = vpop.permute.xlu0 %3239
        %3241 = vrot.lane.b32.xlu0 %v2820, 16
        %v3242 = vpop.permute.xlu0 %3241
        %3243 = vrot.lane.b32.xlu0 %v2821, 16
        %v3244 = vpop.permute.xlu0 %3243
        %3245 = vrot.lane.b32.xlu0 %v2822, 16
        %v3246 = vpop.permute.xlu0 %3245
        %3247 = vrot.lane.b32.xlu0 %v2823, 16
        %v3248 = vpop.permute.xlu0 %3247
        %vm3279 = vcmask 261248
        %3280 = vst.msk [vmem:[%s3065] sm:$0xff] %vm3279, %v3190
        %3281 = vst.msk [vmem:[%s3065 + $0x10] sm:$0xff] %vm3279, %v3192
        %3282 = vst.msk [vmem:[%s3065 + $0x20] sm:$0xff] %vm3279, %v3194
        %3283 = vst.msk [vmem:[%s3065 + $0x30] sm:$0xff] %vm3279, %v3196
        %3284 = vst.msk [vmem:[%s3065 + $0x40] sm:$0xff] %vm3279, %v3198
        %3285 = vst.msk [vmem:[%s3065 + $0x50] sm:$0xff] %vm3279, %v3200
        %3286 = vst.msk [vmem:[%s3065 + $0x60] sm:$0xff] %vm3279, %v3202
        %3287 = vst.msk [vmem:[%s3065 + $0x70] sm:$0xff] %vm3279, %v3204
        %3288 = vst.msk [vmem:[%s3065 + $0x80] sm:$0xff] %vm3279, %v3206
        %3289 = vst.msk [vmem:[%s3065 + $0x90] sm:$0xff] %vm3279, %v3208
        %3290 = vst.msk [vmem:[%s3065 + $0xa0] sm:$0xff] %vm3279, %v3210
        %3291 = vst.msk [vmem:[%s3065 + $0xb0] sm:$0xff] %vm3279, %v3212
        %3292 = vst.msk [vmem:[%s3065 + $0xc0] sm:$0xff] %vm3279, %v3214
        %3293 = vst.msk [vmem:[%s3065 + $0xd0] sm:$0xff] %vm3279, %v3216
        %3294 = vst.msk [vmem:[%s3065 + $0xe0] sm:$0xff] %vm3279, %v3218
        %3295 = vst.msk [vmem:[%s3065 + $0x100] sm:$0xff] %vm3279, %v3220
        %3296 = vst.msk [vmem:[%s3065 + $0x110] sm:$0xff] %vm3279, %v3222
        %3297 = vst.msk [vmem:[%s3065 + $0x120] sm:$0xff] %vm3279, %v3224
        %3298 = vst.msk [vmem:[%s3065 + $0x130] sm:$0xff] %vm3279, %v3226
        %3299 = vst.msk [vmem:[%s3065 + $0x140] sm:$0xff] %vm3279, %v3228
        %3300 = vst.msk [vmem:[%s3065 + $0x150] sm:$0xff] %vm3279, %v3230
        %3301 = vst.msk [vmem:[%s3065 + $0x160] sm:$0xff] %vm3279, %v3232
        %3302 = vst.msk [vmem:[%s3065 + $0x170] sm:$0xff] %vm3279, %v3234
        %3303 = vst.msk [vmem:[%s3065 + $0x180] sm:$0xff] %vm3279, %v3236
        %3304 = vst.msk [vmem:[%s3065 + $0x190] sm:$0xff] %vm3279, %v3238
        %3305 = vst.msk [vmem:[%s3065 + $0x1a0] sm:$0xff] %vm3279, %v3240
        %3306 = vst.msk [vmem:[%s3065 + $0x1b0] sm:$0xff] %vm3279, %v3242
        %3307 = vst.msk [vmem:[%s3065 + $0x1c0] sm:$0xff] %vm3279, %v3244
        %3308 = vst.msk [vmem:[%s3065 + $0x1d0] sm:$0xff] %vm3279, %v3246
        %3309 = vst.msk [vmem:[%s3065 + $0x1e0] sm:$0xff] %vm3279, %v3248
        %v3310 = vrot.slane %v2829, 1
        %v3311 = vor.u32 %v2826, %v3310
        %v3312 = vrot.slane %v2836, 1
        %v3313 = vor.u32 %v2833, %v3312
        %v3314 = vrot.slane %v2843, 1
        %v3315 = vor.u32 %v2840, %v3314
        %v3316 = vrot.slane %v2850, 1
        %v3317 = vor.u32 %v2847, %v3316
        %v3318 = vrot.slane %v2857, 1
        %v3319 = vor.u32 %v2854, %v3318
        %v3320 = vrot.slane %v2864, 1
        %v3321 = vor.u32 %v2861, %v3320
        %v3322 = vrot.slane %v2871, 1
        %v3323 = vor.u32 %v2868, %v3322
        %v3324 = vrot.slane %v2878, 1
        %v3325 = vor.u32 %v2875, %v3324
        %v3326 = vrot.slane %v2885, 1
        %v3327 = vor.u32 %v2882, %v3326
        %v3328 = vrot.slane %v2892, 1
        %v3329 = vor.u32 %v2889, %v3328
        %v3330 = vrot.slane %v2899, 1
        %v3331 = vor.u32 %v2896, %v3330
        %v3332 = vrot.slane %v2906, 1
        %v3333 = vor.u32 %v2903, %v3332
        %v3334 = vrot.slane %v2913, 1
        %v3335 = vor.u32 %v2910, %v3334
        %v3336 = vrot.slane %v2920, 1
        %v3337 = vor.u32 %v2917, %v3336
        %v3338 = vrot.slane %v2927, 1
        %v3339 = vor.u32 %v2924, %v3338
        %v3340 = vrot.slane %v2934, 1
        %v3341 = vor.u32 %v2931, %v3340
        %v3342 = vrot.slane %v2941, 1
        %v3343 = vor.u32 %v2938, %v3342
        %v3344 = vrot.slane %v2948, 1
        %v3345 = vor.u32 %v2945, %v3344
        %v3346 = vrot.slane %v2955, 1
        %v3347 = vor.u32 %v2952, %v3346
        %v3348 = vrot.slane %v2962, 1
        %v3349 = vor.u32 %v2959, %v3348
        %v3350 = vrot.slane %v2969, 1
        %v3351 = vor.u32 %v2966, %v3350
        %v3352 = vrot.slane %v2976, 1
        %v3353 = vor.u32 %v2973, %v3352
        %v3354 = vrot.slane %v2983, 1
        %v3355 = vor.u32 %v2980, %v3354
        %v3356 = vrot.slane %v2990, 1
        %v3357 = vor.u32 %v2987, %v3356
        %v3358 = vrot.slane %v2997, 1
        %v3359 = vor.u32 %v2994, %v3358
        %v3360 = vrot.slane %v3004, 1
        %v3361 = vor.u32 %v3001, %v3360
        %v3362 = vrot.slane %v3011, 1
        %v3363 = vor.u32 %v3008, %v3362
        %v3364 = vrot.slane %v3018, 1
        %v3365 = vor.u32 %v3015, %v3364
        %v3366 = vrot.slane %v3025, 1
        %v3367 = vor.u32 %v3022, %v3366
        %v3368 = vrot.slane %v3032, 1
        %v3369 = vor.u32 %v3029, %v3368
        %3370 = vrot.lane.b32.xlu0 %v3311, 32
        %v3371 = vpop.permute.xlu0 %3370
        %3372 = vrot.lane.b32.xlu0 %v3313, 32
        %v3373 = vpop.permute.xlu0 %3372
        %3374 = vrot.lane.b32.xlu0 %v3315, 32
        %v3375 = vpop.permute.xlu0 %3374
        %3376 = vrot.lane.b32.xlu0 %v3317, 32
        %v3377 = vpop.permute.xlu0 %3376
        %3378 = vrot.lane.b32.xlu0 %v3319, 32
        %v3379 = vpop.permute.xlu0 %3378
        %3380 = vrot.lane.b32.xlu0 %v3321, 32
        %v3381 = vpop.permute.xlu0 %3380
        %3382 = vrot.lane.b32.xlu0 %v3323, 32
        %v3383 = vpop.permute.xlu0 %3382
        %3384 = vrot.lane.b32.xlu0 %v3325, 32
        %v3385 = vpop.permute.xlu0 %3384
        %3386 = vrot.lane.b32.xlu0 %v3327, 32
        %v3387 = vpop.permute.xlu0 %3386
        %3388 = vrot.lane.b32.xlu0 %v3329, 32
        %v3389 = vpop.permute.xlu0 %3388
        %3390 = vrot.lane.b32.xlu0 %v3331, 32
        %v3391 = vpop.permute.xlu0 %3390
        %3392 = vrot.lane.b32.xlu0 %v3333, 32
        %v3393 = vpop.permute.xlu0 %3392
        %3394 = vrot.lane.b32.xlu0 %v3335, 32
        %v3395 = vpop.permute.xlu0 %3394
        %3396 = vrot.lane.b32.xlu0 %v3337, 32
        %v3397 = vpop.permute.xlu0 %3396
        %3398 = vrot.lane.b32.xlu0 %v3339, 32
        %v3399 = vpop.permute.xlu0 %3398
        %3400 = vrot.lane.b32.xlu0 %v3341, 32
        %v3401 = vpop.permute.xlu0 %3400
        %3402 = vrot.lane.b32.xlu0 %v3343, 32
        %v3403 = vpop.permute.xlu0 %3402
        %3404 = vrot.lane.b32.xlu0 %v3345, 32
        %v3405 = vpop.permute.xlu0 %3404
        %3406 = vrot.lane.b32.xlu0 %v3347, 32
        %v3407 = vpop.permute.xlu0 %3406
        %3408 = vrot.lane.b32.xlu0 %v3349, 32
        %v3409 = vpop.permute.xlu0 %3408
        %3410 = vrot.lane.b32.xlu0 %v3351, 32
        %v3411 = vpop.permute.xlu0 %3410
        %3412 = vrot.lane.b32.xlu0 %v3353, 32
        %v3413 = vpop.permute.xlu0 %3412
        %3414 = vrot.lane.b32.xlu0 %v3355, 32
        %v3415 = vpop.permute.xlu0 %3414
        %3416 = vrot.lane.b32.xlu0 %v3357, 32
        %v3417 = vpop.permute.xlu0 %3416
        %3418 = vrot.lane.b32.xlu0 %v3359, 32
        %v3419 = vpop.permute.xlu0 %3418
        %3420 = vrot.lane.b32.xlu0 %v3361, 32
        %v3421 = vpop.permute.xlu0 %3420
        %3422 = vrot.lane.b32.xlu0 %v3363, 32
        %v3423 = vpop.permute.xlu0 %3422
        %3424 = vrot.lane.b32.xlu0 %v3365, 32
        %v3425 = vpop.permute.xlu0 %3424
        %3426 = vrot.lane.b32.xlu0 %v3367, 32
        %v3427 = vpop.permute.xlu0 %3426
        %3428 = vrot.lane.b32.xlu0 %v3369, 32
        %v3429 = vpop.permute.xlu0 %3428
        %vm3460 = vcmask 392448
        %vm3461 = vsmask.f32 7424
        %vm3462 = vmand %vm3460, %vm3461
        %v3463 = vld [vmem:[%s3065] sm:$0xff]
        %v3464 = vsel %vm3462, %v3371, %v3463
        %3465 = vst [vmem:[%s3065] sm:$0xff] %v3464
        %v3466 = vld [vmem:[%s3065 + $0x10] sm:$0xff]
        %v3467 = vsel %vm3462, %v3373, %v3466
        %3468 = vst [vmem:[%s3065 + $0x10] sm:$0xff] %v3467
        %v3469 = vld [vmem:[%s3065 + $0x20] sm:$0xff]
        %v3470 = vsel %vm3462, %v3375, %v3469
        %3471 = vst [vmem:[%s3065 + $0x20] sm:$0xff] %v3470
        %v3472 = vld [vmem:[%s3065 + $0x30] sm:$0xff]
        %v3473 = vsel %vm3462, %v3377, %v3472
        %3474 = vst [vmem:[%s3065 + $0x30] sm:$0xff] %v3473
        %v3475 = vld [vmem:[%s3065 + $0x40] sm:$0xff]
        %v3476 = vsel %vm3462, %v3379, %v3475
        %3477 = vst [vmem:[%s3065 + $0x40] sm:$0xff] %v3476
        %v3478 = vld [vmem:[%s3065 + $0x50] sm:$0xff]
        %v3479 = vsel %vm3462, %v3381, %v3478
        %3480 = vst [vmem:[%s3065 + $0x50] sm:$0xff] %v3479
        %v3481 = vld [vmem:[%s3065 + $0x60] sm:$0xff]
        %v3482 = vsel %vm3462, %v3383, %v3481
        %3483 = vst [vmem:[%s3065 + $0x60] sm:$0xff] %v3482
        %v3484 = vld [vmem:[%s3065 + $0x70] sm:$0xff]
        %v3485 = vsel %vm3462, %v3385, %v3484
        %3486 = vst [vmem:[%s3065 + $0x70] sm:$0xff] %v3485
        %v3487 = vld [vmem:[%s3065 + $0x80] sm:$0xff]
        %v3488 = vsel %vm3462, %v3387, %v3487
        %3489 = vst [vmem:[%s3065 + $0x80] sm:$0xff] %v3488
        %v3490 = vld [vmem:[%s3065 + $0x90] sm:$0xff]
        %v3491 = vsel %vm3462, %v3389, %v3490
        %3492 = vst [vmem:[%s3065 + $0x90] sm:$0xff] %v3491
        %v3493 = vld [vmem:[%s3065 + $0xa0] sm:$0xff]
        %v3494 = vsel %vm3462, %v3391, %v3493
        %3495 = vst [vmem:[%s3065 + $0xa0] sm:$0xff] %v3494
        %v3496 = vld [vmem:[%s3065 + $0xb0] sm:$0xff]
        %v3497 = vsel %vm3462, %v3393, %v3496
        %3498 = vst [vmem:[%s3065 + $0xb0] sm:$0xff] %v3497
        %v3499 = vld [vmem:[%s3065 + $0xc0] sm:$0xff]
        %v3500 = vsel %vm3462, %v3395, %v3499
        %3501 = vst [vmem:[%s3065 + $0xc0] sm:$0xff] %v3500
        %v3502 = vld [vmem:[%s3065 + $0xd0] sm:$0xff]
        %v3503 = vsel %vm3462, %v3397, %v3502
        %3504 = vst [vmem:[%s3065 + $0xd0] sm:$0xff] %v3503
        %v3505 = vld [vmem:[%s3065 + $0xe0] sm:$0xff]
        %v3506 = vsel %vm3462, %v3399, %v3505
        %3507 = vst [vmem:[%s3065 + $0xe0] sm:$0xff] %v3506
        %v3508 = vld [vmem:[%s3065 + $0x100] sm:$0xff]
        %v3509 = vsel %vm3462, %v3401, %v3508
        %3510 = vst [vmem:[%s3065 + $0x100] sm:$0xff] %v3509
        %v3511 = vld [vmem:[%s3065 + $0x110] sm:$0xff]
        %v3512 = vsel %vm3462, %v3403, %v3511
        %3513 = vst [vmem:[%s3065 + $0x110] sm:$0xff] %v3512
        %v3514 = vld [vmem:[%s3065 + $0x120] sm:$0xff]
        %v3515 = vsel %vm3462, %v3405, %v3514
        %3516 = vst [vmem:[%s3065 + $0x120] sm:$0xff] %v3515
        %v3517 = vld [vmem:[%s3065 + $0x130] sm:$0xff]
        %v3518 = vsel %vm3462, %v3407, %v3517
        %3519 = vst [vmem:[%s3065 + $0x130] sm:$0xff] %v3518
        %v3520 = vld [vmem:[%s3065 + $0x140] sm:$0xff]
        %v3521 = vsel %vm3462, %v3409, %v3520
        %3522 = vst [vmem:[%s3065 + $0x140] sm:$0xff] %v3521
        %v3523 = vld [vmem:[%s3065 + $0x150] sm:$0xff]
        %v3524 = vsel %vm3462, %v3411, %v3523
        %3525 = vst [vmem:[%s3065 + $0x150] sm:$0xff] %v3524
        %v3526 = vld [vmem:[%s3065 + $0x160] sm:$0xff]
        %v3527 = vsel %vm3462, %v3413, %v3526
        %3528 = vst [vmem:[%s3065 + $0x160] sm:$0xff] %v3527
        %v3529 = vld [vmem:[%s3065 + $0x170] sm:$0xff]
        %v3530 = vsel %vm3462, %v3415, %v3529
        %3531 = vst [vmem:[%s3065 + $0x170] sm:$0xff] %v3530
        %v3532 = vld [vmem:[%s3065 + $0x180] sm:$0xff]
        %v3533 = vsel %vm3462, %v3417, %v3532
        %3534 = vst [vmem:[%s3065 + $0x180] sm:$0xff] %v3533
        %v3535 = vld [vmem:[%s3065 + $0x190] sm:$0xff]
        %v3536 = vsel %vm3462, %v3419, %v3535
        %3537 = vst [vmem:[%s3065 + $0x190] sm:$0xff] %v3536
        %v3538 = vld [vmem:[%s3065 + $0x1a0] sm:$0xff]
        %v3539 = vsel %vm3462, %v3421, %v3538
        %3540 = vst [vmem:[%s3065 + $0x1a0] sm:$0xff] %v3539
        %v3541 = vld [vmem:[%s3065 + $0x1b0] sm:$0xff]
        %v3542 = vsel %vm3462, %v3423, %v3541
        %3543 = vst [vmem:[%s3065 + $0x1b0] sm:$0xff] %v3542
        %v3544 = vld [vmem:[%s3065 + $0x1c0] sm:$0xff]
        %v3545 = vsel %vm3462, %v3425, %v3544
        %3546 = vst [vmem:[%s3065 + $0x1c0] sm:$0xff] %v3545
        %v3547 = vld [vmem:[%s3065 + $0x1d0] sm:$0xff]
        %v3548 = vsel %vm3462, %v3427, %v3547
        %3549 = vst [vmem:[%s3065 + $0x1d0] sm:$0xff] %v3548
        %v3550 = vld [vmem:[%s3065 + $0x1e0] sm:$0xff]
        %v3551 = vsel %vm3462, %v3429, %v3550
        %3552 = vst [vmem:[%s3065 + $0x1e0] sm:$0xff] %v3551
        %v3554 = vshrl.u32 %v2808, 16
        %v3556 = vrot.slane %v3554, 7
        %v3557 = vshll.u32 %v2808, 16
        %v3559 = vor.u32 %v3556, %v3557
        %v3561 = vshrl.u32 %v2824, 16
        %v3563 = vrot.slane %v3561, 7
        %v3564 = vshll.u32 %v2824, 16
        %v3566 = vor.u32 %v3563, %v3564
        %3567 = vrot.lane.b32.xlu0 %v2831, 48
        %v3568 = vpop.permute.xlu0 %3567
        %3569 = vrot.lane.b32.xlu0 %v2838, 48
        %v3570 = vpop.permute.xlu0 %3569
        %3571 = vrot.lane.b32.xlu0 %v2845, 48
        %v3572 = vpop.permute.xlu0 %3571
        %3573 = vrot.lane.b32.xlu0 %v2852, 48
        %v3574 = vpop.permute.xlu0 %3573
        %3575 = vrot.lane.b32.xlu0 %v2859, 48
        %v3576 = vpop.permute.xlu0 %3575
        %3577 = vrot.lane.b32.xlu0 %v2866, 48
        %v3578 = vpop.permute.xlu0 %3577
        %3579 = vrot.lane.b32.xlu0 %v2873, 48
        %v3580 = vpop.permute.xlu0 %3579
        %3581 = vrot.lane.b32.xlu0 %v2880, 48
        %v3582 = vpop.permute.xlu0 %3581
        %3583 = vrot.lane.b32.xlu0 %v2887, 48
        %v3584 = vpop.permute.xlu0 %3583
        %3585 = vrot.lane.b32.xlu0 %v2894, 48
        %v3586 = vpop.permute.xlu0 %3585
        %3587 = vrot.lane.b32.xlu0 %v2901, 48
        %v3588 = vpop.permute.xlu0 %3587
        %3589 = vrot.lane.b32.xlu0 %v2908, 48
        %v3590 = vpop.permute.xlu0 %3589
        %3591 = vrot.lane.b32.xlu0 %v2915, 48
        %v3592 = vpop.permute.xlu0 %3591
        %3593 = vrot.lane.b32.xlu0 %v2922, 48
        %v3594 = vpop.permute.xlu0 %3593
        %3595 = vrot.lane.b32.xlu0 %v2929, 48
        %v3596 = vpop.permute.xlu0 %3595
        %3597 = vrot.lane.b32.xlu0 %v3559, 48
        %v3598 = vpop.permute.xlu0 %3597
        %3599 = vrot.lane.b32.xlu0 %v2936, 48
        %v3600 = vpop.permute.xlu0 %3599
        %3601 = vrot.lane.b32.xlu0 %v2943, 48
        %v3602 = vpop.permute.xlu0 %3601
        %3603 = vrot.lane.b32.xlu0 %v2950, 48
        %v3604 = vpop.permute.xlu0 %3603
        %3605 = vrot.lane.b32.xlu0 %v2957, 48
        %v3606 = vpop.permute.xlu0 %3605
        %3607 = vrot.lane.b32.xlu0 %v2964, 48
        %v3608 = vpop.permute.xlu0 %3607
        %3609 = vrot.lane.b32.xlu0 %v2971, 48
        %v3610 = vpop.permute.xlu0 %3609
        %3611 = vrot.lane.b32.xlu0 %v2978, 48
        %v3612 = vpop.permute.xlu0 %3611
        %3613 = vrot.lane.b32.xlu0 %v2985, 48
        %v3614 = vpop.permute.xlu0 %3613
        %3615 = vrot.lane.b32.xlu0 %v2992, 48
        %v3616 = vpop.permute.xlu0 %3615
        %3617 = vrot.lane.b32.xlu0 %v2999, 48
        %v3618 = vpop.permute.xlu0 %3617
        %3619 = vrot.lane.b32.xlu0 %v3006, 48
        %v3620 = vpop.permute.xlu0 %3619
        %3621 = vrot.lane.b32.xlu0 %v3013, 48
        %v3622 = vpop.permute.xlu0 %3621
        %3623 = vrot.lane.b32.xlu0 %v3020, 48
        %v3624 = vpop.permute.xlu0 %3623
        %3625 = vrot.lane.b32.xlu0 %v3027, 48
        %v3626 = vpop.permute.xlu0 %3625
        %3627 = vrot.lane.b32.xlu0 %v3034, 48
        %v3628 = vpop.permute.xlu0 %3627
        %3629 = vrot.lane.b32.xlu0 %v3566, 48
        %v3630 = vpop.permute.xlu0 %3629
        %vm3663 = vcmask 523648
        %vm3664 = vmand %vm3663, %vm3067
        %v3665 = vld [vmem:[#allocation2] sm:$0xff]
        %v3666 = vsel %vm3664, %v3568, %v3665
        %3667 = vst [vmem:[#allocation2] sm:$0xff] %v3666
        %v3668 = vld [vmem:[#allocation2 + $0x10] sm:$0xff]
        %v3669 = vsel %vm3664, %v3570, %v3668
        %3670 = vst [vmem:[#allocation2 + $0x10] sm:$0xff] %v3669
        %v3671 = vld [vmem:[#allocation2 + $0x20] sm:$0xff]
        %v3672 = vsel %vm3664, %v3572, %v3671
        %3673 = vst [vmem:[#allocation2 + $0x20] sm:$0xff] %v3672
        %v3674 = vld [vmem:[#allocation2 + $0x30] sm:$0xff]
        %v3675 = vsel %vm3664, %v3574, %v3674
        %3676 = vst [vmem:[#allocation2 + $0x30] sm:$0xff] %v3675
        %v3677 = vld [vmem:[#allocation2 + $0x40] sm:$0xff]
        %v3678 = vsel %vm3664, %v3576, %v3677
        %3679 = vst [vmem:[#allocation2 + $0x40] sm:$0xff] %v3678
        %v3680 = vld [vmem:[#allocation2 + $0x50] sm:$0xff]
        %v3681 = vsel %vm3664, %v3578, %v3680
        %3682 = vst [vmem:[#allocation2 + $0x50] sm:$0xff] %v3681
        %v3683 = vld [vmem:[#allocation2 + $0x60] sm:$0xff]
        %v3684 = vsel %vm3664, %v3580, %v3683
        %3685 = vst [vmem:[#allocation2 + $0x60] sm:$0xff] %v3684
        %v3686 = vld [vmem:[#allocation2 + $0x70] sm:$0xff]
        %v3687 = vsel %vm3664, %v3582, %v3686
        %3688 = vst [vmem:[#allocation2 + $0x70] sm:$0xff] %v3687
        %v3689 = vld [vmem:[#allocation2 + $0x80] sm:$0xff]
        %v3690 = vsel %vm3664, %v3584, %v3689
        %3691 = vst [vmem:[#allocation2 + $0x80] sm:$0xff] %v3690
        %v3692 = vld [vmem:[#allocation2 + $0x90] sm:$0xff]
        %v3693 = vsel %vm3664, %v3586, %v3692
        %3694 = vst [vmem:[#allocation2 + $0x90] sm:$0xff] %v3693
        %v3695 = vld [vmem:[#allocation2 + $0xa0] sm:$0xff]
        %v3696 = vsel %vm3664, %v3588, %v3695
        %3697 = vst [vmem:[#allocation2 + $0xa0] sm:$0xff] %v3696
        %v3698 = vld [vmem:[#allocation2 + $0xb0] sm:$0xff]
        %v3699 = vsel %vm3664, %v3590, %v3698
        %3700 = vst [vmem:[#allocation2 + $0xb0] sm:$0xff] %v3699
        %v3701 = vld [vmem:[#allocation2 + $0xc0] sm:$0xff]
        %v3702 = vsel %vm3664, %v3592, %v3701
        %3703 = vst [vmem:[#allocation2 + $0xc0] sm:$0xff] %v3702
        %v3704 = vld [vmem:[#allocation2 + $0xd0] sm:$0xff]
        %v3705 = vsel %vm3664, %v3594, %v3704
        %3706 = vst [vmem:[#allocation2 + $0xd0] sm:$0xff] %v3705
        %v3707 = vld [vmem:[#allocation2 + $0xe0] sm:$0xff]
        %v3708 = vsel %vm3664, %v3596, %v3707
        %3709 = vst [vmem:[#allocation2 + $0xe0] sm:$0xff] %v3708
        %v3710 = vld [vmem:[#allocation2 + $0xf0] sm:$0xff]
        %v3711 = vsel %vm3664, %v3598, %v3710
        %3712 = vst [vmem:[#allocation2 + $0xf0] sm:$0xff] %v3711
        %v3713 = vld [vmem:[#allocation2 + $0x100] sm:$0xff]
        %v3714 = vsel %vm3664, %v3600, %v3713
        %3715 = vst [vmem:[#allocation2 + $0x100] sm:$0xff] %v3714
        %v3716 = vld [vmem:[#allocation2 + $0x110] sm:$0xff]
        %v3717 = vsel %vm3664, %v3602, %v3716
        %3718 = vst [vmem:[#allocation2 + $0x110] sm:$0xff] %v3717
        %v3719 = vld [vmem:[#allocation2 + $0x120] sm:$0xff]
        %v3720 = vsel %vm3664, %v3604, %v3719
        %3721 = vst [vmem:[#allocation2 + $0x120] sm:$0xff] %v3720
        %v3722 = vld [vmem:[#allocation2 + $0x130] sm:$0xff]
        %v3723 = vsel %vm3664, %v3606, %v3722
        %3724 = vst [vmem:[#allocation2 + $0x130] sm:$0xff] %v3723
        %v3725 = vld [vmem:[#allocation2 + $0x140] sm:$0xff]
        %v3726 = vsel %vm3664, %v3608, %v3725
        %3727 = vst [vmem:[#allocation2 + $0x140] sm:$0xff] %v3726
        %v3728 = vld [vmem:[#allocation2 + $0x150] sm:$0xff]
        %v3729 = vsel %vm3664, %v3610, %v3728
        %3730 = vst [vmem:[#allocation2 + $0x150] sm:$0xff] %v3729
        %v3731 = vld [vmem:[#allocation2 + $0x160] sm:$0xff]
        %v3732 = vsel %vm3664, %v3612, %v3731
        %3733 = vst [vmem:[#allocation2 + $0x160] sm:$0xff] %v3732
        %v3734 = vld [vmem:[#allocation2 + $0x170] sm:$0xff]
        %v3735 = vsel %vm3664, %v3614, %v3734
        %3736 = vst [vmem:[#allocation2 + $0x170] sm:$0xff] %v3735
        %v3737 = vld [vmem:[#allocation2 + $0x180] sm:$0xff]
        %v3738 = vsel %vm3664, %v3616, %v3737
        %3739 = vst [vmem:[#allocation2 + $0x180] sm:$0xff] %v3738
        %v3740 = vld [vmem:[#allocation2 + $0x190] sm:$0xff]
        %v3741 = vsel %vm3664, %v3618, %v3740
        %3742 = vst [vmem:[#allocation2 + $0x190] sm:$0xff] %v3741
        %v3743 = vld [vmem:[#allocation2 + $0x1a0] sm:$0xff]
        %v3744 = vsel %vm3664, %v3620, %v3743
        %3745 = vst [vmem:[#allocation2 + $0x1a0] sm:$0xff] %v3744
        %v3746 = vld [vmem:[#allocation2 + $0x1b0] sm:$0xff]
        %v3747 = vsel %vm3664, %v3622, %v3746
        %3748 = vst [vmem:[#allocation2 + $0x1b0] sm:$0xff] %v3747
        %v3749 = vld [vmem:[#allocation2 + $0x1c0] sm:$0xff]
        %v3750 = vsel %vm3664, %v3624, %v3749
        %3751 = vst [vmem:[#allocation2 + $0x1c0] sm:$0xff] %v3750
        %v3752 = vld [vmem:[#allocation2 + $0x1d0] sm:$0xff]
        %v3753 = vsel %vm3664, %v3626, %v3752
        %3754 = vst [vmem:[#allocation2 + $0x1d0] sm:$0xff] %v3753
        %v3755 = vld [vmem:[#allocation2 + $0x1e0] sm:$0xff]
        %v3756 = vsel %vm3664, %v3628, %v3755
        %3757 = vst [vmem:[#allocation2 + $0x1e0] sm:$0xff] %v3756
        %v3758 = vld [vmem:[#allocation2 + $0x1f0] sm:$0xff]
        %v3759 = vsel %vm3664, %v3630, %v3758
        %3760 = vst [vmem:[#allocation2 + $0x1f0] sm:$0xff] %v3759
        %3763 = vrot.lane.b32.xlu0 %v2793, 64
        %v3764 = vpop.permute.xlu0 %3763
        %3765 = vrot.lane.b32.xlu0 %v2794, 64
        %v3766 = vpop.permute.xlu0 %3765
        %3767 = vrot.lane.b32.xlu0 %v2795, 64
        %v3768 = vpop.permute.xlu0 %3767
        %3769 = vrot.lane.b32.xlu0 %v2796, 64
        %v3770 = vpop.permute.xlu0 %3769
        %3771 = vrot.lane.b32.xlu0 %v2797, 64
        %v3772 = vpop.permute.xlu0 %3771
        %3773 = vrot.lane.b32.xlu0 %v2798, 64
        %v3774 = vpop.permute.xlu0 %3773
        %3775 = vrot.lane.b32.xlu0 %v2799, 64
        %v3776 = vpop.permute.xlu0 %3775
        %3777 = vrot.lane.b32.xlu0 %v2800, 64
        %v3778 = vpop.permute.xlu0 %3777
        %3779 = vrot.lane.b32.xlu0 %v2801, 64
        %v3780 = vpop.permute.xlu0 %3779
        %3781 = vrot.lane.b32.xlu0 %v2802, 64
        %v3782 = vpop.permute.xlu0 %3781
        %3783 = vrot.lane.b32.xlu0 %v2803, 64
        %v3784 = vpop.permute.xlu0 %3783
        %3785 = vrot.lane.b32.xlu0 %v2804, 64
        %v3786 = vpop.permute.xlu0 %3785
        %3787 = vrot.lane.b32.xlu0 %v2805, 64
        %v3788 = vpop.permute.xlu0 %3787
        %3789 = vrot.lane.b32.xlu0 %v2806, 64
        %v3790 = vpop.permute.xlu0 %3789
        %3791 = vrot.lane.b32.xlu0 %v2807, 64
        %v3792 = vpop.permute.xlu0 %3791
        %3793 = vrot.lane.b32.xlu0 %v2808, 64
        %v3794 = vpop.permute.xlu0 %3793
        %3795 = vrot.lane.b32.xlu0 %v2809, 64
        %v3796 = vpop.permute.xlu0 %3795
        %3797 = vrot.lane.b32.xlu0 %v2810, 64
        %v3798 = vpop.permute.xlu0 %3797
        %3799 = vrot.lane.b32.xlu0 %v2811, 64
        %v3800 = vpop.permute.xlu0 %3799
        %3801 = vrot.lane.b32.xlu0 %v2812, 64
        %v3802 = vpop.permute.xlu0 %3801
        %3803 = vrot.lane.b32.xlu0 %v2813, 64
        %v3804 = vpop.permute.xlu0 %3803
        %3805 = vrot.lane.b32.xlu0 %v2814, 64
        %v3806 = vpop.permute.xlu0 %3805
        %3807 = vrot.lane.b32.xlu0 %v2815, 64
        %v3808 = vpop.permute.xlu0 %3807
        %3809 = vrot.lane.b32.xlu0 %v2816, 64
        %v3810 = vpop.permute.xlu0 %3809
        %3811 = vrot.lane.b32.xlu0 %v2817, 64
        %v3812 = vpop.permute.xlu0 %3811
        %3813 = vrot.lane.b32.xlu0 %v2818, 64
        %v3814 = vpop.permute.xlu0 %3813
        %3815 = vrot.lane.b32.xlu0 %v2819, 64
        %v3816 = vpop.permute.xlu0 %3815
        %3817 = vrot.lane.b32.xlu0 %v2820, 64
        %v3818 = vpop.permute.xlu0 %3817
        %3819 = vrot.lane.b32.xlu0 %v2821, 64
        %v3820 = vpop.permute.xlu0 %3819
        %3821 = vrot.lane.b32.xlu0 %v2822, 64
        %v3822 = vpop.permute.xlu0 %3821
        %3823 = vrot.lane.b32.xlu0 %v2823, 64
        %v3824 = vpop.permute.xlu0 %3823
        %3825 = vrot.lane.b32.xlu0 %v2824, 64
        %v3826 = vpop.permute.xlu0 %3825
        %vm3859 = vcmask 654848
        %3860 = vst.msk [vmem:[#allocation2] sm:$0xff] %vm3859, %v3764
        %3861 = vst.msk [vmem:[#allocation2 + $0x10] sm:$0xff] %vm3859, %v3766
        %3862 = vst.msk [vmem:[#allocation2 + $0x20] sm:$0xff] %vm3859, %v3768
        %3863 = vst.msk [vmem:[#allocation2 + $0x30] sm:$0xff] %vm3859, %v3770
        %3864 = vst.msk [vmem:[#allocation2 + $0x40] sm:$0xff] %vm3859, %v3772
        %3865 = vst.msk [vmem:[#allocation2 + $0x50] sm:$0xff] %vm3859, %v3774
        %3866 = vst.msk [vmem:[#allocation2 + $0x60] sm:$0xff] %vm3859, %v3776
        %3867 = vst.msk [vmem:[#allocation2 + $0x70] sm:$0xff] %vm3859, %v3778
        %3868 = vst.msk [vmem:[#allocation2 + $0x80] sm:$0xff] %vm3859, %v3780
        %3869 = vst.msk [vmem:[#allocation2 + $0x90] sm:$0xff] %vm3859, %v3782
        %3870 = vst.msk [vmem:[#allocation2 + $0xa0] sm:$0xff] %vm3859, %v3784
        %3871 = vst.msk [vmem:[#allocation2 + $0xb0] sm:$0xff] %vm3859, %v3786
        %3872 = vst.msk [vmem:[#allocation2 + $0xc0] sm:$0xff] %vm3859, %v3788
        %3873 = vst.msk [vmem:[#allocation2 + $0xd0] sm:$0xff] %vm3859, %v3790
        %3874 = vst.msk [vmem:[#allocation2 + $0xe0] sm:$0xff] %vm3859, %v3792
        %3875 = vst.msk [vmem:[#allocation2 + $0xf0] sm:$0xff] %vm3859, %v3794
        %3876 = vst.msk [vmem:[#allocation2 + $0x100] sm:$0xff] %vm3859, %v3796
        %3877 = vst.msk [vmem:[#allocation2 + $0x110] sm:$0xff] %vm3859, %v3798
        %3878 = vst.msk [vmem:[#allocation2 + $0x120] sm:$0xff] %vm3859, %v3800
        %3879 = vst.msk [vmem:[#allocation2 + $0x130] sm:$0xff] %vm3859, %v3802
        %3880 = vst.msk [vmem:[#allocation2 + $0x140] sm:$0xff] %vm3859, %v3804
        %3881 = vst.msk [vmem:[#allocation2 + $0x150] sm:$0xff] %vm3859, %v3806
        %3882 = vst.msk [vmem:[#allocation2 + $0x160] sm:$0xff] %vm3859, %v3808
        %3883 = vst.msk [vmem:[#allocation2 + $0x170] sm:$0xff] %vm3859, %v3810
        %3884 = vst.msk [vmem:[#allocation2 + $0x180] sm:$0xff] %vm3859, %v3812
        %3885 = vst.msk [vmem:[#allocation2 + $0x190] sm:$0xff] %vm3859, %v3814
        %3886 = vst.msk [vmem:[#allocation2 + $0x1a0] sm:$0xff] %vm3859, %v3816
        %3887 = vst.msk [vmem:[#allocation2 + $0x1b0] sm:$0xff] %vm3859, %v3818
        %3888 = vst.msk [vmem:[#allocation2 + $0x1c0] sm:$0xff] %vm3859, %v3820
        %3889 = vst.msk [vmem:[#allocation2 + $0x1d0] sm:$0xff] %vm3859, %v3822
        %3890 = vst.msk [vmem:[#allocation2 + $0x1e0] sm:$0xff] %vm3859, %v3824
        %3891 = vst.msk [vmem:[#allocation2 + $0x1f0] sm:$0xff] %vm3859, %v3826
        %v3892 = vrot.slane %v3557, 1
        %v3893 = vor.u32 %v3554, %v3892
        %v3894 = vrot.slane %v3564, 1
        %v3895 = vor.u32 %v3561, %v3894
        %3896 = vrot.lane.b32.xlu0 %v3311, 80
        %v3897 = vpop.permute.xlu0 %3896
        %3898 = vrot.lane.b32.xlu0 %v3313, 80
        %v3899 = vpop.permute.xlu0 %3898
        %3900 = vrot.lane.b32.xlu0 %v3315, 80
        %v3901 = vpop.permute.xlu0 %3900
        %3902 = vrot.lane.b32.xlu0 %v3317, 80
        %v3903 = vpop.permute.xlu0 %3902
        %3904 = vrot.lane.b32.xlu0 %v3319, 80
        %v3905 = vpop.permute.xlu0 %3904
        %3906 = vrot.lane.b32.xlu0 %v3321, 80
        %v3907 = vpop.permute.xlu0 %3906
        %3908 = vrot.lane.b32.xlu0 %v3323, 80
        %v3909 = vpop.permute.xlu0 %3908
        %3910 = vrot.lane.b32.xlu0 %v3325, 80
        %v3911 = vpop.permute.xlu0 %3910
        %3912 = vrot.lane.b32.xlu0 %v3327, 80
        %v3913 = vpop.permute.xlu0 %3912
        %3914 = vrot.lane.b32.xlu0 %v3329, 80
        %v3915 = vpop.permute.xlu0 %3914
        %3916 = vrot.lane.b32.xlu0 %v3331, 80
        %v3917 = vpop.permute.xlu0 %3916
        %3918 = vrot.lane.b32.xlu0 %v3333, 80
        %v3919 = vpop.permute.xlu0 %3918
        %3920 = vrot.lane.b32.xlu0 %v3335, 80
        %v3921 = vpop.permute.xlu0 %3920
        %3922 = vrot.lane.b32.xlu0 %v3337, 80
        %v3923 = vpop.permute.xlu0 %3922
        %3924 = vrot.lane.b32.xlu0 %v3339, 80
        %v3925 = vpop.permute.xlu0 %3924
        %3926 = vrot.lane.b32.xlu0 %v3893, 80
        %v3927 = vpop.permute.xlu0 %3926
        %3928 = vrot.lane.b32.xlu0 %v3341, 80
        %v3929 = vpop.permute.xlu0 %3928
        %3930 = vrot.lane.b32.xlu0 %v3343, 80
        %v3931 = vpop.permute.xlu0 %3930
        %3932 = vrot.lane.b32.xlu0 %v3345, 80
        %v3933 = vpop.permute.xlu0 %3932
        %3934 = vrot.lane.b32.xlu0 %v3347, 80
        %v3935 = vpop.permute.xlu0 %3934
        %3936 = vrot.lane.b32.xlu0 %v3349, 80
        %v3937 = vpop.permute.xlu0 %3936
        %3938 = vrot.lane.b32.xlu0 %v3351, 80
        %v3939 = vpop.permute.xlu0 %3938
        %3940 = vrot.lane.b32.xlu0 %v3353, 80
        %v3941 = vpop.permute.xlu0 %3940
        %3942 = vrot.lane.b32.xlu0 %v3355, 80
        %v3943 = vpop.permute.xlu0 %3942
        %3944 = vrot.lane.b32.xlu0 %v3357, 80
        %v3945 = vpop.permute.xlu0 %3944
        %3946 = vrot.lane.b32.xlu0 %v3359, 80
        %v3947 = vpop.permute.xlu0 %3946
        %3948 = vrot.lane.b32.xlu0 %v3361, 80
        %v3949 = vpop.permute.xlu0 %3948
        %3950 = vrot.lane.b32.xlu0 %v3363, 80
        %v3951 = vpop.permute.xlu0 %3950
        %3952 = vrot.lane.b32.xlu0 %v3365, 80
        %v3953 = vpop.permute.xlu0 %3952
        %3954 = vrot.lane.b32.xlu0 %v3367, 80
        %v3955 = vpop.permute.xlu0 %3954
        %3956 = vrot.lane.b32.xlu0 %v3369, 80
        %v3957 = vpop.permute.xlu0 %3956
        %3958 = vrot.lane.b32.xlu0 %v3895, 80
        %v3959 = vpop.permute.xlu0 %3958
        %vm3992 = vcmask 786048
        %vm3993 = vmand %vm3992, %vm3461
        %v3994 = vld [vmem:[#allocation2] sm:$0xff]
        %v3995 = vsel %vm3993, %v3897, %v3994
        %3996 = vst [vmem:[#allocation2] sm:$0xff] %v3995
        %v3997 = vld [vmem:[#allocation2 + $0x10] sm:$0xff]
        %v3998 = vsel %vm3993, %v3899, %v3997
        %3999 = vst [vmem:[#allocation2 + $0x10] sm:$0xff] %v3998
        %v4000 = vld [vmem:[#allocation2 + $0x20] sm:$0xff]
        %v4001 = vsel %vm3993, %v3901, %v4000
        %4002 = vst [vmem:[#allocation2 + $0x20] sm:$0xff] %v4001
        %v4003 = vld [vmem:[#allocation2 + $0x30] sm:$0xff]
        %v4004 = vsel %vm3993, %v3903, %v4003
        %4005 = vst [vmem:[#allocation2 + $0x30] sm:$0xff] %v4004
        %v4006 = vld [vmem:[#allocation2 + $0x40] sm:$0xff]
        %v4007 = vsel %vm3993, %v3905, %v4006
        %4008 = vst [vmem:[#allocation2 + $0x40] sm:$0xff] %v4007
        %v4009 = vld [vmem:[#allocation2 + $0x50] sm:$0xff]
        %v4010 = vsel %vm3993, %v3907, %v4009
        %4011 = vst [vmem:[#allocation2 + $0x50] sm:$0xff] %v4010
        %v4012 = vld [vmem:[#allocation2 + $0x60] sm:$0xff]
        %v4013 = vsel %vm3993, %v3909, %v4012
        %4014 = vst [vmem:[#allocation2 + $0x60] sm:$0xff] %v4013
        %v4015 = vld [vmem:[#allocation2 + $0x70] sm:$0xff]
        %v4016 = vsel %vm3993, %v3911, %v4015
        %4017 = vst [vmem:[#allocation2 + $0x70] sm:$0xff] %v4016
        %v4018 = vld [vmem:[#allocation2 + $0x80] sm:$0xff]
        %v4019 = vsel %vm3993, %v3913, %v4018
        %4020 = vst [vmem:[#allocation2 + $0x80] sm:$0xff] %v4019
        %v4021 = vld [vmem:[#allocation2 + $0x90] sm:$0xff]
        %v4022 = vsel %vm3993, %v3915, %v4021
        %4023 = vst [vmem:[#allocation2 + $0x90] sm:$0xff] %v4022
        %v4024 = vld [vmem:[#allocation2 + $0xa0] sm:$0xff]
        %v4025 = vsel %vm3993, %v3917, %v4024
        %4026 = vst [vmem:[#allocation2 + $0xa0] sm:$0xff] %v4025
        %v4027 = vld [vmem:[#allocation2 + $0xb0] sm:$0xff]
        %v4028 = vsel %vm3993, %v3919, %v4027
        %4029 = vst [vmem:[#allocation2 + $0xb0] sm:$0xff] %v4028
        %v4030 = vld [vmem:[#allocation2 + $0xc0] sm:$0xff]
        %v4031 = vsel %vm3993, %v3921, %v4030
        %4032 = vst [vmem:[#allocation2 + $0xc0] sm:$0xff] %v4031
        %v4033 = vld [vmem:[#allocation2 + $0xd0] sm:$0xff]
        %v4034 = vsel %vm3993, %v3923, %v4033
        %4035 = vst [vmem:[#allocation2 + $0xd0] sm:$0xff] %v4034
        %v4036 = vld [vmem:[#allocation2 + $0xe0] sm:$0xff]
        %v4037 = vsel %vm3993, %v3925, %v4036
        %4038 = vst [vmem:[#allocation2 + $0xe0] sm:$0xff] %v4037
        %v4039 = vld [vmem:[#allocation2 + $0xf0] sm:$0xff]
        %v4040 = vsel %vm3993, %v3927, %v4039
        %4041 = vst [vmem:[#allocation2 + $0xf0] sm:$0xff] %v4040
        %v4042 = vld [vmem:[#allocation2 + $0x100] sm:$0xff]
        %v4043 = vsel %vm3993, %v3929, %v4042
        %4044 = vst [vmem:[#allocation2 + $0x100] sm:$0xff] %v4043
        %v4045 = vld [vmem:[#allocation2 + $0x110] sm:$0xff]
        %v4046 = vsel %vm3993, %v3931, %v4045
        %4047 = vst [vmem:[#allocation2 + $0x110] sm:$0xff] %v4046
        %v4048 = vld [vmem:[#allocation2 + $0x120] sm:$0xff]
        %v4049 = vsel %vm3993, %v3933, %v4048
        %4050 = vst [vmem:[#allocation2 + $0x120] sm:$0xff] %v4049
        %v4051 = vld [vmem:[#allocation2 + $0x130] sm:$0xff]
        %v4052 = vsel %vm3993, %v3935, %v4051
        %4053 = vst [vmem:[#allocation2 + $0x130] sm:$0xff] %v4052
        %v4054 = vld [vmem:[#allocation2 + $0x140] sm:$0xff]
        %v4055 = vsel %vm3993, %v3937, %v4054
        %4056 = vst [vmem:[#allocation2 + $0x140] sm:$0xff] %v4055
        %v4057 = vld [vmem:[#allocation2 + $0x150] sm:$0xff]
        %v4058 = vsel %vm3993, %v3939, %v4057
        %4059 = vst [vmem:[#allocation2 + $0x150] sm:$0xff] %v4058
        %v4060 = vld [vmem:[#allocation2 + $0x160] sm:$0xff]
        %v4061 = vsel %vm3993, %v3941, %v4060
        %4062 = vst [vmem:[#allocation2 + $0x160] sm:$0xff] %v4061
        %v4063 = vld [vmem:[#allocation2 + $0x170] sm:$0xff]
        %v4064 = vsel %vm3993, %v3943, %v4063
        %4065 = vst [vmem:[#allocation2 + $0x170] sm:$0xff] %v4064
        %v4066 = vld [vmem:[#allocation2 + $0x180] sm:$0xff]
        %v4067 = vsel %vm3993, %v3945, %v4066
        %4068 = vst [vmem:[#allocation2 + $0x180] sm:$0xff] %v4067
        %v4069 = vld [vmem:[#allocation2 + $0x190] sm:$0xff]
        %v4070 = vsel %vm3993, %v3947, %v4069
        %4071 = vst [vmem:[#allocation2 + $0x190] sm:$0xff] %v4070
        %v4072 = vld [vmem:[#allocation2 + $0x1a0] sm:$0xff]
        %v4073 = vsel %vm3993, %v3949, %v4072
        %4074 = vst [vmem:[#allocation2 + $0x1a0] sm:$0xff] %v4073
        %v4075 = vld [vmem:[#allocation2 + $0x1b0] sm:$0xff]
        %v4076 = vsel %vm3993, %v3951, %v4075
        %4077 = vst [vmem:[#allocation2 + $0x1b0] sm:$0xff] %v4076
        %v4078 = vld [vmem:[#allocation2 + $0x1c0] sm:$0xff]
        %v4079 = vsel %vm3993, %v3953, %v4078
        %4080 = vst [vmem:[#allocation2 + $0x1c0] sm:$0xff] %v4079
        %v4081 = vld [vmem:[#allocation2 + $0x1d0] sm:$0xff]
        %v4082 = vsel %vm3993, %v3955, %v4081
        %4083 = vst [vmem:[#allocation2 + $0x1d0] sm:$0xff] %v4082
        %v4084 = vld [vmem:[#allocation2 + $0x1e0] sm:$0xff]
        %v4085 = vsel %vm3993, %v3957, %v4084
        %4086 = vst [vmem:[#allocation2 + $0x1e0] sm:$0xff] %v4085
        %v4087 = vld [vmem:[#allocation2 + $0x1f0] sm:$0xff]
        %v4088 = vsel %vm3993, %v3959, %v4087
        %4089 = vst [vmem:[#allocation2 + $0x1f0] sm:$0xff] %v4088
        %4090 = vrot.lane.b32.xlu0 %v2838, 96
        %v4091 = vpop.permute.xlu0 %4090
        %4092 = vrot.lane.b32.xlu0 %v2845, 96
        %v4093 = vpop.permute.xlu0 %4092
        %4094 = vrot.lane.b32.xlu0 %v2852, 96
        %v4095 = vpop.permute.xlu0 %4094
        %4096 = vrot.lane.b32.xlu0 %v2859, 96
        %v4097 = vpop.permute.xlu0 %4096
        %4098 = vrot.lane.b32.xlu0 %v2866, 96
        %v4099 = vpop.permute.xlu0 %4098
        %4100 = vrot.lane.b32.xlu0 %v2873, 96
        %v4101 = vpop.permute.xlu0 %4100
        %4102 = vrot.lane.b32.xlu0 %v2880, 96
        %v4103 = vpop.permute.xlu0 %4102
        %4104 = vrot.lane.b32.xlu0 %v2887, 96
        %v4105 = vpop.permute.xlu0 %4104
        %4106 = vrot.lane.b32.xlu0 %v2894, 96
        %v4107 = vpop.permute.xlu0 %4106
        %4108 = vrot.lane.b32.xlu0 %v2901, 96
        %v4109 = vpop.permute.xlu0 %4108
        %4110 = vrot.lane.b32.xlu0 %v2908, 96
        %v4111 = vpop.permute.xlu0 %4110
        %4112 = vrot.lane.b32.xlu0 %v2915, 96
        %v4113 = vpop.permute.xlu0 %4112
        %4114 = vrot.lane.b32.xlu0 %v2922, 96
        %v4115 = vpop.permute.xlu0 %4114
        %4116 = vrot.lane.b32.xlu0 %v2929, 96
        %v4117 = vpop.permute.xlu0 %4116
        %4118 = vrot.lane.b32.xlu0 %v3559, 96
        %v4119 = vpop.permute.xlu0 %4118
        %4120 = vrot.lane.b32.xlu0 %v2943, 96
        %v4121 = vpop.permute.xlu0 %4120
        %4122 = vrot.lane.b32.xlu0 %v2950, 96
        %v4123 = vpop.permute.xlu0 %4122
        %4124 = vrot.lane.b32.xlu0 %v2957, 96
        %v4125 = vpop.permute.xlu0 %4124
        %4126 = vrot.lane.b32.xlu0 %v2964, 96
        %v4127 = vpop.permute.xlu0 %4126
        %4128 = vrot.lane.b32.xlu0 %v2971, 96
        %v4129 = vpop.permute.xlu0 %4128
        %4130 = vrot.lane.b32.xlu0 %v2978, 96
        %v4131 = vpop.permute.xlu0 %4130
        %4132 = vrot.lane.b32.xlu0 %v2985, 96
        %v4133 = vpop.permute.xlu0 %4132
        %4134 = vrot.lane.b32.xlu0 %v2992, 96
        %v4135 = vpop.permute.xlu0 %4134
        %4136 = vrot.lane.b32.xlu0 %v2999, 96
        %v4137 = vpop.permute.xlu0 %4136
        %4138 = vrot.lane.b32.xlu0 %v3006, 96
        %v4139 = vpop.permute.xlu0 %4138
        %4140 = vrot.lane.b32.xlu0 %v3013, 96
        %v4141 = vpop.permute.xlu0 %4140
        %4142 = vrot.lane.b32.xlu0 %v3020, 96
        %v4143 = vpop.permute.xlu0 %4142
        %4144 = vrot.lane.b32.xlu0 %v3027, 96
        %v4145 = vpop.permute.xlu0 %4144
        %4146 = vrot.lane.b32.xlu0 %v3034, 96
        %v4147 = vpop.permute.xlu0 %4146
        %4148 = vrot.lane.b32.xlu0 %v3566, 96
        %v4149 = vpop.permute.xlu0 %4148
        %vm4180 = vcmask 917248
        %vm4181 = vmand %vm4180, %vm3067
        %v4182 = vld [vmem:[#allocation2] sm:$0xff]
        %v4183 = vsel %vm4181, %v4091, %v4182
        %4184 = vst [vmem:[#allocation2] sm:$0xff] %v4183
        %v4185 = vld [vmem:[#allocation2 + $0x10] sm:$0xff]
        %v4186 = vsel %vm4181, %v4093, %v4185
        %4187 = vst [vmem:[#allocation2 + $0x10] sm:$0xff] %v4186
        %v4188 = vld [vmem:[#allocation2 + $0x20] sm:$0xff]
        %v4189 = vsel %vm4181, %v4095, %v4188
        %4190 = vst [vmem:[#allocation2 + $0x20] sm:$0xff] %v4189
        %v4191 = vld [vmem:[#allocation2 + $0x30] sm:$0xff]
        %v4192 = vsel %vm4181, %v4097, %v4191
        %4193 = vst [vmem:[#allocation2 + $0x30] sm:$0xff] %v4192
        %v4194 = vld [vmem:[#allocation2 + $0x40] sm:$0xff]
        %v4195 = vsel %vm4181, %v4099, %v4194
        %4196 = vst [vmem:[#allocation2 + $0x40] sm:$0xff] %v4195
        %v4197 = vld [vmem:[#allocation2 + $0x50] sm:$0xff]
        %v4198 = vsel %vm4181, %v4101, %v4197
        %4199 = vst [vmem:[#allocation2 + $0x50] sm:$0xff] %v4198
        %v4200 = vld [vmem:[#allocation2 + $0x60] sm:$0xff]
        %v4201 = vsel %vm4181, %v4103, %v4200
        %4202 = vst [vmem:[#allocation2 + $0x60] sm:$0xff] %v4201
        %v4203 = vld [vmem:[#allocation2 + $0x70] sm:$0xff]
        %v4204 = vsel %vm4181, %v4105, %v4203
        %4205 = vst [vmem:[#allocation2 + $0x70] sm:$0xff] %v4204
        %v4206 = vld [vmem:[#allocation2 + $0x80] sm:$0xff]
        %v4207 = vsel %vm4181, %v4107, %v4206
        %4208 = vst [vmem:[#allocation2 + $0x80] sm:$0xff] %v4207
        %v4209 = vld [vmem:[#allocation2 + $0x90] sm:$0xff]
        %v4210 = vsel %vm4181, %v4109, %v4209
        %4211 = vst [vmem:[#allocation2 + $0x90] sm:$0xff] %v4210
        %v4212 = vld [vmem:[#allocation2 + $0xa0] sm:$0xff]
        %v4213 = vsel %vm4181, %v4111, %v4212
        %4214 = vst [vmem:[#allocation2 + $0xa0] sm:$0xff] %v4213
        %v4215 = vld [vmem:[#allocation2 + $0xb0] sm:$0xff]
        %v4216 = vsel %vm4181, %v4113, %v4215
        %4217 = vst [vmem:[#allocation2 + $0xb0] sm:$0xff] %v4216
        %v4218 = vld [vmem:[#allocation2 + $0xc0] sm:$0xff]
        %v4219 = vsel %vm4181, %v4115, %v4218
        %4220 = vst [vmem:[#allocation2 + $0xc0] sm:$0xff] %v4219
        %v4221 = vld [vmem:[#allocation2 + $0xd0] sm:$0xff]
        %v4222 = vsel %vm4181, %v4117, %v4221
        %4223 = vst [vmem:[#allocation2 + $0xd0] sm:$0xff] %v4222
        %v4224 = vld [vmem:[#allocation2 + $0xe0] sm:$0xff]
        %v4225 = vsel %vm4181, %v4119, %v4224
        %4226 = vst [vmem:[#allocation2 + $0xe0] sm:$0xff] %v4225
        %v4227 = vld [vmem:[#allocation2 + $0x100] sm:$0xff]
        %v4228 = vsel %vm4181, %v4121, %v4227
        %4229 = vst [vmem:[#allocation2 + $0x100] sm:$0xff] %v4228
        %v4230 = vld [vmem:[#allocation2 + $0x110] sm:$0xff]
        %v4231 = vsel %vm4181, %v4123, %v4230
        %4232 = vst [vmem:[#allocation2 + $0x110] sm:$0xff] %v4231
        %v4233 = vld [vmem:[#allocation2 + $0x120] sm:$0xff]
        %v4234 = vsel %vm4181, %v4125, %v4233
        %4235 = vst [vmem:[#allocation2 + $0x120] sm:$0xff] %v4234
        %v4236 = vld [vmem:[#allocation2 + $0x130] sm:$0xff]
        %v4237 = vsel %vm4181, %v4127, %v4236
        %4238 = vst [vmem:[#allocation2 + $0x130] sm:$0xff] %v4237
        %v4239 = vld [vmem:[#allocation2 + $0x140] sm:$0xff]
        %v4240 = vsel %vm4181, %v4129, %v4239
        %4241 = vst [vmem:[#allocation2 + $0x140] sm:$0xff] %v4240
        %v4242 = vld [vmem:[#allocation2 + $0x150] sm:$0xff]
        %v4243 = vsel %vm4181, %v4131, %v4242
        %4244 = vst [vmem:[#allocation2 + $0x150] sm:$0xff] %v4243
        %v4245 = vld [vmem:[#allocation2 + $0x160] sm:$0xff]
        %v4246 = vsel %vm4181, %v4133, %v4245
        %4247 = vst [vmem:[#allocation2 + $0x160] sm:$0xff] %v4246
        %v4248 = vld [vmem:[#allocation2 + $0x170] sm:$0xff]
        %v4249 = vsel %vm4181, %v4135, %v4248
        %4250 = vst [vmem:[#allocation2 + $0x170] sm:$0xff] %v4249
        %v4251 = vld [vmem:[#allocation2 + $0x180] sm:$0xff]
        %v4252 = vsel %vm4181, %v4137, %v4251
        %4253 = vst [vmem:[#allocation2 + $0x180] sm:$0xff] %v4252
        %v4254 = vld [vmem:[#allocation2 + $0x190] sm:$0xff]
        %v4255 = vsel %vm4181, %v4139, %v4254
        %4256 = vst [vmem:[#allocation2 + $0x190] sm:$0xff] %v4255
        %v4257 = vld [vmem:[#allocation2 + $0x1a0] sm:$0xff]
        %v4258 = vsel %vm4181, %v4141, %v4257
        %4259 = vst [vmem:[#allocation2 + $0x1a0] sm:$0xff] %v4258
        %v4260 = vld [vmem:[#allocation2 + $0x1b0] sm:$0xff]
        %v4261 = vsel %vm4181, %v4143, %v4260
        %4262 = vst [vmem:[#allocation2 + $0x1b0] sm:$0xff] %v4261
        %v4263 = vld [vmem:[#allocation2 + $0x1c0] sm:$0xff]
        %v4264 = vsel %vm4181, %v4145, %v4263
        %4265 = vst [vmem:[#allocation2 + $0x1c0] sm:$0xff] %v4264
        %v4266 = vld [vmem:[#allocation2 + $0x1d0] sm:$0xff]
        %v4267 = vsel %vm4181, %v4147, %v4266
        %4268 = vst [vmem:[#allocation2 + $0x1d0] sm:$0xff] %v4267
        %v4269 = vld [vmem:[#allocation2 + $0x1e0] sm:$0xff]
        %v4270 = vsel %vm4181, %v4149, %v4269
        %4271 = vst [vmem:[#allocation2 + $0x1e0] sm:$0xff] %v4270
        %4272 = vrot.lane.b32.xlu0 %v2794, 112
        %v4273 = vpop.permute.xlu0 %4272
        %4274 = vrot.lane.b32.xlu0 %v2795, 112
        %v4275 = vpop.permute.xlu0 %4274
        %4276 = vrot.lane.b32.xlu0 %v2796, 112
        %v4277 = vpop.permute.xlu0 %4276
        %4278 = vrot.lane.b32.xlu0 %v2797, 112
        %v4279 = vpop.permute.xlu0 %4278
        %4280 = vrot.lane.b32.xlu0 %v2798, 112
        %v4281 = vpop.permute.xlu0 %4280
        %4282 = vrot.lane.b32.xlu0 %v2799, 112
        %v4283 = vpop.permute.xlu0 %4282
        %4284 = vrot.lane.b32.xlu0 %v2800, 112
        %v4285 = vpop.permute.xlu0 %4284
        %4286 = vrot.lane.b32.xlu0 %v2801, 112
        %v4287 = vpop.permute.xlu0 %4286
        %4288 = vrot.lane.b32.xlu0 %v2802, 112
        %v4289 = vpop.permute.xlu0 %4288
        %4290 = vrot.lane.b32.xlu0 %v2803, 112
        %v4291 = vpop.permute.xlu0 %4290
        %4292 = vrot.lane.b32.xlu0 %v2804, 112
        %v4293 = vpop.permute.xlu0 %4292
        %4294 = vrot.lane.b32.xlu0 %v2805, 112
        %v4295 = vpop.permute.xlu0 %4294
        %4296 = vrot.lane.b32.xlu0 %v2806, 112
        %v4297 = vpop.permute.xlu0 %4296
        %4298 = vrot.lane.b32.xlu0 %v2807, 112
        %v4299 = vpop.permute.xlu0 %4298
        %4300 = vrot.lane.b32.xlu0 %v2808, 112
        %v4301 = vpop.permute.xlu0 %4300
        %4302 = vrot.lane.b32.xlu0 %v2810, 112
        %v4303 = vpop.permute.xlu0 %4302
        %4304 = vrot.lane.b32.xlu0 %v2811, 112
        %v4305 = vpop.permute.xlu0 %4304
        %4306 = vrot.lane.b32.xlu0 %v2812, 112
        %v4307 = vpop.permute.xlu0 %4306
        %4308 = vrot.lane.b32.xlu0 %v2813, 112
        %v4309 = vpop.permute.xlu0 %4308
        %4310 = vrot.lane.b32.xlu0 %v2814, 112
        %v4311 = vpop.permute.xlu0 %4310
        %4312 = vrot.lane.b32.xlu0 %v2815, 112
        %v4313 = vpop.permute.xlu0 %4312
        %4314 = vrot.lane.b32.xlu0 %v2816, 112
        %v4315 = vpop.permute.xlu0 %4314
        %4316 = vrot.lane.b32.xlu0 %v2817, 112
        %v4317 = vpop.permute.xlu0 %4316
        %4318 = vrot.lane.b32.xlu0 %v2818, 112
        %v4319 = vpop.permute.xlu0 %4318
        %4320 = vrot.lane.b32.xlu0 %v2819, 112
        %v4321 = vpop.permute.xlu0 %4320
        %4322 = vrot.lane.b32.xlu0 %v2820, 112
        %v4323 = vpop.permute.xlu0 %4322
        %4324 = vrot.lane.b32.xlu0 %v2821, 112
        %v4325 = vpop.permute.xlu0 %4324
        %4326 = vrot.lane.b32.xlu0 %v2822, 112
        %v4327 = vpop.permute.xlu0 %4326
        %4328 = vrot.lane.b32.xlu0 %v2823, 112
        %v4329 = vpop.permute.xlu0 %4328
        %4330 = vrot.lane.b32.xlu0 %v2824, 112
        %v4331 = vpop.permute.xlu0 %4330
        %vm4362 = vcmask 1048448
        %4363 = vst.msk [vmem:[#allocation2] sm:$0xff] %vm4362, %v4273
        %4364 = vst.msk [vmem:[#allocation2 + $0x10] sm:$0xff] %vm4362, %v4275
        %4365 = vst.msk [vmem:[#allocation2 + $0x20] sm:$0xff] %vm4362, %v4277
        %4366 = vst.msk [vmem:[#allocation2 + $0x30] sm:$0xff] %vm4362, %v4279
        %4367 = vst.msk [vmem:[#allocation2 + $0x40] sm:$0xff] %vm4362, %v4281
        %4368 = vst.msk [vmem:[#allocation2 + $0x50] sm:$0xff] %vm4362, %v4283
        %4369 = vst.msk [vmem:[#allocation2 + $0x60] sm:$0xff] %vm4362, %v4285
        %4370 = vst.msk [vmem:[#allocation2 + $0x70] sm:$0xff] %vm4362, %v4287
        %4371 = vst.msk [vmem:[#allocation2 + $0x80] sm:$0xff] %vm4362, %v4289
        %4372 = vst.msk [vmem:[#allocation2 + $0x90] sm:$0xff] %vm4362, %v4291
        %4373 = vst.msk [vmem:[#allocation2 + $0xa0] sm:$0xff] %vm4362, %v4293
        %4374 = vst.msk [vmem:[#allocation2 + $0xb0] sm:$0xff] %vm4362, %v4295
        %4375 = vst.msk [vmem:[#allocation2 + $0xc0] sm:$0xff] %vm4362, %v4297
        %4376 = vst.msk [vmem:[#allocation2 + $0xd0] sm:$0xff] %vm4362, %v4299
        %4377 = vst.msk [vmem:[#allocation2 + $0xe0] sm:$0xff] %vm4362, %v4301
        %4378 = vst.msk [vmem:[#allocation2 + $0x100] sm:$0xff] %vm4362, %v4303
        %4379 = vst.msk [vmem:[#allocation2 + $0x110] sm:$0xff] %vm4362, %v4305
        %4380 = vst.msk [vmem:[#allocation2 + $0x120] sm:$0xff] %vm4362, %v4307
        %4381 = vst.msk [vmem:[#allocation2 + $0x130] sm:$0xff] %vm4362, %v4309
        %4382 = vst.msk [vmem:[#allocation2 + $0x140] sm:$0xff] %vm4362, %v4311
        %4383 = vst.msk [vmem:[#allocation2 + $0x150] sm:$0xff] %vm4362, %v4313
        %4384 = vst.msk [vmem:[#allocation2 + $0x160] sm:$0xff] %vm4362, %v4315
        %4385 = vst.msk [vmem:[#allocation2 + $0x170] sm:$0xff] %vm4362, %v4317
        %4386 = vst.msk [vmem:[#allocation2 + $0x180] sm:$0xff] %vm4362, %v4319
        %4387 = vst.msk [vmem:[#allocation2 + $0x190] sm:$0xff] %vm4362, %v4321
        %4388 = vst.msk [vmem:[#allocation2 + $0x1a0] sm:$0xff] %vm4362, %v4323
        %4389 = vst.msk [vmem:[#allocation2 + $0x1b0] sm:$0xff] %vm4362, %v4325
        %4390 = vst.msk [vmem:[#allocation2 + $0x1c0] sm:$0xff] %vm4362, %v4327
        %4391 = vst.msk [vmem:[#allocation2 + $0x1d0] sm:$0xff] %vm4362, %v4329
        %4392 = vst.msk [vmem:[#allocation2 + $0x1e0] sm:$0xff] %vm4362, %v4331
        %vm4423 = vmand %vm3066, %vm3461
        %v4424 = vld [vmem:[#allocation2 + $0x8] sm:$0xff]
        %v4425 = vsel %vm4423, %v3313, %v4424
        %4426 = vst [vmem:[#allocation2 + $0x8] sm:$0xff] %v4425
        %v4427 = vld [vmem:[#allocation2 + $0x18] sm:$0xff]
        %v4428 = vsel %vm4423, %v3315, %v4427
        %4429 = vst [vmem:[#allocation2 + $0x18] sm:$0xff] %v4428
        %v4430 = vld [vmem:[#allocation2 + $0x28] sm:$0xff]
        %v4431 = vsel %vm4423, %v3317, %v4430
        %4432 = vst [vmem:[#allocation2 + $0x28] sm:$0xff] %v4431
        %v4433 = vld [vmem:[#allocation2 + $0x38] sm:$0xff]
        %v4434 = vsel %vm4423, %v3319, %v4433
        %4435 = vst [vmem:[#allocation2 + $0x38] sm:$0xff] %v4434
        %v4436 = vld [vmem:[#allocation2 + $0x48] sm:$0xff]
        %v4437 = vsel %vm4423, %v3321, %v4436
        %4438 = vst [vmem:[#allocation2 + $0x48] sm:$0xff] %v4437
        %v4439 = vld [vmem:[#allocation2 + $0x58] sm:$0xff]
        %v4440 = vsel %vm4423, %v3323, %v4439
        %4441 = vst [vmem:[#allocation2 + $0x58] sm:$0xff] %v4440
        %v4442 = vld [vmem:[#allocation2 + $0x68] sm:$0xff]
        %v4443 = vsel %vm4423, %v3325, %v4442
        %4444 = vst [vmem:[#allocation2 + $0x68] sm:$0xff] %v4443
        %v4445 = vld [vmem:[#allocation2 + $0x78] sm:$0xff]
        %v4446 = vsel %vm4423, %v3327, %v4445
        %4447 = vst [vmem:[#allocation2 + $0x78] sm:$0xff] %v4446
        %v4448 = vld [vmem:[#allocation2 + $0x88] sm:$0xff]
        %v4449 = vsel %vm4423, %v3329, %v4448
        %4450 = vst [vmem:[#allocation2 + $0x88] sm:$0xff] %v4449
        %v4451 = vld [vmem:[#allocation2 + $0x98] sm:$0xff]
        %v4452 = vsel %vm4423, %v3331, %v4451
        %4453 = vst [vmem:[#allocation2 + $0x98] sm:$0xff] %v4452
        %v4454 = vld [vmem:[#allocation2 + $0xa8] sm:$0xff]
        %v4455 = vsel %vm4423, %v3333, %v4454
        %4456 = vst [vmem:[#allocation2 + $0xa8] sm:$0xff] %v4455
        %v4457 = vld [vmem:[#allocation2 + $0xb8] sm:$0xff]
        %v4458 = vsel %vm4423, %v3335, %v4457
        %4459 = vst [vmem:[#allocation2 + $0xb8] sm:$0xff] %v4458
        %v4460 = vld [vmem:[#allocation2 + $0xc8] sm:$0xff]
        %v4461 = vsel %vm4423, %v3337, %v4460
        %4462 = vst [vmem:[#allocation2 + $0xc8] sm:$0xff] %v4461
        %v4463 = vld [vmem:[#allocation2 + $0xd8] sm:$0xff]
        %v4464 = vsel %vm4423, %v3339, %v4463
        %4465 = vst [vmem:[#allocation2 + $0xd8] sm:$0xff] %v4464
        %v4466 = vld [vmem:[#allocation2 + $0xe8] sm:$0xff]
        %v4467 = vsel %vm4423, %v3893, %v4466
        %4468 = vst [vmem:[#allocation2 + $0xe8] sm:$0xff] %v4467
        %v4469 = vld [vmem:[#allocation2 + $0x108] sm:$0xff]
        %v4470 = vsel %vm4423, %v3343, %v4469
        %4471 = vst [vmem:[#allocation2 + $0x108] sm:$0xff] %v4470
        %v4472 = vld [vmem:[#allocation2 + $0x118] sm:$0xff]
        %v4473 = vsel %vm4423, %v3345, %v4472
        %4474 = vst [vmem:[#allocation2 + $0x118] sm:$0xff] %v4473
        %v4475 = vld [vmem:[#allocation2 + $0x128] sm:$0xff]
        %v4476 = vsel %vm4423, %v3347, %v4475
        %4477 = vst [vmem:[#allocation2 + $0x128] sm:$0xff] %v4476
        %v4478 = vld [vmem:[#allocation2 + $0x138] sm:$0xff]
        %v4479 = vsel %vm4423, %v3349, %v4478
        %4480 = vst [vmem:[#allocation2 + $0x138] sm:$0xff] %v4479
        %v4481 = vld [vmem:[#allocation2 + $0x148] sm:$0xff]
        %v4482 = vsel %vm4423, %v3351, %v4481
        %4483 = vst [vmem:[#allocation2 + $0x148] sm:$0xff] %v4482
        %v4484 = vld [vmem:[#allocation2 + $0x158] sm:$0xff]
        %v4485 = vsel %vm4423, %v3353, %v4484
        %4486 = vst [vmem:[#allocation2 + $0x158] sm:$0xff] %v4485
        %v4487 = vld [vmem:[#allocation2 + $0x168] sm:$0xff]
        %v4488 = vsel %vm4423, %v3355, %v4487
        %4489 = vst [vmem:[#allocation2 + $0x168] sm:$0xff] %v4488
        %v4490 = vld [vmem:[#allocation2 + $0x178] sm:$0xff]
        %v4491 = vsel %vm4423, %v3357, %v4490
        %4492 = vst [vmem:[#allocation2 + $0x178] sm:$0xff] %v4491
        %v4493 = vld [vmem:[#allocation2 + $0x188] sm:$0xff]
        %v4494 = vsel %vm4423, %v3359, %v4493
        %4495 = vst [vmem:[#allocation2 + $0x188] sm:$0xff] %v4494
        %v4496 = vld [vmem:[#allocation2 + $0x198] sm:$0xff]
        %v4497 = vsel %vm4423, %v3361, %v4496
        %4498 = vst [vmem:[#allocation2 + $0x198] sm:$0xff] %v4497
        %v4499 = vld [vmem:[#allocation2 + $0x1a8] sm:$0xff]
        %v4500 = vsel %vm4423, %v3363, %v4499
        %4501 = vst [vmem:[#allocation2 + $0x1a8] sm:$0xff] %v4500
        %v4502 = vld [vmem:[#allocation2 + $0x1b8] sm:$0xff]
        %v4503 = vsel %vm4423, %v3365, %v4502
        %4504 = vst [vmem:[#allocation2 + $0x1b8] sm:$0xff] %v4503
        %v4505 = vld [vmem:[#allocation2 + $0x1c8] sm:$0xff]
        %v4506 = vsel %vm4423, %v3367, %v4505
        %4507 = vst [vmem:[#allocation2 + $0x1c8] sm:$0xff] %v4506
        %v4508 = vld [vmem:[#allocation2 + $0x1d8] sm:$0xff]
        %v4509 = vsel %vm4423, %v3369, %v4508
        %4510 = vst [vmem:[#allocation2 + $0x1d8] sm:$0xff] %v4509
        %v4511 = vld [vmem:[#allocation2 + $0x1e8] sm:$0xff]
        %v4512 = vsel %vm4423, %v3895, %v4511
        %4513 = vst [vmem:[#allocation2 + $0x1e8] sm:$0xff] %v4512
        %v4514 = vld [vmem:[#allocation2] sm:$0xff]
        %v4515 = vld [vmem:[#allocation2 + $0x8] sm:$0xff]
        %v4516 = vld [vmem:[#allocation2 + $0x10] sm:$0xff]
        %v4517 = vld [vmem:[#allocation2 + $0x18] sm:$0xff]
        %v4518 = vld [vmem:[#allocation2 + $0x20] sm:$0xff]
        %v4519 = vld [vmem:[#allocation2 + $0x28] sm:$0xff]
        %v4520 = vld [vmem:[#allocation2 + $0x30] sm:$0xff]
        %v4521 = vld [vmem:[#allocation2 + $0x38] sm:$0xff]
        %v4522 = vld [vmem:[#allocation2 + $0x40] sm:$0xff]
        %v4523 = vld [vmem:[#allocation2 + $0x48] sm:$0xff]
        %v4524 = vld [vmem:[#allocation2 + $0x50] sm:$0xff]
        %v4525 = vld [vmem:[#allocation2 + $0x58] sm:$0xff]
        %v4526 = vld [vmem:[#allocation2 + $0x60] sm:$0xff]
        %v4527 = vld [vmem:[#allocation2 + $0x68] sm:$0xff]
        %v4528 = vld [vmem:[#allocation2 + $0x70] sm:$0xff]
        %v4529 = vld [vmem:[#allocation2 + $0x78] sm:$0xff]
        %v4530 = vld [vmem:[#allocation2 + $0x80] sm:$0xff]
        %v4531 = vld [vmem:[#allocation2 + $0x88] sm:$0xff]
        %v4532 = vld [vmem:[#allocation2 + $0x90] sm:$0xff]
        %v4533 = vld [vmem:[#allocation2 + $0x98] sm:$0xff]
        %v4534 = vld [vmem:[#allocation2 + $0xa0] sm:$0xff]
        %v4535 = vld [vmem:[#allocation2 + $0xa8] sm:$0xff]
        %v4536 = vld [vmem:[#allocation2 + $0xb0] sm:$0xff]
        %v4537 = vld [vmem:[#allocation2 + $0xb8] sm:$0xff]
        %v4538 = vld [vmem:[#allocation2 + $0xc0] sm:$0xff]
        %v4539 = vld [vmem:[#allocation2 + $0xc8] sm:$0xff]
        %v4540 = vld [vmem:[#allocation2 + $0xd0] sm:$0xff]
        %v4541 = vld [vmem:[#allocation2 + $0xd8] sm:$0xff]
        %v4542 = vld [vmem:[#allocation2 + $0xe0] sm:$0xff]
        %v4543 = vld [vmem:[#allocation2 + $0xe8] sm:$0xff]
        %v4544 = vld [vmem:[#allocation2 + $0xf0] sm:$0xff]
        %v4545 = vld [vmem:[#allocation2 + $0xf8] sm:$0xff]
        %v4546 = vld [vmem:[#allocation2 + $0x100] sm:$0xff]
        %v4547 = vld [vmem:[#allocation2 + $0x108] sm:$0xff]
        %v4548 = vld [vmem:[#allocation2 + $0x110] sm:$0xff]
        %v4549 = vld [vmem:[#allocation2 + $0x118] sm:$0xff]
        %v4550 = vld [vmem:[#allocation2 + $0x120] sm:$0xff]
        %v4551 = vld [vmem:[#allocation2 + $0x128] sm:$0xff]
        %v4552 = vld [vmem:[#allocation2 + $0x130] sm:$0xff]
        %v4553 = vld [vmem:[#allocation2 + $0x138] sm:$0xff]
        %v4554 = vld [vmem:[#allocation2 + $0x140] sm:$0xff]
        %v4555 = vld [vmem:[#allocation2 + $0x148] sm:$0xff]
        %v4556 = vld [vmem:[#allocation2 + $0x150] sm:$0xff]
        %v4557 = vld [vmem:[#allocation2 + $0x158] sm:$0xff]
        %v4558 = vld [vmem:[#allocation2 + $0x160] sm:$0xff]
        %v4559 = vld [vmem:[#allocation2 + $0x168] sm:$0xff]
        %v4560 = vld [vmem:[#allocation2 + $0x170] sm:$0xff]
        %v4561 = vld [vmem:[#allocation2 + $0x178] sm:$0xff]
        %v4562 = vld [vmem:[#allocation2 + $0x180] sm:$0xff]
        %v4563 = vld [vmem:[#allocation2 + $0x188] sm:$0xff]
        %v4564 = vld [vmem:[#allocation2 + $0x190] sm:$0xff]
        %v4565 = vld [vmem:[#allocation2 + $0x198] sm:$0xff]
        %v4566 = vld [vmem:[#allocation2 + $0x1a0] sm:$0xff]
        %v4567 = vld [vmem:[#allocation2 + $0x1a8] sm:$0xff]
        %v4568 = vld [vmem:[#allocation2 + $0x1b0] sm:$0xff]
        %v4569 = vld [vmem:[#allocation2 + $0x1b8] sm:$0xff]
        %v4570 = vld [vmem:[#allocation2 + $0x1c0] sm:$0xff]
        %v4571 = vld [vmem:[#allocation2 + $0x1c8] sm:$0xff]
        %v4572 = vld [vmem:[#allocation2 + $0x1d0] sm:$0xff]
        %v4573 = vld [vmem:[#allocation2 + $0x1d8] sm:$0xff]
        %v4574 = vld [vmem:[#allocation2 + $0x1e0] sm:$0xff]
        %v4575 = vld [vmem:[#allocation2 + $0x1e8] sm:$0xff]
        %v4576 = vld [vmem:[#allocation2 + $0x1f0] sm:$0xff]
        %v4577 = vld [vmem:[#allocation2 + $0x1f8] sm:$0xff]
        %v4578 = vld [vmem:[%s355] sm:$0xf]
        %v4579 = vld [vmem:[%s355 + $0x4] sm:$0xf]
        %v4580 = vld [vmem:[%s355 + $0x8] sm:$0xf]
        %v4581 = vld [vmem:[%s355 + $0xc] sm:$0xf]
        %v4582 = vld [vmem:[%s355 + $0x10] sm:$0xf]
        %v4583 = vld [vmem:[%s355 + $0x14] sm:$0xf]
        %v4584 = vld [vmem:[%s355 + $0x18] sm:$0xf]
        %v4585 = vld [vmem:[%s355 + $0x1c] sm:$0xf]
        %v4586 = vld [vmem:[%s355 + $0x20] sm:$0xf]
        %v4587 = vld [vmem:[%s355 + $0x24] sm:$0xf]
        %v4588 = vld [vmem:[%s355 + $0x28] sm:$0xf]
        %v4589 = vld [vmem:[%s355 + $0x2c] sm:$0xf]
        %v4590 = vld [vmem:[%s355 + $0x30] sm:$0xf]
        %v4591 = vld [vmem:[%s355 + $0x34] sm:$0xf]
        %v4592 = vld [vmem:[%s355 + $0x38] sm:$0xf]
        %v4593 = vld [vmem:[%s355 + $0x3c] sm:$0xf]
        %v4594 = vld [vmem:[%s355 + $0x40] sm:$0xf]
        %v4595 = vld [vmem:[%s355 + $0x44] sm:$0xf]
        %v4614 = vunpack.c.l.b16 %v4578
        %v4615 = vunpack.c.l.b16 %v4579
        %v4616 = vunpack.c.l.b16 %v4580
        %v4617 = vunpack.c.l.b16 %v4581
        %v4618 = vunpack.c.l.b16 %v4582
        %v4619 = vunpack.c.l.b16 %v4583
        %v4620 = vunpack.c.l.b16 %v4584
        %v4621 = vunpack.c.l.b16 %v4585
        %v4622 = vunpack.c.l.b16 %v4586
        %v4623 = vunpack.c.l.b16 %v4587
        %v4624 = vunpack.c.l.b16 %v4588
        %v4625 = vunpack.c.l.b16 %v4589
        %v4626 = vunpack.c.l.b16 %v4590
        %v4627 = vunpack.c.l.b16 %v4591
        %v4628 = vunpack.c.l.b16 %v4592
        %v4629 = vunpack.c.l.b16 %v4593
        %v4630 = vunpack.c.l.b16 %v4594
        %v4631 = vunpack.c.l.b16 %v4595
        %v4632 = vpack.c.b16 %v4615, %v4614
        %v4633 = vpack.c.b16 %v4617, %v4616
        %v4634 = vpack.c.b16 %v4619, %v4618
        %v4635 = vpack.c.b16 %v4621, %v4620
        %v4636 = vpack.c.b16 %v4623, %v4622
        %v4637 = vpack.c.b16 %v4625, %v4624
        %v4638 = vpack.c.b16 %v4627, %v4626
        %v4639 = vpack.c.b16 %v4629, %v4628
        %v4640 = vpack.c.b16 %v4631, %v4630
        %v4651 = vsel %vm1161, %v4515, 0
        %v4654 = vsel %vm1161, %v4517, 0
        %v4657 = vsel %vm1161, %v4519, 0
        %v4660 = vsel %vm1161, %v4521, 0
        %v4663 = vsel %vm1161, %v4523, 0
        %v4666 = vsel %vm1161, %v4525, 0
        %v4669 = vsel %vm1161, %v4527, 0
        %v4672 = vsel %vm1161, %v4529, 0
        %v4675 = vsel %vm1161, %v4531, 0
        %v4678 = vsel %vm1161, %v4533, 0
        %v4681 = vsel %vm1161, %v4535, 0
        %v4684 = vsel %vm1161, %v4537, 0
        %v4687 = vsel %vm1161, %v4539, 0
        %v4690 = vsel %vm1161, %v4541, 0
        %v4693 = vsel %vm1161, %v4543, 0
        %v4696 = vsel %vm1161, %v4545, 0
        %v4699 = vsel %vm1161, %v4547, 0
        %v4702 = vsel %vm1161, %v4549, 0
        %v4705 = vsel %vm1161, %v4551, 0
        %v4708 = vsel %vm1161, %v4553, 0
        %v4711 = vsel %vm1161, %v4555, 0
        %v4714 = vsel %vm1161, %v4557, 0
        %v4717 = vsel %vm1161, %v4559, 0
        %v4720 = vsel %vm1161, %v4561, 0
        %v4723 = vsel %vm1161, %v4563, 0
        %v4726 = vsel %vm1161, %v4565, 0
        %v4729 = vsel %vm1161, %v4567, 0
        %v4732 = vsel %vm1161, %v4569, 0
        %v4735 = vsel %vm1161, %v4571, 0
        %v4738 = vsel %vm1161, %v4573, 0
        %v4741 = vsel %vm1161, %v4575, 0
        %v4744 = vsel %vm1161, %v4577, 0
        %4746 = vmatprep.subr.bf16.mxu0 0
        %4747 = vmatpush1.bf16.msra.mxu0 %v4632
        %4748 = vmatprep.subr.bf16.mxu0 0
        %4749 = vmatpush1.bf16.msra.mxu0 %v4633
        %4750 = vmatprep.subr.bf16.mxu0 0
        %4751 = vmatpush1.bf16.msra.mxu0 %v4634
        %4752 = vmatprep.subr.bf16.mxu0 0
        %4753 = vmatpush1.bf16.msra.mxu0 %v4635
        %4754 = vmatprep.subr.bf16.mxu0 0
        %4755 = vmatpush1.bf16.msra.mxu0 %v4636
        %4756 = vmatprep.subr.bf16.mxu0 0
        %4757 = vmatpush1.bf16.msra.mxu0 %v4637
        %4758 = vmatprep.subr.bf16.mxu0 0
        %4759 = vmatpush1.bf16.msra.mxu0 %v4638
        %4760 = vmatprep.subr.bf16.mxu0 0
        %4761 = vmatpush1.bf16.msra.mxu0 %v4639
        %4762 = vmatprep.subr.bf16.mxu0 0
        %4763 = vmatpush1.bf16.msra.mxu0 %v4640
        %4764 = vmatprep.subr.bf16.mxu0 0
        %4765 = vmatpush1.bf16.msra.mxu0 0
        %4766 = vmatprep.subr.bf16.mxu0 0
        %4767 = vmatpush1.bf16.msra.mxu0 0
        %4768 = vmatprep.subr.bf16.mxu0 0
        %4769 = vmatpush1.bf16.msra.mxu0 0
        %4770 = vmatprep.subr.bf16.mxu0 0
        %4771 = vmatpush1.bf16.msra.mxu0 0
        %4772 = vmatprep.subr.bf16.mxu0 0
        %4773 = vmatpush1.bf16.msra.mxu0 0
        %4774 = vmatprep.subr.bf16.mxu0 0
        %4775 = vmatpush1.bf16.msra.mxu0 0
        %4776 = vmatprep.subr.bf16.mxu0 0
        %4777 = vmatpush1.bf16.msra.mxu0 0
        %4778 = vmatprep.mubr.bf16.mxu0 %v4651
        %4779 = vmatmul.mubr.bf16.gmra.mrb[0].mxu0 %v4514
        %v4780 = vpop.f32.mrb[0].mxu0
        %v4781 = vadd.f32 0.0, %v4780
        %v4782 = vpop.f32.mrb[0].mxu0
        %v4783 = vpop.f32.mrb[0].mxu0
        %v4784 = vadd.f32 0.0, %v4783
        %v4785 = vpop.f32.mrb[0].mxu0
        %4786 = vmatprep.mubr.bf16.mxu0 %v4654
        %4787 = vmatmul.mubr.bf16.gmra.mrb[0].mxu0 %v4516
        %v4788 = vpop.f32.mrb[0].mxu0
        %v4789 = vadd.f32 0.0, %v4788
        %v4790 = vpop.f32.mrb[0].mxu0
        %v4791 = vpop.f32.mrb[0].mxu0
        %v4792 = vadd.f32 0.0, %v4791
        %v4793 = vpop.f32.mrb[0].mxu0
        %4794 = vmatprep.mubr.bf16.mxu0 %v4657
        %4795 = vmatmul.mubr.bf16.gmra.mrb[0].mxu0 %v4518
        %v4796 = vpop.f32.mrb[0].mxu0
        %v4797 = vadd.f32 0.0, %v4796
        %v4798 = vpop.f32.mrb[0].mxu0
        %v4799 = vpop.f32.mrb[0].mxu0
        %v4800 = vadd.f32 0.0, %v4799
        %v4801 = vpop.f32.mrb[0].mxu0
        %4802 = vmatprep.mubr.bf16.mxu0 %v4660
        %4803 = vmatmul.mubr.bf16.gmra.mrb[0].mxu0 %v4520
        %v4804 = vpop.f32.mrb[0].mxu0
        %v4805 = vadd.f32 0.0, %v4804
        %v4806 = vpop.f32.mrb[0].mxu0
        %v4807 = vpop.f32.mrb[0].mxu0
        %v4808 = vadd.f32 0.0, %v4807
        %v4809 = vpop.f32.mrb[0].mxu0
        %4810 = vmatprep.mubr.bf16.mxu0 %v4663
        %4811 = vmatmul.mubr.bf16.gmra.mrb[0].mxu0 %v4522
        %v4812 = vpop.f32.mrb[0].mxu0
        %v4813 = vadd.f32 0.0, %v4812
        %v4814 = vpop.f32.mrb[0].mxu0
        %v4815 = vpop.f32.mrb[0].mxu0
        %v4816 = vadd.f32 0.0, %v4815
        %v4817 = vpop.f32.mrb[0].mxu0
        %4818 = vmatprep.mubr.bf16.mxu0 %v4666
        %4819 = vmatmul.mubr.bf16.gmra.mrb[0].mxu0 %v4524
        %v4820 = vpop.f32.mrb[0].mxu0
        %v4821 = vadd.f32 0.0, %v4820
        %v4822 = vpop.f32.mrb[0].mxu0
        %v4823 = vpop.f32.mrb[0].mxu0
        %v4824 = vadd.f32 0.0, %v4823
        %v4825 = vpop.f32.mrb[0].mxu0
        %4826 = vmatprep.mubr.bf16.mxu0 %v4669
        %4827 = vmatmul.mubr.bf16.gmra.mrb[0].mxu0 %v4526
        %v4828 = vpop.f32.mrb[0].mxu0
        %v4829 = vadd.f32 0.0, %v4828
        %v4830 = vpop.f32.mrb[0].mxu0
        %v4831 = vpop.f32.mrb[0].mxu0
        %v4832 = vadd.f32 0.0, %v4831
        %v4833 = vpop.f32.mrb[0].mxu0
        %4834 = vmatprep.mubr.bf16.mxu0 %v4672
        %4835 = vmatmul.mubr.bf16.gmra.mrb[0].mxu0 %v4528
        %v4836 = vpop.f32.mrb[0].mxu0
        %v4837 = vadd.f32 0.0, %v4836
        %v4838 = vpop.f32.mrb[0].mxu0
        %v4839 = vpop.f32.mrb[0].mxu0
        %v4840 = vadd.f32 0.0, %v4839
        %v4841 = vpop.f32.mrb[0].mxu0
        %4842 = vmatprep.mubr.bf16.mxu0 %v4675
        %4843 = vmatmul.mubr.bf16.gmra.mrb[0].mxu0 %v4530
        %v4844 = vpop.f32.mrb[0].mxu0
        %v4845 = vadd.f32 0.0, %v4844
        %v4846 = vpop.f32.mrb[0].mxu0
        %v4847 = vpop.f32.mrb[0].mxu0
        %v4848 = vadd.f32 0.0, %v4847
        %v4849 = vpop.f32.mrb[0].mxu0
        %4850 = vmatprep.mubr.bf16.mxu0 %v4678
        %4851 = vmatmul.mubr.bf16.gmra.mrb[0].mxu0 %v4532
        %v4852 = vpop.f32.mrb[0].mxu0
        %v4853 = vadd.f32 0.0, %v4852
        %v4854 = vpop.f32.mrb[0].mxu0
        %v4855 = vpop.f32.mrb[0].mxu0
        %v4856 = vadd.f32 0.0, %v4855
        %v4857 = vpop.f32.mrb[0].mxu0
        %4858 = vmatprep.mubr.bf16.mxu0 %v4681
        %4859 = vmatmul.mubr.bf16.gmra.mrb[0].mxu0 %v4534
        %v4860 = vpop.f32.mrb[0].mxu0
        %v4861 = vadd.f32 0.0, %v4860
        %v4862 = vpop.f32.mrb[0].mxu0
        %v4863 = vpop.f32.mrb[0].mxu0
        %v4864 = vadd.f32 0.0, %v4863
        %v4865 = vpop.f32.mrb[0].mxu0
        %4866 = vmatprep.mubr.bf16.mxu0 %v4684
        %4867 = vmatmul.mubr.bf16.gmra.mrb[0].mxu0 %v4536
        %v4868 = vpop.f32.mrb[0].mxu0
        %v4869 = vadd.f32 0.0, %v4868
        %v4870 = vpop.f32.mrb[0].mxu0
        %v4871 = vpop.f32.mrb[0].mxu0
        %v4872 = vadd.f32 0.0, %v4871
        %v4873 = vpop.f32.mrb[0].mxu0
        %4874 = vmatprep.mubr.bf16.mxu0 %v4687
        %4875 = vmatmul.mubr.bf16.gmra.mrb[0].mxu0 %v4538
        %v4876 = vpop.f32.mrb[0].mxu0
        %v4877 = vadd.f32 0.0, %v4876
        %v4878 = vpop.f32.mrb[0].mxu0
        %v4879 = vpop.f32.mrb[0].mxu0
        %v4880 = vadd.f32 0.0, %v4879
        %v4881 = vpop.f32.mrb[0].mxu0
        %4882 = vmatprep.mubr.bf16.mxu0 %v4690
        %4883 = vmatmul.mubr.bf16.gmra.mrb[0].mxu0 %v4540
        %v4884 = vpop.f32.mrb[0].mxu0
        %v4885 = vadd.f32 0.0, %v4884
        %v4886 = vpop.f32.mrb[0].mxu0
        %v4887 = vpop.f32.mrb[0].mxu0
        %v4888 = vadd.f32 0.0, %v4887
        %v4889 = vpop.f32.mrb[0].mxu0
        %4890 = vmatprep.mubr.bf16.mxu0 %v4693
        %4891 = vmatmul.mubr.bf16.gmra.mrb[0].mxu0 %v4542
        %v4892 = vpop.f32.mrb[0].mxu0
        %v4893 = vadd.f32 0.0, %v4892
        %v4894 = vpop.f32.mrb[0].mxu0
        %v4895 = vpop.f32.mrb[0].mxu0
        %v4896 = vadd.f32 0.0, %v4895
        %v4897 = vpop.f32.mrb[0].mxu0
        %4898 = vmatprep.mubr.bf16.mxu0 %v4696
        %4899 = vmatmul.mubr.bf16.gmra.mrb[0].mxu0 %v4544
        %v4900 = vpop.f32.mrb[0].mxu0
        %v4901 = vadd.f32 0.0, %v4900
        %v4902 = vpop.f32.mrb[0].mxu0
        %v4903 = vpop.f32.mrb[0].mxu0
        %v4904 = vadd.f32 0.0, %v4903
        %v4905 = vpop.f32.mrb[0].mxu0
        %4906 = vmatprep.mubr.bf16.mxu0 %v4699
        %4907 = vmatmul.mubr.bf16.gmra.mrb[0].mxu0 %v4546
        %v4908 = vpop.f32.mrb[0].mxu0
        %v4909 = vadd.f32 0.0, %v4908
        %v4910 = vpop.f32.mrb[0].mxu0
        %v4911 = vpop.f32.mrb[0].mxu0
        %v4912 = vadd.f32 0.0, %v4911
        %v4913 = vpop.f32.mrb[0].mxu0
        %4914 = vmatprep.mubr.bf16.mxu0 %v4702
        %4915 = vmatmul.mubr.bf16.gmra.mrb[0].mxu0 %v4548
        %v4916 = vpop.f32.mrb[0].mxu0
        %v4917 = vadd.f32 0.0, %v4916
        %v4918 = vpop.f32.mrb[0].mxu0
        %v4919 = vpop.f32.mrb[0].mxu0
        %v4920 = vadd.f32 0.0, %v4919
        %v4921 = vpop.f32.mrb[0].mxu0
        %4922 = vmatprep.mubr.bf16.mxu0 %v4705
        %4923 = vmatmul.mubr.bf16.gmra.mrb[0].mxu0 %v4550
        %v4924 = vpop.f32.mrb[0].mxu0
        %v4925 = vadd.f32 0.0, %v4924
        %v4926 = vpop.f32.mrb[0].mxu0
        %v4927 = vpop.f32.mrb[0].mxu0
        %v4928 = vadd.f32 0.0, %v4927
        %v4929 = vpop.f32.mrb[0].mxu0
        %4930 = vmatprep.mubr.bf16.mxu0 %v4708
        %4931 = vmatmul.mubr.bf16.gmra.mrb[0].mxu0 %v4552
        %v4932 = vpop.f32.mrb[0].mxu0
        %v4933 = vadd.f32 0.0, %v4932
        %v4934 = vpop.f32.mrb[0].mxu0
        %v4935 = vpop.f32.mrb[0].mxu0
        %v4936 = vadd.f32 0.0, %v4935
        %v4937 = vpop.f32.mrb[0].mxu0
        %4938 = vmatprep.mubr.bf16.mxu0 %v4711
        %4939 = vmatmul.mubr.bf16.gmra.mrb[0].mxu0 %v4554
        %v4940 = vpop.f32.mrb[0].mxu0
        %v4941 = vadd.f32 0.0, %v4940
        %v4942 = vpop.f32.mrb[0].mxu0
        %v4943 = vpop.f32.mrb[0].mxu0
        %v4944 = vadd.f32 0.0, %v4943
        %v4945 = vpop.f32.mrb[0].mxu0
        %4946 = vmatprep.mubr.bf16.mxu0 %v4714
        %4947 = vmatmul.mubr.bf16.gmra.mrb[0].mxu0 %v4556
        %v4948 = vpop.f32.mrb[0].mxu0
        %v4949 = vadd.f32 0.0, %v4948
        %v4950 = vpop.f32.mrb[0].mxu0
        %v4951 = vpop.f32.mrb[0].mxu0
        %v4952 = vadd.f32 0.0, %v4951
        %v4953 = vpop.f32.mrb[0].mxu0
        %4954 = vmatprep.mubr.bf16.mxu0 %v4717
        %4955 = vmatmul.mubr.bf16.gmra.mrb[0].mxu0 %v4558
        %v4956 = vpop.f32.mrb[0].mxu0
        %v4957 = vadd.f32 0.0, %v4956
        %v4958 = vpop.f32.mrb[0].mxu0
        %v4959 = vpop.f32.mrb[0].mxu0
        %v4960 = vadd.f32 0.0, %v4959
        %v4961 = vpop.f32.mrb[0].mxu0
        %4962 = vmatprep.mubr.bf16.mxu0 %v4720
        %4963 = vmatmul.mubr.bf16.gmra.mrb[0].mxu0 %v4560
        %v4964 = vpop.f32.mrb[0].mxu0
        %v4965 = vadd.f32 0.0, %v4964
        %v4966 = vpop.f32.mrb[0].mxu0
        %v4967 = vpop.f32.mrb[0].mxu0
        %v4968 = vadd.f32 0.0, %v4967
        %v4969 = vpop.f32.mrb[0].mxu0
        %4970 = vmatprep.mubr.bf16.mxu0 %v4723
        %4971 = vmatmul.mubr.bf16.gmra.mrb[0].mxu0 %v4562
        %v4972 = vpop.f32.mrb[0].mxu0
        %v4973 = vadd.f32 0.0, %v4972
        %v4974 = vpop.f32.mrb[0].mxu0
        %v4975 = vpop.f32.mrb[0].mxu0
        %v4976 = vadd.f32 0.0, %v4975
        %v4977 = vpop.f32.mrb[0].mxu0
        %4978 = vmatprep.mubr.bf16.mxu0 %v4726
        %4979 = vmatmul.mubr.bf16.gmra.mrb[0].mxu0 %v4564
        %v4980 = vpop.f32.mrb[0].mxu0
        %v4981 = vadd.f32 0.0, %v4980
        %v4982 = vpop.f32.mrb[0].mxu0
        %v4983 = vpop.f32.mrb[0].mxu0
        %v4984 = vadd.f32 0.0, %v4983
        %v4985 = vpop.f32.mrb[0].mxu0
        %4986 = vmatprep.mubr.bf16.mxu0 %v4729
        %4987 = vmatmul.mubr.bf16.gmra.mrb[0].mxu0 %v4566
        %v4988 = vpop.f32.mrb[0].mxu0
        %v4989 = vadd.f32 0.0, %v4988
        %v4990 = vpop.f32.mrb[0].mxu0
        %v4991 = vpop.f32.mrb[0].mxu0
        %v4992 = vadd.f32 0.0, %v4991
        %v4993 = vpop.f32.mrb[0].mxu0
        %4994 = vmatprep.mubr.bf16.mxu0 %v4732
        %4995 = vmatmul.mubr.bf16.gmra.mrb[0].mxu0 %v4568
        %v4996 = vpop.f32.mrb[0].mxu0
        %v4997 = vadd.f32 0.0, %v4996
        %v4998 = vpop.f32.mrb[0].mxu0
        %v4999 = vpop.f32.mrb[0].mxu0
        %v5000 = vadd.f32 0.0, %v4999
        %v5001 = vpop.f32.mrb[0].mxu0
        %5002 = vmatprep.mubr.bf16.mxu0 %v4735
        %5003 = vmatmul.mubr.bf16.gmra.mrb[0].mxu0 %v4570
        %v5004 = vpop.f32.mrb[0].mxu0
        %v5005 = vadd.f32 0.0, %v5004
        %v5006 = vpop.f32.mrb[0].mxu0
        %v5007 = vpop.f32.mrb[0].mxu0
        %v5008 = vadd.f32 0.0, %v5007
        %v5009 = vpop.f32.mrb[0].mxu0
        %5010 = vmatprep.mubr.bf16.mxu0 %v4738
        %5011 = vmatmul.mubr.bf16.gmra.mrb[0].mxu0 %v4572
        %v5012 = vpop.f32.mrb[0].mxu0
        %v5013 = vadd.f32 0.0, %v5012
        %v5014 = vpop.f32.mrb[0].mxu0
        %v5015 = vpop.f32.mrb[0].mxu0
        %v5016 = vadd.f32 0.0, %v5015
        %v5017 = vpop.f32.mrb[0].mxu0
        %5018 = vmatprep.mubr.bf16.mxu0 %v4741
        %5019 = vmatmul.mubr.bf16.gmra.mrb[0].mxu0 %v4574
        %v5020 = vpop.f32.mrb[0].mxu0
        %v5021 = vadd.f32 0.0, %v5020
        %v5022 = vpop.f32.mrb[0].mxu0
        %v5023 = vpop.f32.mrb[0].mxu0
        %v5024 = vadd.f32 0.0, %v5023
        %v5025 = vpop.f32.mrb[0].mxu0
        %5026 = vmatprep.mubr.bf16.mxu0 %v4744
        %5027 = vmatmul.mubr.bf16.gmra.mrb[0].mxu0 %v4576
        %v5028 = vpop.f32.mrb[0].mxu0
        %v5029 = vadd.f32 0.0, %v5028
        %v5030 = vpop.f32.mrb[0].mxu0
        %v5031 = vpop.f32.mrb[0].mxu0
        %v5032 = vadd.f32 0.0, %v5031
        %v5033 = vpop.f32.mrb[0].mxu0
        %5034 = vdwg.mxu0
        %v5035 = vld [vmem:[#allocation6] sm:$0xff]
        %v5036 = vld [vmem:[#allocation6 + $0x8] sm:$0xff]
        %v5037 = vld [vmem:[#allocation6 + $0x10] sm:$0xff]
        %v5038 = vld [vmem:[#allocation6 + $0x18] sm:$0xff]
        %v5039 = vld [vmem:[#allocation6 + $0x20] sm:$0xff]
        %v5040 = vld [vmem:[#allocation6 + $0x28] sm:$0xff]
        %v5041 = vld [vmem:[#allocation6 + $0x30] sm:$0xff]
        %v5042 = vld [vmem:[#allocation6 + $0x38] sm:$0xff]
        %v5043 = vld [vmem:[#allocation6 + $0x40] sm:$0xff]
        %v5044 = vld [vmem:[#allocation6 + $0x48] sm:$0xff]
        %v5045 = vld [vmem:[#allocation6 + $0x50] sm:$0xff]
        %v5046 = vld [vmem:[#allocation6 + $0x58] sm:$0xff]
        %v5047 = vld [vmem:[#allocation6 + $0x60] sm:$0xff]
        %v5048 = vld [vmem:[#allocation6 + $0x68] sm:$0xff]
        %v5049 = vld [vmem:[#allocation6 + $0x70] sm:$0xff]
        %v5050 = vld [vmem:[#allocation6 + $0x78] sm:$0xff]
        %v5051 = vld [vmem:[#allocation6 + $0x80] sm:$0xff]
        %v5052 = vld [vmem:[#allocation6 + $0x88] sm:$0xff]
        %v5053 = vld [vmem:[#allocation6 + $0x90] sm:$0xff]
        %v5054 = vld [vmem:[#allocation6 + $0x98] sm:$0xff]
        %v5055 = vld [vmem:[#allocation6 + $0xa0] sm:$0xff]
        %v5056 = vld [vmem:[#allocation6 + $0xa8] sm:$0xff]
        %v5057 = vld [vmem:[#allocation6 + $0xb0] sm:$0xff]
        %v5058 = vld [vmem:[#allocation6 + $0xb8] sm:$0xff]
        %v5059 = vld [vmem:[#allocation6 + $0xc0] sm:$0xff]
        %v5060 = vld [vmem:[#allocation6 + $0xc8] sm:$0xff]
        %v5061 = vld [vmem:[#allocation6 + $0xd0] sm:$0xff]
        %v5062 = vld [vmem:[#allocation6 + $0xd8] sm:$0xff]
        %v5063 = vld [vmem:[#allocation6 + $0xe0] sm:$0xff]
        %v5064 = vld [vmem:[#allocation6 + $0xe8] sm:$0xff]
        %v5065 = vld [vmem:[#allocation6 + $0xf0] sm:$0xff]
        %v5066 = vld [vmem:[#allocation6 + $0xf8] sm:$0xff]
        %v5067 = vld [vmem:[#allocation6 + $0x100] sm:$0xff]
        %v5068 = vld [vmem:[#allocation6 + $0x108] sm:$0xff]
        %v5069 = vld [vmem:[#allocation6 + $0x110] sm:$0xff]
        %v5070 = vld [vmem:[#allocation6 + $0x118] sm:$0xff]
        %v5071 = vld [vmem:[#allocation6 + $0x120] sm:$0xff]
        %v5072 = vld [vmem:[#allocation6 + $0x128] sm:$0xff]
        %v5073 = vld [vmem:[#allocation6 + $0x130] sm:$0xff]
        %v5074 = vld [vmem:[#allocation6 + $0x138] sm:$0xff]
        %v5075 = vld [vmem:[#allocation6 + $0x140] sm:$0xff]
        %v5076 = vld [vmem:[#allocation6 + $0x148] sm:$0xff]
        %v5077 = vld [vmem:[#allocation6 + $0x150] sm:$0xff]
        %v5078 = vld [vmem:[#allocation6 + $0x158] sm:$0xff]
        %v5079 = vld [vmem:[#allocation6 + $0x160] sm:$0xff]
        %v5080 = vld [vmem:[#allocation6 + $0x168] sm:$0xff]
        %v5081 = vld [vmem:[#allocation6 + $0x170] sm:$0xff]
        %v5082 = vld [vmem:[#allocation6 + $0x178] sm:$0xff]
        %v5083 = vld [vmem:[#allocation6 + $0x180] sm:$0xff]
        %v5084 = vld [vmem:[#allocation6 + $0x188] sm:$0xff]
        %v5085 = vld [vmem:[#allocation6 + $0x190] sm:$0xff]
        %v5086 = vld [vmem:[#allocation6 + $0x198] sm:$0xff]
        %v5087 = vld [vmem:[#allocation6 + $0x1a0] sm:$0xff]
        %v5088 = vld [vmem:[#allocation6 + $0x1a8] sm:$0xff]
        %v5089 = vld [vmem:[#allocation6 + $0x1b0] sm:$0xff]
        %v5090 = vld [vmem:[#allocation6 + $0x1b8] sm:$0xff]
        %v5091 = vld [vmem:[#allocation6 + $0x1c0] sm:$0xff]
        %v5092 = vld [vmem:[#allocation6 + $0x1c8] sm:$0xff]
        %v5093 = vld [vmem:[#allocation6 + $0x1d0] sm:$0xff]
        %v5094 = vld [vmem:[#allocation6 + $0x1d8] sm:$0xff]
        %v5095 = vld [vmem:[#allocation6 + $0x1e0] sm:$0xff]
        %v5096 = vld [vmem:[#allocation6 + $0x1e8] sm:$0xff]
        %v5097 = vld [vmem:[#allocation6 + $0x1f0] sm:$0xff]
        %v5098 = vld [vmem:[#allocation6 + $0x1f8] sm:$0xff]
        %v5099 = vadd.f32 %v5035, %v4781
        %v5100 = vadd.f32 %v5036, %v4784
        %v5101 = vadd.f32 %v5037, %v4789
        %v5102 = vadd.f32 %v5038, %v4792
        %v5103 = vadd.f32 %v5039, %v4797
        %v5104 = vadd.f32 %v5040, %v4800
        %v5105 = vadd.f32 %v5041, %v4805
        %v5106 = vadd.f32 %v5042, %v4808
        %v5107 = vadd.f32 %v5043, %v4813
        %v5108 = vadd.f32 %v5044, %v4816
        %v5109 = vadd.f32 %v5045, %v4821
        %v5110 = vadd.f32 %v5046, %v4824
        %v5111 = vadd.f32 %v5047, %v4829
        %v5112 = vadd.f32 %v5048, %v4832
        %v5113 = vadd.f32 %v5049, %v4837
        %v5114 = vadd.f32 %v5050, %v4840
        %v5115 = vadd.f32 %v5051, %v4845
        %v5116 = vadd.f32 %v5052, %v4848
        %v5117 = vadd.f32 %v5053, %v4853
        %v5118 = vadd.f32 %v5054, %v4856
        %v5119 = vadd.f32 %v5055, %v4861
        %v5120 = vadd.f32 %v5056, %v4864
        %v5121 = vadd.f32 %v5057, %v4869
        %v5122 = vadd.f32 %v5058, %v4872
        %v5123 = vadd.f32 %v5059, %v4877
        %v5124 = vadd.f32 %v5060, %v4880
        %v5125 = vadd.f32 %v5061, %v4885
        %v5126 = vadd.f32 %v5062, %v4888
        %v5127 = vadd.f32 %v5063, %v4893
        %v5128 = vadd.f32 %v5064, %v4896
        %v5129 = vadd.f32 %v5065, %v4901
        %v5130 = vadd.f32 %v5066, %v4904
        %v5131 = vadd.f32 %v5067, %v4909
        %v5132 = vadd.f32 %v5068, %v4912
        %v5133 = vadd.f32 %v5069, %v4917
        %v5134 = vadd.f32 %v5070, %v4920
        %v5135 = vadd.f32 %v5071, %v4925
        %v5136 = vadd.f32 %v5072, %v4928
        %v5137 = vadd.f32 %v5073, %v4933
        %v5138 = vadd.f32 %v5074, %v4936
        %v5139 = vadd.f32 %v5075, %v4941
        %v5140 = vadd.f32 %v5076, %v4944
        %v5141 = vadd.f32 %v5077, %v4949
        %v5142 = vadd.f32 %v5078, %v4952
        %v5143 = vadd.f32 %v5079, %v4957
        %v5144 = vadd.f32 %v5080, %v4960
        %v5145 = vadd.f32 %v5081, %v4965
        %v5146 = vadd.f32 %v5082, %v4968
        %v5147 = vadd.f32 %v5083, %v4973
        %v5148 = vadd.f32 %v5084, %v4976
        %v5149 = vadd.f32 %v5085, %v4981
        %v5150 = vadd.f32 %v5086, %v4984
        %v5151 = vadd.f32 %v5087, %v4989
        %v5152 = vadd.f32 %v5088, %v4992
        %v5153 = vadd.f32 %v5089, %v4997
        %v5154 = vadd.f32 %v5090, %v5000
        %v5155 = vadd.f32 %v5091, %v5005
        %v5156 = vadd.f32 %v5092, %v5008
        %v5157 = vadd.f32 %v5093, %v5013
        %v5158 = vadd.f32 %v5094, %v5016
        %v5159 = vadd.f32 %v5095, %v5021
        %v5160 = vadd.f32 %v5096, %v5024
        %v5161 = vadd.f32 %v5097, %v5029
        %v5162 = vadd.f32 %v5098, %v5032
        %5163 = vst.msk [vmem:[#allocation6] sm:$0xff] %vm1161, %v5099
        %5164 = vst.msk [vmem:[#allocation6 + $0x8] sm:$0xff] %vm1161, %v5100
        %5165 = vst.msk [vmem:[#allocation6 + $0x10] sm:$0xff] %vm1161, %v5101
        %5166 = vst.msk [vmem:[#allocation6 + $0x18] sm:$0xff] %vm1161, %v5102
        %5167 = vst.msk [vmem:[#allocation6 + $0x20] sm:$0xff] %vm1161, %v5103
        %5168 = vst.msk [vmem:[#allocation6 + $0x28] sm:$0xff] %vm1161, %v5104
        %5169 = vst.msk [vmem:[#allocation6 + $0x30] sm:$0xff] %vm1161, %v5105
        %5170 = vst.msk [vmem:[#allocation6 + $0x38] sm:$0xff] %vm1161, %v5106
        %5171 = vst.msk [vmem:[#allocation6 + $0x40] sm:$0xff] %vm1161, %v5107
        %5172 = vst.msk [vmem:[#allocation6 + $0x48] sm:$0xff] %vm1161, %v5108
        %5173 = vst.msk [vmem:[#allocation6 + $0x50] sm:$0xff] %vm1161, %v5109
        %5174 = vst.msk [vmem:[#allocation6 + $0x58] sm:$0xff] %vm1161, %v5110
        %5175 = vst.msk [vmem:[#allocation6 + $0x60] sm:$0xff] %vm1161, %v5111
        %5176 = vst.msk [vmem:[#allocation6 + $0x68] sm:$0xff] %vm1161, %v5112
        %5177 = vst.msk [vmem:[#allocation6 + $0x70] sm:$0xff] %vm1161, %v5113
        %5178 = vst.msk [vmem:[#allocation6 + $0x78] sm:$0xff] %vm1161, %v5114
        %5179 = vst.msk [vmem:[#allocation6 + $0x80] sm:$0xff] %vm1161, %v5115
        %5180 = vst.msk [vmem:[#allocation6 + $0x88] sm:$0xff] %vm1161, %v5116
        %5181 = vst.msk [vmem:[#allocation6 + $0x90] sm:$0xff] %vm1161, %v5117
        %5182 = vst.msk [vmem:[#allocation6 + $0x98] sm:$0xff] %vm1161, %v5118
        %5183 = vst.msk [vmem:[#allocation6 + $0xa0] sm:$0xff] %vm1161, %v5119
        %5184 = vst.msk [vmem:[#allocation6 + $0xa8] sm:$0xff] %vm1161, %v5120
        %5185 = vst.msk [vmem:[#allocation6 + $0xb0] sm:$0xff] %vm1161, %v5121
        %5186 = vst.msk [vmem:[#allocation6 + $0xb8] sm:$0xff] %vm1161, %v5122
        %5187 = vst.msk [vmem:[#allocation6 + $0xc0] sm:$0xff] %vm1161, %v5123
        %5188 = vst.msk [vmem:[#allocation6 + $0xc8] sm:$0xff] %vm1161, %v5124
        %5189 = vst.msk [vmem:[#allocation6 + $0xd0] sm:$0xff] %vm1161, %v5125
        %5190 = vst.msk [vmem:[#allocation6 + $0xd8] sm:$0xff] %vm1161, %v5126
        %5191 = vst.msk [vmem:[#allocation6 + $0xe0] sm:$0xff] %vm1161, %v5127
        %5192 = vst.msk [vmem:[#allocation6 + $0xe8] sm:$0xff] %vm1161, %v5128
        %5193 = vst.msk [vmem:[#allocation6 + $0xf0] sm:$0xff] %vm1161, %v5129
        %5194 = vst.msk [vmem:[#allocation6 + $0xf8] sm:$0xff] %vm1161, %v5130
        %5195 = vst.msk [vmem:[#allocation6 + $0x100] sm:$0xff] %vm1161, %v5131
        %5196 = vst.msk [vmem:[#allocation6 + $0x108] sm:$0xff] %vm1161, %v5132
        %5197 = vst.msk [vmem:[#allocation6 + $0x110] sm:$0xff] %vm1161, %v5133
        %5198 = vst.msk [vmem:[#allocation6 + $0x118] sm:$0xff] %vm1161, %v5134
        %5199 = vst.msk [vmem:[#allocation6 + $0x120] sm:$0xff] %vm1161, %v5135
        %5200 = vst.msk [vmem:[#allocation6 + $0x128] sm:$0xff] %vm1161, %v5136
        %5201 = vst.msk [vmem:[#allocation6 + $0x130] sm:$0xff] %vm1161, %v5137
        %5202 = vst.msk [vmem:[#allocation6 + $0x138] sm:$0xff] %vm1161, %v5138
        %5203 = vst.msk [vmem:[#allocation6 + $0x140] sm:$0xff] %vm1161, %v5139
        %5204 = vst.msk [vmem:[#allocation6 + $0x148] sm:$0xff] %vm1161, %v5140
        %5205 = vst.msk [vmem:[#allocation6 + $0x150] sm:$0xff] %vm1161, %v5141
        %5206 = vst.msk [vmem:[#allocation6 + $0x158] sm:$0xff] %vm1161, %v5142
        %5207 = vst.msk [vmem:[#allocation6 + $0x160] sm:$0xff] %vm1161, %v5143
        %5208 = vst.msk [vmem:[#allocation6 + $0x168] sm:$0xff] %vm1161, %v5144
        %5209 = vst.msk [vmem:[#allocation6 + $0x170] sm:$0xff] %vm1161, %v5145
        %5210 = vst.msk [vmem:[#allocation6 + $0x178] sm:$0xff] %vm1161, %v5146
        %5211 = vst.msk [vmem:[#allocation6 + $0x180] sm:$0xff] %vm1161, %v5147
        %5212 = vst.msk [vmem:[#allocation6 + $0x188] sm:$0xff] %vm1161, %v5148
        %5213 = vst.msk [vmem:[#allocation6 + $0x190] sm:$0xff] %vm1161, %v5149
        %5214 = vst.msk [vmem:[#allocation6 + $0x198] sm:$0xff] %vm1161, %v5150
        %5215 = vst.msk [vmem:[#allocation6 + $0x1a0] sm:$0xff] %vm1161, %v5151
        %5216 = vst.msk [vmem:[#allocation6 + $0x1a8] sm:$0xff] %vm1161, %v5152
        %5217 = vst.msk [vmem:[#allocation6 + $0x1b0] sm:$0xff] %vm1161, %v5153
        %5218 = vst.msk [vmem:[#allocation6 + $0x1b8] sm:$0xff] %vm1161, %v5154
        %5219 = vst.msk [vmem:[#allocation6 + $0x1c0] sm:$0xff] %vm1161, %v5155
        %5220 = vst.msk [vmem:[#allocation6 + $0x1c8] sm:$0xff] %vm1161, %v5156
        %5221 = vst.msk [vmem:[#allocation6 + $0x1d0] sm:$0xff] %vm1161, %v5157
        %5222 = vst.msk [vmem:[#allocation6 + $0x1d8] sm:$0xff] %vm1161, %v5158
        %5223 = vst.msk [vmem:[#allocation6 + $0x1e0] sm:$0xff] %vm1161, %v5159
        %5224 = vst.msk [vmem:[#allocation6 + $0x1e8] sm:$0xff] %vm1161, %v5160
        %5225 = vst.msk [vmem:[#allocation6 + $0x1f0] sm:$0xff] %vm1161, %v5161
        %5226 = vst.msk [vmem:[#allocation6 + $0x1f8] sm:$0xff] %vm1161, %v5162
        // Predicated region
        $region57: #{dense_block_add_pallas.1} parent=47 // pred_check
          %p5227 = pneg %p210
        $region58: #{dense_block_add_pallas.1} parent=47 // pred_check_branch
          %5229 = sbr.rel (%p5227) target = $region60
        $region59: #{dense_block_add_pallas.1} parent=47 // pred_region
          %s5231 = ssub.s32 8192, 8192
          %5232 = vsyncadd [#allocation5], %s5231
          %s5233 = sshll.u32 [#allocation6], 4
          %s5234 = int_to_ptr.vmem [resolvable:$true] %s5233
          %5239 = dma.vmem_to_hbm [thread:$0]  %s5234, 8192, %s7, [#allocation5], 128, 128, 8
        $region60: #{dense_block_add_pallas.1} parent=47 // pred_fallthru
          _
        // Predicated region
        $region61: #{dense_block_add_pallas.1} parent=47 // pred_check
          %p5240 = pneg %p210
        $region62: #{dense_block_add_pallas.1} parent=47 // pred_check_branch
          %5242 = sbr.rel (%p5240) target = $region64
        $region63: #{dense_block_add_pallas.1} parent=47 // pred_region
          %5243 = dma.done [#allocation5], 8192
        $region64: #{dense_block_add_pallas.1} parent=47 // pred_fallthru
          _
      $region48: #{dense_block_add_pallas.1} parent=5 // pred_fallthru
        _
      %p5244 = scmp.le.s32.totalorder 2, %s15
      // Predicated region
      $region65: #{dense_block_add_pallas.1} parent=5 // pred_check
        %p5245 = pneg %p5244
      $region66: #{dense_block_add_pallas.1} parent=5 // pred_check_branch
        %5247 = sbr.rel (%p5245) target = $region68
      $region67: #{dense_block_add_pallas.1} parent=5 // pred_region
        %s5248 = ssub.s32 %s15, 2
      $region68: #{dense_block_add_pallas.1} parent=5 // pred_fallthru
        _
    $region6: #{dense_block_add_pallas.1} parent=1 // loop_footer
      %s19 = sadd.s32 1, %s15
    $region7: #{dense_block_add_pallas.1} parent=1 // loop_footer_branch
      %14 = sbr.rel target = $region3
    $region8: #{dense_block_add_pallas.1} parent=1 // loop_exit
      _
    %5249 = vsyncpa [#allocation4], 1
    %s5250 = scalar_lea.sflag [#allocation4], 1
    %5251 = vsyncpa %s5250, 1
    %5252 = vsyncpa [#allocation5], 1
    %s5253 = scalar_lea.sflag [#allocation5], 1
    %5254 = vsyncpa %s5253, 1

</llo_original>
